<compile_context>
chip_gen: v6e
topology: v6e:2x2x1
jax: 0.10.0
libtpu: 0.0.40
codegen_flags: <defaults>
</compile_context>

<pallas_src>
import functools

import numpy as np
import jax
import jax.numpy as jnp
from jax.experimental import pallas as pl
from jax.experimental.pallas import tpu as pltpu


def _triple(v):
    if isinstance(v, (tuple, list)):
        assert len(v) == 3
        return tuple(int(x) for x in v)
    return (int(v),) * 3


def _round_up(x, m):
    return (x + m - 1) // m * m


def _conv3d_bn_relu_kernel(x_ref, w_ref, mask_ref, bias_ref, o_ref, xpad_ref,
                           *, kd, kh, kw, dil, vpad, hg, wg, sg, m_left):
    """One batch element per grid step.

    x_ref:    (1, C_in, S)            flattened (D*H*W) input volume (bf16)
    w_ref:    (C_out, kd*kh*kw*C_in)  BN-scale-folded weights (bf16)
    mask_ref: (kh*kw, S)              {0,1} H/W edge-validity masks (bf16)
    bias_ref: (C_out, 1)              fused conv bias + BN shift (f32)
    o_ref:    (1, C_out, S)           output volume (f32)
    xpad_ref: (C_in, m_left + S + m_right) pre-zeroed VMEM halo buffer
              (zero margins realize the depth-direction zero padding).
    """
    cin = x_ref.shape[1]
    lpad = xpad_ref.shape[1]
    dld, dlh, dlw = dil
    vpd, vph, vpw = vpad
    hw = hg * wg

    # Zero the halo margins, place this batch's volume in the middle.
    if m_left > 0:
        xpad_ref[:, :m_left] = jnp.zeros((cin, m_left), xpad_ref.dtype)
    m_right = lpad - m_left - sg
    if m_right > 0:
        xpad_ref[:, m_left + sg:] = jnp.zeros((cin, m_right), xpad_ref.dtype)
    xpad_ref[:, m_left:m_left + sg] = x_ref[0]

    # im2col: every tap is a lane-shifted window of the flattened volume.
    # Depth over/under-runs land in the zeroed margins; H/W over-runs (which
    # would wrap into neighbouring rows/planes) are zeroed by the masks.
    pieces = []
    for a in range(kd):
        for b in range(kh):
            for c in range(kw):
                off = (m_left + (a * dld - vpd) * hw
                       + (b * dlh - vph) * wg + (c * dlw - vpw))
                window = xpad_ref[:, pl.ds(off, sg)]          # (C_in, S)
                if (b * dlh != vph) or (c * dlw != vpw):
                    window = window * mask_ref[b * kw + c:b * kw + c + 1, :]
                pieces.append(window)
    patch = jnp.concatenate(pieces, axis=0)                    # (K, S)

    # Single MXU matmul: bf16 x bf16 operands, f32 accumulation.
    acc = jnp.dot(w_ref[...], patch, preferred_element_type=jnp.float32)
    y = jnp.maximum(acc + bias_ref[...], 0.0)                  # +bias, ReLU (f32)
    o_ref[0] = y.astype(o_ref.dtype)


def basic_conv3d(x, weight, conv_bias, gamma, beta, running_mean, running_var,
                 *, stride=1, padding=0, dilation=1, eps=1e-5,
                 compute_dtype=jnp.bfloat16):
    """Forward of BasicConv3d: Conv3d(bias=True) + BatchNorm3d (inference) + ReLU.

    x:       (N, C_in, D, H, W)   NCDHW, like PyTorch
    weight:  (C_out, C_in, kd, kh, kw)
    returns: (N, C_out, D_out, H_out, W_out) float32
    """
    st = _triple(stride)
    pd = _triple(padding)
    dl = _triple(dilation)

    n, c_in, d_in, h_in, w_in = x.shape
    c_out, c_in_w, kd, kh, kw = weight.shape
    assert c_in == c_in_w

    # "same" convolutions (stride 1, shape-preserving symmetric padding) run
    # with zero wrapper-side padding / cropping.
    same = all(s == 1 for s in st) and all(
        2 * p == dd * (k - 1) for p, dd, k in zip(pd, dl, (kd, kh, kw)))

    if same:
        xg = x
        vpad = pd
    else:
        # General path: apply the requested zero padding physically, run a
        # stride-1 "valid" conv on the padded volume, crop + decimate after.
        xg = jnp.pad(x, ((0, 0), (0, 0),
                         (pd[0], pd[0]), (pd[1], pd[1]), (pd[2], pd[2])))
        vpad = (0, 0, 0)

    dg, hg, wg = int(xg.shape[2]), int(xg.shape[3]), int(xg.shape[4])
    hw = hg * wg
    sg = dg * hw

    # Flatten spatial dims (free reshape, no transpose); bf16 for the MXU.
    x_flat = xg.reshape(n, c_in, sg).astype(compute_dtype)

    # Fold BN scale into the weights; conv bias + BN shift into one f32 bias.
    scale = gamma / jnp.sqrt(running_var + eps)
    w_eff = weight * scale[:, None, None, None, None]
    k_total = kd * kh * kw * c_in
    w2 = jnp.transpose(w_eff, (0, 2, 3, 4, 1)).reshape(c_out, k_total)
    w2 = w2.astype(compute_dtype)
    bias = (beta + scale * (conv_bias - running_mean)).astype(jnp.float32)
    bias = bias.reshape(c_out, 1)

    # H/W edge-validity masks, one per (kh, kw) tap (depth padding is handled
    # by the zeroed halo margins inside the kernel).
    idx = np.arange(sg)
    h_pos = (idx // wg) % hg
    w_pos = idx % wg
    masks = []
    for b in range(kh):
        for c in range(kw):
            hh = h_pos + b * dl[1] - vpad[1]
            ww = w_pos + c * dl[2] - vpad[2]
            masks.append((hh >= 0) & (hh < hg) & (ww >= 0) & (ww < wg))
    mask_arr = jnp.asarray(np.stack(masks).astype(np.float32)).astype(compute_dtype)

    # Halo margins along the flattened axis (whole-plane margins absorb the
    # depth padding); rounded up to the 128-lane grain.
    margin_l = vpad[0] * hw + vpad[1] * wg + vpad[2]
    margin_r = ((dl[0] * (kd - 1) - vpad[0]) * hw
                + (dl[1] * (kh - 1) - vpad[1]) * wg
                + (dl[2] * (kw - 1) - vpad[2]))
    m_left = _round_up(margin_l, 128)
    lpad = _round_up(m_left + sg + margin_r, 128)

    kernel = functools.partial(
        _conv3d_bn_relu_kernel,
        kd=kd, kh=kh, kw=kw, dil=dl, vpad=vpad,
        hg=hg, wg=wg, sg=sg, m_left=m_left)

    bytes_accessed = (x_flat.size * 2 + w2.size * 2 + mask_arr.size * 2
                      + bias.size * 4 + n * c_out * sg * 4)
    cost = pl.CostEstimate(flops=2 * n * c_out * k_total * sg,
                           transcendentals=0,
                           bytes_accessed=bytes_accessed)

    out_flat = pl.pallas_call(
        kernel,
        out_shape=jax.ShapeDtypeStruct((n, c_out, sg), jnp.float32),
        grid=(n,),
        in_specs=[
            pl.BlockSpec((1, c_in, sg), lambda b: (b, 0, 0)),
            pl.BlockSpec((c_out, k_total), lambda b: (0, 0)),
            pl.BlockSpec((kh * kw, sg), lambda b: (0, 0)),
            pl.BlockSpec((c_out, 1), lambda b: (0, 0)),
        ],
        out_specs=pl.BlockSpec((1, c_out, sg), lambda b: (b, 0, 0)),
        scratch_shapes=[pltpu.VMEM((c_in, lpad), compute_dtype)],
        compiler_params=pltpu.CompilerParams(
            dimension_semantics=("parallel",)),
        cost_estimate=cost,
    )(x_flat, w2, mask_arr, bias)

    out = out_flat.reshape(n, c_out, dg, hg, wg)     # free reshape, NCDHW
    if not same:
        d1 = dg - dl[0] * (kd - 1)
        h1 = hg - dl[1] * (kh - 1)
        w1 = wg - dl[2] * (kw - 1)
        out = out[:, :, 0:d1:st[0], 0:h1:st[1], 0:w1:st[2]]
    return out


def _reference(x, weight, conv_bias, gamma, beta, running_mean, running_var,
               *, stride, padding, dilation, eps=1e-5,
               compute_dtype=jnp.bfloat16):
    """Same math as the kernel (bf16 operands, f32 accumulate), via lax.conv."""
    st = _triple(stride)
    pd = _triple(padding)
    dl = _triple(dilation)
    scale = gamma / jnp.sqrt(running_var + eps)
    w_eff = (weight * scale[:, None, None, None, None]).astype(
        compute_dtype).astype(jnp.float32)
    bias_eff = beta + scale * (conv_bias - running_mean)
    xc = x.astype(compute_dtype).astype(jnp.float32)
    y = jax.lax.conv_general_dilated(
        xc, w_eff, window_strides=st,
        padding=[(pd[0], pd[0]), (pd[1], pd[1]), (pd[2], pd[2])],
        rhs_dilation=dl,
        dimension_numbers=("NCDHW", "OIDHW", "NCDHW"),
        precision=jax.lax.Precision.HIGHEST)
    y = y + bias_eff[None, :, None, None, None]
    return jnp.maximum(y, 0.0)


if __name__ == "__main__":
    # Module config: BasicConv3d(in_ch=4, out_ch=8, kernel_size=3,
    #                            stride=1, padding=1, dilation=1)
    N, C_IN, D, H, W = 2, 4, 8, 16, 16
    C_OUT, K = 8, 3
    STRIDE, PADDING, DILATION = 1, 1, 1

    key = jax.random.PRNGKey(0)
    kx, kw_, kb, kg, kbt, km, kv = jax.random.split(key, 7)

    x = jax.random.normal(kx, (N, C_IN, D, H, W), dtype=jnp.float32)
    weight = 0.1 * jax.random.normal(kw_, (C_OUT, C_IN, K, K, K),
                                     dtype=jnp.float32)
    conv_bias = 0.1 * jax.random.normal(kb, (C_OUT,), dtype=jnp.float32)
    gamma = 1.0 + 0.1 * jax.random.normal(kg, (C_OUT,), dtype=jnp.float32)
    beta = 0.1 * jax.random.normal(kbt, (C_OUT,), dtype=jnp.float32)
    running_mean = 0.1 * jax.random.normal(km, (C_OUT,), dtype=jnp.float32)
    running_var = jax.random.uniform(kv, (C_OUT,), dtype=jnp.float32,
                                     minval=0.5, maxval=1.5)

    fwd = jax.jit(functools.partial(basic_conv3d, stride=STRIDE,
                                    padding=PADDING, dilation=DILATION))
    out = fwd(x, weight, conv_bias, gamma, beta, running_mean, running_var)
    out = jax.block_until_ready(out)

    ref = _reference(x, weight, conv_bias, gamma, beta, running_mean,
                     running_var, stride=STRIDE, padding=PADDING,
                     dilation=DILATION)

    assert out.shape == (N, C_OUT, D, H, W), out.shape
    max_err = float(jnp.max(jnp.abs(out - ref)))
    assert jnp.allclose(out, ref, rtol=2e-3, atol=2e-3), f"mismatch: {max_err}"

    print("KERNEL_OK")
</pallas_src>

<mosaic_0001>
module attributes {stable_mosaic.version = 11 : i64} {
  func.func @_conv3d_bn_relu_kernel(%arg0: i32, %arg1: memref<1x4x2048xbf16, #tpu.memory_space<vmem>>, %arg2: memref<8x108xbf16, #tpu.memory_space<vmem>>, %arg3: memref<9x2048xbf16, #tpu.memory_space<vmem>>, %arg4: memref<8x1xf32, #tpu.memory_space<vmem>>, %arg5: memref<1x8x2048xf32, #tpu.memory_space<vmem>>, %arg6: memref<4x2816xbf16, #tpu.memory_space<vmem>>) attributes {dimension_semantics = [#tpu.dimension_semantics<parallel>], iteration_bounds = array<i64: 2>, scalar_prefetch = 0 : i64, scratch_operands = 1 : i64, tpu.core_type = #tpu.core_type<tc>, window_params = [{transform_indices = @transform_0, window_bounds = array<i64: 1, 4, 2048>}, {pipeline_mode = #tpu.pipeline_mode<synchronous>, transform_indices = @transform_1, window_bounds = array<i64: 8, 108>}, {pipeline_mode = #tpu.pipeline_mode<synchronous>, transform_indices = @transform_2, window_bounds = array<i64: 9, 2048>}, {pipeline_mode = #tpu.pipeline_mode<synchronous>, transform_indices = @transform_3, window_bounds = array<i64: 8, 1>}, {transform_indices = @transform_4, window_bounds = array<i64: 1, 8, 2048>}]} {
    %cst = arith.constant 0.000000e+00 : bf16
    %0 = vector.broadcast %cst : bf16 to vector<4x384xbf16>
    %c0 = arith.constant 0 : index
    %c0_0 = arith.constant 0 : index
    %1 = vector.load %arg6[%c0, %c0_0] : memref<4x2816xbf16, #tpu.memory_space<vmem>>, vector<4x384xbf16>
    tpu.vector_store %arg6[%c0, %c0_0], %0 {strides = array<i32>} : memref<4x2816xbf16, #tpu.memory_space<vmem>>, vector<4x384xbf16>,
    %cst_1 = arith.constant 0.000000e+00 : bf16
    %2 = vector.broadcast %cst_1 : bf16 to vector<4x384xbf16>
    %c0_2 = arith.constant 0 : index
    %c2432 = arith.constant 2432 : index
    %3 = vector.load %arg6[%c0_2, %c2432] : memref<4x2816xbf16, #tpu.memory_space<vmem>>, vector<4x384xbf16>
    tpu.vector_store %arg6[%c0_2, %c2432], %2 {strides = array<i32>} : memref<4x2816xbf16, #tpu.memory_space<vmem>>, vector<4x384xbf16>,
    %c0_3 = arith.constant 0 : index
    %c0_4 = arith.constant 0 : index
    %c0_5 = arith.constant 0 : index
    %4 = vector.load %arg1[%c0_3, %c0_4, %c0_5] : memref<1x4x2048xbf16, #tpu.memory_space<vmem>>, vector<1x4x2048xbf16>
    %5 = vector.shape_cast %4 : vector<1x4x2048xbf16> to vector<4x2048xbf16>
    %c0_6 = arith.constant 0 : index
    %c384 = arith.constant 384 : index
    %6 = vector.load %arg6[%c0_6, %c384] : memref<4x2816xbf16, #tpu.memory_space<vmem>>, vector<4x2048xbf16>
    tpu.vector_store %arg6[%c0_6, %c384], %5 {strides = array<i32>} : memref<4x2816xbf16, #tpu.memory_space<vmem>>, vector<4x2048xbf16>,
    %c0_7 = arith.constant 0 : index
    %c111 = arith.constant 111 : index
    %7 = vector.load %arg6[%c0_7, %c111] : memref<4x2816xbf16, #tpu.memory_space<vmem>>, vector<4x2048xbf16>
    %c0_8 = arith.constant 0 : index
    %c0_9 = arith.constant 0 : index
    %8 = vector.load %arg3[%c0_8, %c0_9] : memref<9x2048xbf16, #tpu.memory_space<vmem>>, vector<1x2048xbf16>
    %9 = vector.broadcast %8 : vector<1x2048xbf16> to vector<4x2048xbf16>
    %10 = arith.mulf %7, %9 : vector<4x2048xbf16>
    %c0_10 = arith.constant 0 : index
    %c112 = arith.constant 112 : index
    %11 = vector.load %arg6[%c0_10, %c112] : memref<4x2816xbf16, #tpu.memory_space<vmem>>, vector<4x2048xbf16>
    %c1 = arith.constant 1 : index
    %c0_11 = arith.constant 0 : index
    %12 = vector.load %arg3[%c1, %c0_11] : memref<9x2048xbf16, #tpu.memory_space<vmem>>, vector<1x2048xbf16>
    %13 = vector.broadcast %12 : vector<1x2048xbf16> to vector<4x2048xbf16>
    %14 = arith.mulf %11, %13 : vector<4x2048xbf16>
    %c0_12 = arith.constant 0 : index
    %c113 = arith.constant 113 : index
    %15 = vector.load %arg6[%c0_12, %c113] : memref<4x2816xbf16, #tpu.memory_space<vmem>>, vector<4x2048xbf16>
    %c2 = arith.constant 2 : index
    %c0_13 = arith.constant 0 : index
    %16 = vector.load %arg3[%c2, %c0_13] : memref<9x2048xbf16, #tpu.memory_space<vmem>>, vector<1x2048xbf16>
    %17 = vector.broadcast %16 : vector<1x2048xbf16> to vector<4x2048xbf16>
    %18 = arith.mulf %15, %17 : vector<4x2048xbf16>
    %c0_14 = arith.constant 0 : index
    %c127 = arith.constant 127 : index
    %19 = vector.load %arg6[%c0_14, %c127] : memref<4x2816xbf16, #tpu.memory_space<vmem>>, vector<4x2048xbf16>
    %c3 = arith.constant 3 : index
    %c0_15 = arith.constant 0 : index
    %20 = vector.load %arg3[%c3, %c0_15] : memref<9x2048xbf16, #tpu.memory_space<vmem>>, vector<1x2048xbf16>
    %21 = vector.broadcast %20 : vector<1x2048xbf16> to vector<4x2048xbf16>
    %22 = arith.mulf %19, %21 : vector<4x2048xbf16>
    %c0_16 = arith.constant 0 : index
    %c128 = arith.constant 128 : index
    %23 = vector.load %arg6[%c0_16, %c128] : memref<4x2816xbf16, #tpu.memory_space<vmem>>, vector<4x2048xbf16>
    %c0_17 = arith.constant 0 : index
    %c129 = arith.constant 129 : index
    %24 = vector.load %arg6[%c0_17, %c129] : memref<4x2816xbf16, #tpu.memory_space<vmem>>, vector<4x2048xbf16>
    %c5 = arith.constant 5 : index
    %c0_18 = arith.constant 0 : index
    %25 = vector.load %arg3[%c5, %c0_18] : memref<9x2048xbf16, #tpu.memory_space<vmem>>, vector<1x2048xbf16>
    %26 = vector.broadcast %25 : vector<1x2048xbf16> to vector<4x2048xbf16>
    %27 = arith.mulf %24, %26 : vector<4x2048xbf16>
    %c0_19 = arith.constant 0 : index
    %c143 = arith.constant 143 : index
    %28 = vector.load %arg6[%c0_19, %c143] : memref<4x2816xbf16, #tpu.memory_space<vmem>>, vector<4x2048xbf16>
    %c6 = arith.constant 6 : index
    %c0_20 = arith.constant 0 : index
    %29 = vector.load %arg3[%c6, %c0_20] : memref<9x2048xbf16, #tpu.memory_space<vmem>>, vector<1x2048xbf16>
    %30 = vector.broadcast %29 : vector<1x2048xbf16> to vector<4x2048xbf16>
    %31 = arith.mulf %28, %30 : vector<4x2048xbf16>
    %c0_21 = arith.constant 0 : index
    %c144 = arith.constant 144 : index
    %32 = vector.load %arg6[%c0_21, %c144] : memref<4x2816xbf16, #tpu.memory_space<vmem>>, vector<4x2048xbf16>
    %c7 = arith.constant 7 : index
    %c0_22 = arith.constant 0 : index
    %33 = vector.load %arg3[%c7, %c0_22] : memref<9x2048xbf16, #tpu.memory_space<vmem>>, vector<1x2048xbf16>
    %34 = vector.broadcast %33 : vector<1x2048xbf16> to vector<4x2048xbf16>
    %35 = arith.mulf %32, %34 : vector<4x2048xbf16>
    %c0_23 = arith.constant 0 : index
    %c145 = arith.constant 145 : index
    %36 = vector.load %arg6[%c0_23, %c145] : memref<4x2816xbf16, #tpu.memory_space<vmem>>, vector<4x2048xbf16>
    %c8 = arith.constant 8 : index
    %c0_24 = arith.constant 0 : index
    %37 = vector.load %arg3[%c8, %c0_24] : memref<9x2048xbf16, #tpu.memory_space<vmem>>, vector<1x2048xbf16>
    %38 = vector.broadcast %37 : vector<1x2048xbf16> to vector<4x2048xbf16>
    %39 = arith.mulf %36, %38 : vector<4x2048xbf16>
    %c0_25 = arith.constant 0 : index
    %c367 = arith.constant 367 : index
    %40 = vector.load %arg6[%c0_25, %c367] : memref<4x2816xbf16, #tpu.memory_space<vmem>>, vector<4x2048xbf16>
    %c0_26 = arith.constant 0 : index
    %c0_27 = arith.constant 0 : index
    %41 = vector.load %arg3[%c0_26, %c0_27] : memref<9x2048xbf16, #tpu.memory_space<vmem>>, vector<1x2048xbf16>
    %42 = vector.broadcast %41 : vector<1x2048xbf16> to vector<4x2048xbf16>
    %43 = arith.mulf %40, %42 : vector<4x2048xbf16>
    %c0_28 = arith.constant 0 : index
    %c368 = arith.constant 368 : index
    %44 = vector.load %arg6[%c0_28, %c368] : memref<4x2816xbf16, #tpu.memory_space<vmem>>, vector<4x2048xbf16>
    %c1_29 = arith.constant 1 : index
    %c0_30 = arith.constant 0 : index
    %45 = vector.load %arg3[%c1_29, %c0_30] : memref<9x2048xbf16, #tpu.memory_space<vmem>>, vector<1x2048xbf16>
    %46 = vector.broadcast %45 : vector<1x2048xbf16> to vector<4x2048xbf16>
    %47 = arith.mulf %44, %46 : vector<4x2048xbf16>
    %c0_31 = arith.constant 0 : index
    %c369 = arith.constant 369 : index
    %48 = vector.load %arg6[%c0_31, %c369] : memref<4x2816xbf16, #tpu.memory_space<vmem>>, vector<4x2048xbf16>
    %c2_32 = arith.constant 2 : index
    %c0_33 = arith.constant 0 : index
    %49 = vector.load %arg3[%c2_32, %c0_33] : memref<9x2048xbf16, #tpu.memory_space<vmem>>, vector<1x2048xbf16>
    %50 = vector.broadcast %49 : vector<1x2048xbf16> to vector<4x2048xbf16>
    %51 = arith.mulf %48, %50 : vector<4x2048xbf16>
    %c0_34 = arith.constant 0 : index
    %c383 = arith.constant 383 : index
    %52 = vector.load %arg6[%c0_34, %c383] : memref<4x2816xbf16, #tpu.memory_space<vmem>>, vector<4x2048xbf16>
    %c3_35 = arith.constant 3 : index
    %c0_36 = arith.constant 0 : index
    %53 = vector.load %arg3[%c3_35, %c0_36] : memref<9x2048xbf16, #tpu.memory_space<vmem>>, vector<1x2048xbf16>
    %54 = vector.broadcast %53 : vector<1x2048xbf16> to vector<4x2048xbf16>
    %55 = arith.mulf %52, %54 : vector<4x2048xbf16>
    %c0_37 = arith.constant 0 : index
    %c384_38 = arith.constant 384 : index
    %56 = vector.load %arg6[%c0_37, %c384_38] : memref<4x2816xbf16, #tpu.memory_space<vmem>>, vector<4x2048xbf16>
    %c0_39 = arith.constant 0 : index
    %c385 = arith.constant 385 : index
    %57 = vector.load %arg6[%c0_39, %c385] : memref<4x2816xbf16, #tpu.memory_space<vmem>>, vector<4x2048xbf16>
    %c5_40 = arith.constant 5 : index
    %c0_41 = arith.constant 0 : index
    %58 = vector.load %arg3[%c5_40, %c0_41] : memref<9x2048xbf16, #tpu.memory_space<vmem>>, vector<1x2048xbf16>
    %59 = vector.broadcast %58 : vector<1x2048xbf16> to vector<4x2048xbf16>
    %60 = arith.mulf %57, %59 : vector<4x2048xbf16>
    %c0_42 = arith.constant 0 : index
    %c399 = arith.constant 399 : index
    %61 = vector.load %arg6[%c0_42, %c399] : memref<4x2816xbf16, #tpu.memory_space<vmem>>, vector<4x2048xbf16>
    %c6_43 = arith.constant 6 : index
    %c0_44 = arith.constant 0 : index
    %62 = vector.load %arg3[%c6_43, %c0_44] : memref<9x2048xbf16, #tpu.memory_space<vmem>>, vector<1x2048xbf16>
    %63 = vector.broadcast %62 : vector<1x2048xbf16> to vector<4x2048xbf16>
    %64 = arith.mulf %61, %63 : vector<4x2048xbf16>
    %c0_45 = arith.constant 0 : index
    %c400 = arith.constant 400 : index
    %65 = vector.load %arg6[%c0_45, %c400] : memref<4x2816xbf16, #tpu.memory_space<vmem>>, vector<4x2048xbf16>
    %c7_46 = arith.constant 7 : index
    %c0_47 = arith.constant 0 : index
    %66 = vector.load %arg3[%c7_46, %c0_47] : memref<9x2048xbf16, #tpu.memory_space<vmem>>, vector<1x2048xbf16>
    %67 = vector.broadcast %66 : vector<1x2048xbf16> to vector<4x2048xbf16>
    %68 = arith.mulf %65, %67 : vector<4x2048xbf16>
    %c0_48 = arith.constant 0 : index
    %c401 = arith.constant 401 : index
    %69 = vector.load %arg6[%c0_48, %c401] : memref<4x2816xbf16, #tpu.memory_space<vmem>>, vector<4x2048xbf16>
    %c8_49 = arith.constant 8 : index
    %c0_50 = arith.constant 0 : index
    %70 = vector.load %arg3[%c8_49, %c0_50] : memref<9x2048xbf16, #tpu.memory_space<vmem>>, vector<1x2048xbf16>
    %71 = vector.broadcast %70 : vector<1x2048xbf16> to vector<4x2048xbf16>
    %72 = arith.mulf %69, %71 : vector<4x2048xbf16>
    %c0_51 = arith.constant 0 : index
    %c623 = arith.constant 623 : index
    %73 = vector.load %arg6[%c0_51, %c623] : memref<4x2816xbf16, #tpu.memory_space<vmem>>, vector<4x2048xbf16>
    %c0_52 = arith.constant 0 : index
    %c0_53 = arith.constant 0 : index
    %74 = vector.load %arg3[%c0_52, %c0_53] : memref<9x2048xbf16, #tpu.memory_space<vmem>>, vector<1x2048xbf16>
    %75 = vector.broadcast %74 : vector<1x2048xbf16> to vector<4x2048xbf16>
    %76 = arith.mulf %73, %75 : vector<4x2048xbf16>
    %c0_54 = arith.constant 0 : index
    %c624 = arith.constant 624 : index
    %77 = vector.load %arg6[%c0_54, %c624] : memref<4x2816xbf16, #tpu.memory_space<vmem>>, vector<4x2048xbf16>
    %c1_55 = arith.constant 1 : index
    %c0_56 = arith.constant 0 : index
    %78 = vector.load %arg3[%c1_55, %c0_56] : memref<9x2048xbf16, #tpu.memory_space<vmem>>, vector<1x2048xbf16>
    %79 = vector.broadcast %78 : vector<1x2048xbf16> to vector<4x2048xbf16>
    %80 = arith.mulf %77, %79 : vector<4x2048xbf16>
    %c0_57 = arith.constant 0 : index
    %c625 = arith.constant 625 : index
    %81 = vector.load %arg6[%c0_57, %c625] : memref<4x2816xbf16, #tpu.memory_space<vmem>>, vector<4x2048xbf16>
    %c2_58 = arith.constant 2 : index
    %c0_59 = arith.constant 0 : index
    %82 = vector.load %arg3[%c2_58, %c0_59] : memref<9x2048xbf16, #tpu.memory_space<vmem>>, vector<1x2048xbf16>
    %83 = vector.broadcast %82 : vector<1x2048xbf16> to vector<4x2048xbf16>
    %84 = arith.mulf %81, %83 : vector<4x2048xbf16>
    %c0_60 = arith.constant 0 : index
    %c639 = arith.constant 639 : index
    %85 = vector.load %arg6[%c0_60, %c639] : memref<4x2816xbf16, #tpu.memory_space<vmem>>, vector<4x2048xbf16>
    %c3_61 = arith.constant 3 : index
    %c0_62 = arith.constant 0 : index
    %86 = vector.load %arg3[%c3_61, %c0_62] : memref<9x2048xbf16, #tpu.memory_space<vmem>>, vector<1x2048xbf16>
    %87 = vector.broadcast %86 : vector<1x2048xbf16> to vector<4x2048xbf16>
    %88 = arith.mulf %85, %87 : vector<4x2048xbf16>
    %c0_63 = arith.constant 0 : index
    %c640 = arith.constant 640 : index
    %89 = vector.load %arg6[%c0_63, %c640] : memref<4x2816xbf16, #tpu.memory_space<vmem>>, vector<4x2048xbf16>
    %c0_64 = arith.constant 0 : index
    %c641 = arith.constant 641 : index
    %90 = vector.load %arg6[%c0_64, %c641] : memref<4x2816xbf16, #tpu.memory_space<vmem>>, vector<4x2048xbf16>
    %c5_65 = arith.constant 5 : index
    %c0_66 = arith.constant 0 : index
    %91 = vector.load %arg3[%c5_65, %c0_66] : memref<9x2048xbf16, #tpu.memory_space<vmem>>, vector<1x2048xbf16>
    %92 = vector.broadcast %91 : vector<1x2048xbf16> to vector<4x2048xbf16>
    %93 = arith.mulf %90, %92 : vector<4x2048xbf16>
    %c0_67 = arith.constant 0 : index
    %c655 = arith.constant 655 : index
    %94 = vector.load %arg6[%c0_67, %c655] : memref<4x2816xbf16, #tpu.memory_space<vmem>>, vector<4x2048xbf16>
    %c6_68 = arith.constant 6 : index
    %c0_69 = arith.constant 0 : index
    %95 = vector.load %arg3[%c6_68, %c0_69] : memref<9x2048xbf16, #tpu.memory_space<vmem>>, vector<1x2048xbf16>
    %96 = vector.broadcast %95 : vector<1x2048xbf16> to vector<4x2048xbf16>
    %97 = arith.mulf %94, %96 : vector<4x2048xbf16>
    %c0_70 = arith.constant 0 : index
    %c656 = arith.constant 656 : index
    %98 = vector.load %arg6[%c0_70, %c656] : memref<4x2816xbf16, #tpu.memory_space<vmem>>, vector<4x2048xbf16>
    %c7_71 = arith.constant 7 : index
    %c0_72 = arith.constant 0 : index
    %99 = vector.load %arg3[%c7_71, %c0_72] : memref<9x2048xbf16, #tpu.memory_space<vmem>>, vector<1x2048xbf16>
    %100 = vector.broadcast %99 : vector<1x2048xbf16> to vector<4x2048xbf16>
    %101 = arith.mulf %98, %100 : vector<4x2048xbf16>
    %c0_73 = arith.constant 0 : index
    %c657 = arith.constant 657 : index
    %102 = vector.load %arg6[%c0_73, %c657] : memref<4x2816xbf16, #tpu.memory_space<vmem>>, vector<4x2048xbf16>
    %c8_74 = arith.constant 8 : index
    %c0_75 = arith.constant 0 : index
    %103 = vector.load %arg3[%c8_74, %c0_75] : memref<9x2048xbf16, #tpu.memory_space<vmem>>, vector<1x2048xbf16>
    %104 = vector.broadcast %103 : vector<1x2048xbf16> to vector<4x2048xbf16>
    %105 = arith.mulf %102, %104 : vector<4x2048xbf16>
    %106 = tpu.concatenate %10, %14, %18, %22, %23, %27, %31, %35, %39, %43, %47, %51, %55, %56, %60, %64 in 0 : vector<4x2048xbf16>, vector<4x2048xbf16>, vector<4x2048xbf16>, vector<4x2048xbf16>, vector<4x2048xbf16>, vector<4x2048xbf16>, vector<4x2048xbf16>, vector<4x2048xbf16>, vector<4x2048xbf16>, vector<4x2048xbf16>, vector<4x2048xbf16>, vector<4x2048xbf16>, vector<4x2048xbf16>, vector<4x2048xbf16>, vector<4x2048xbf16>, vector<4x2048xbf16> -> vector<64x2048xbf16>
    %107 = tpu.concatenate %68, %72, %76, %80, %84, %88, %89, %93, %97, %101, %105 in 0 : vector<4x2048xbf16>, vector<4x2048xbf16>, vector<4x2048xbf16>, vector<4x2048xbf16>, vector<4x2048xbf16>, vector<4x2048xbf16>, vector<4x2048xbf16>, vector<4x2048xbf16>, vector<4x2048xbf16>, vector<4x2048xbf16>, vector<4x2048xbf16> -> vector<44x2048xbf16>
    %108 = tpu.concatenate %106, %107 in 0 : vector<64x2048xbf16>, vector<44x2048xbf16> -> vector<108x2048xbf16>
    %c0_76 = arith.constant 0 : index
    %c0_77 = arith.constant 0 : index
    %109 = vector.load %arg2[%c0_76, %c0_77] : memref<8x108xbf16, #tpu.memory_space<vmem>>, vector<8x108xbf16>
    %cst_78 = arith.constant dense<0.000000e+00> : vector<8x2048xf32>
    %110 = tpu.matmul %109, %108, %cst_78 {dimension_numbers = #tpu.dot_dimension_numbers<[1], [0], [0], [1], [0, 0, 1, 1], [], []>} : vector<8x108xbf16>, vector<108x2048xbf16>, vector<8x2048xf32> -> vector<8x2048xf32>
    %c0_79 = arith.constant 0 : index
    %c0_80 = arith.constant 0 : index
    %111 = vector.load %arg4[%c0_79, %c0_80] : memref<8x1xf32, #tpu.memory_space<vmem>>, vector<8x1xf32>
    %112 = vector.broadcast %111 : vector<8x1xf32> to vector<8x2048xf32>
    %113 = arith.addf %110, %112 : vector<8x2048xf32>
    %cst_81 = arith.constant 0.000000e+00 : f32
    %114 = vector.broadcast %cst_81 : f32 to vector<8x2048xf32>
    %115 = arith.maximumf %113, %114 : vector<8x2048xf32>
    %c0_82 = arith.constant 0 : index
    %c0_83 = arith.constant 0 : index
    %c0_84 = arith.constant 0 : index
    %116 = vector.load %arg5[%c0_82, %c0_83, %c0_84] : memref<1x8x2048xf32, #tpu.memory_space<vmem>>, vector<1x8x2048xf32>
    %117 = vector.shape_cast %116 : vector<1x8x2048xf32> to vector<8x2048xf32>
    %118 = vector.shape_cast %115 : vector<8x2048xf32> to vector<1x8x2048xf32>
    tpu.vector_store %arg5[%c0_82, %c0_83, %c0_84], %118 {strides = array<i32>} : memref<1x8x2048xf32, #tpu.memory_space<vmem>>, vector<1x8x2048xf32>,
    return
  }
  func.func @transform_0(%arg0: i32) -> (i32, i32, i32) {
    %c0_i32 = arith.constant 0 : i32
    %c0_i32_0 = arith.constant 0 : i32
    %c0_i32_1 = arith.constant 0 : i32
    return %arg0, %c0_i32, %c0_i32_0 : i32, i32, i32
  }
  func.func @transform_1(%arg0: i32) -> (i32, i32) {
    %c0_i32 = arith.constant 0 : i32
    %c0_i32_0 = arith.constant 0 : i32
    %c0_i32_1 = arith.constant 0 : i32
    return %c0_i32, %c0_i32_0 : i32, i32
  }
  func.func @transform_2(%arg0: i32) -> (i32, i32) {
    %c0_i32 = arith.constant 0 : i32
    %c0_i32_0 = arith.constant 0 : i32
    %c0_i32_1 = arith.constant 0 : i32
    return %c0_i32, %c0_i32_0 : i32, i32
  }
  func.func @transform_3(%arg0: i32) -> (i32, i32) {
    %c0_i32 = arith.constant 0 : i32
    %c0_i32_0 = arith.constant 0 : i32
    %c0_i32_1 = arith.constant 0 : i32
    return %c0_i32, %c0_i32_0 : i32, i32
  }
  func.func @transform_4(%arg0: i32) -> (i32, i32, i32) {
    %c0_i32 = arith.constant 0 : i32
    %c0_i32_0 = arith.constant 0 : i32
    %c0_i32_1 = arith.constant 0 : i32
    return %arg0, %c0_i32, %c0_i32_0 : i32, i32, i32
  }
}

</mosaic_0001>

<llo_original>
// kernel: basic_conv3d.1
$region0: #{basic_conv3d.1}
  #allocation0 [shape = 'u32[]', space=smem, size = 0x4, offset = 0x4, fixed_abs, tag = 'smem constant byte address 0x4 - core index']
  #allocation1 [shape = 'u32[144,128]{1,0:T(1,128)}', space=vmem, size = 0x12000, scoped, tag = 'internal scratch']
  #allocation2 [shape = 'bf16[4,2816]{1,0:T(4,128)(2,1)}', space=vmem, size = 0x5800, scoped, tag = 'scratch operand']
  %s0 = inlined_call_operand.vmem [shape: bf16[2,4,2048], index: 0, kind: input, shape index: {}]
  %s1 = inlined_call_operand.vmem [shape: bf16[8,108], index: 1, kind: input, shape index: {}]
  %s2 = inlined_call_operand.vmem [shape: bf16[9,2048], index: 2, kind: input, shape index: {}]
  %s3 = inlined_call_operand.vmem [shape: f32[8,1], index: 3, kind: input, shape index: {}]
  %s4 = inlined_call_operand.vmem [shape: f32[2,8,2048], index: 4, kind: output, shape index: {}]
  %s5 = sld [smem:[#allocation0]]
  $region49: #{basic_conv3d.1} parent=0
    _
  %s7 = ssub.s32 1, %s5
  %s8 = scalar_select 0, %s7, %s5
  loop: start=0, step=1, limit=4
  $region2: #{basic_conv3d.1} parent=0 // loop_pre_header
    _
  $region3: #{basic_conv3d.1} parent=0 // loop_header
    %s10 = sphi 0, %s14
    %p11 = scmp.ge.s32.totalorder %s10, 4
    %s20 = sphi 0, %s22
    %s23 = sphi 0, %s20
    %s24 = sphi 0, %s23
    %s40 = sphi 0, %s24
    %s44 = sphi 0, %s44
    %s46 = sphi 0, %s44
    %s47 = sphi 0, %s46
    %s61 = sphi 0, %s47
    %s65 = sphi 0, %s65
    %s67 = sphi 0, %s65
    %s68 = sphi 0, %s67
    %s82 = sphi 0, %s68
    %s86 = sphi 0, %s86
    %s88 = sphi 0, %s86
    %s89 = sphi 0, %s88
    %s103 = sphi 0, %s89
    %s109 = sphi 0, %s111
    %s112 = sphi 0, %s109
    %s113 = sphi 0, %s112
    %s129 = sphi 0, %s113
  $region4: #{basic_conv3d.1} parent=0 // loop_header_branch
    %13 = sbr.rel (%p11) target = $region8
  $region5: #{basic_conv3d.1} parent=0 // loop_body
    %s15 = ssub.s32 %s10, 1
    %s16 = ssub.s32 %s10, 2
    %s17 = sadd.s32 %s10, 1
    %s18 = ssub.s32 %s10, %s17
    %p19 = scmp.eq.s32.totalorder %s18, 0
    %s21 = sadd.s32 %s20, 1
    %s22 = scalar_select %p19, %s20, %s21
    %p25 = pneg %p19
    %p26 = scmp.eq.s32.totalorder %s10, 1
    %p27 = por %p25, %p26
    %p28 = scmp.ne.s32.totalorder %s20, %s23
    %p29 = scmp.eq.s32.totalorder %s10, 0
    %p30 = por %p28, %p29
    %p31 = scmp.ne.s32.totalorder %s20, %s23
    %p32 = scmp.eq.s32.totalorder %s15, 1
    %p33 = por %p31, %p32
    %p34 = scmp.ne.s32.totalorder %s23, %s24
    %p35 = scmp.eq.s32.totalorder %s15, 0
    %p36 = por %p34, %p35
    %p37 = scmp.ne.s32.totalorder %s23, %s24
    %p38 = scmp.eq.s32.totalorder %s16, 1
    %p39 = por %p37, %p38
    %p41 = scmp.ne.s32.totalorder %s24, %s40
    %p42 = scmp.eq.s32.totalorder %s16, 0
    %p43 = por %p41, %p42
    %s45 = sadd.s32 %s44, 1
    %p48 = scmp.eq.s32.totalorder %s10, 1
    %p49 = scmp.ne.s32.totalorder %s44, %s46
    %p50 = scmp.eq.s32.totalorder %s10, 0
    %p51 = por %p49, %p50
    %p52 = scmp.ne.s32.totalorder %s44, %s46
    %p53 = scmp.eq.s32.totalorder %s15, 1
    %p54 = por %p52, %p53
    %p55 = scmp.ne.s32.totalorder %s46, %s47
    %p56 = scmp.eq.s32.totalorder %s15, 0
    %p57 = por %p55, %p56
    %p58 = scmp.ne.s32.totalorder %s46, %s47
    %p59 = scmp.eq.s32.totalorder %s16, 1
    %p60 = por %p58, %p59
    %p62 = scmp.ne.s32.totalorder %s47, %s61
    %p63 = scmp.eq.s32.totalorder %s16, 0
    %p64 = por %p62, %p63
    %s66 = sadd.s32 %s65, 1
    %p69 = scmp.eq.s32.totalorder %s10, 1
    %p70 = scmp.ne.s32.totalorder %s65, %s67
    %p71 = scmp.eq.s32.totalorder %s10, 0
    %p72 = por %p70, %p71
    %p73 = scmp.ne.s32.totalorder %s65, %s67
    %p74 = scmp.eq.s32.totalorder %s15, 1
    %p75 = por %p73, %p74
    %p76 = scmp.ne.s32.totalorder %s67, %s68
    %p77 = scmp.eq.s32.totalorder %s15, 0
    %p78 = por %p76, %p77
    %p79 = scmp.ne.s32.totalorder %s67, %s68
    %p80 = scmp.eq.s32.totalorder %s16, 1
    %p81 = por %p79, %p80
    %p83 = scmp.ne.s32.totalorder %s68, %s82
    %p84 = scmp.eq.s32.totalorder %s16, 0
    %p85 = por %p83, %p84
    %s87 = sadd.s32 %s86, 1
    %p90 = scmp.eq.s32.totalorder %s10, 1
    %p91 = scmp.ne.s32.totalorder %s86, %s88
    %p92 = scmp.eq.s32.totalorder %s10, 0
    %p93 = por %p91, %p92
    %p94 = scmp.ne.s32.totalorder %s86, %s88
    %p95 = scmp.eq.s32.totalorder %s15, 1
    %p96 = por %p94, %p95
    %p97 = scmp.ne.s32.totalorder %s88, %s89
    %p98 = scmp.eq.s32.totalorder %s15, 0
    %p99 = por %p97, %p98
    %p100 = scmp.ne.s32.totalorder %s88, %s89
    %p101 = scmp.eq.s32.totalorder %s16, 1
    %p102 = por %p100, %p101
    %p104 = scmp.ne.s32.totalorder %s89, %s103
    %p105 = scmp.eq.s32.totalorder %s16, 0
    %p106 = por %p104, %p105
    %s107 = ssub.s32 %s10, %s17
    %p108 = scmp.eq.s32.totalorder %s107, 0
    %s110 = sadd.s32 %s109, 1
    %s111 = scalar_select %p108, %s109, %s110
    %p114 = pneg %p108
    %p115 = scmp.eq.s32.totalorder %s10, 1
    %p116 = por %p114, %p115
    %p117 = scmp.ne.s32.totalorder %s109, %s112
    %p118 = scmp.eq.s32.totalorder %s10, 0
    %p119 = por %p117, %p118
    %p120 = scmp.ne.s32.totalorder %s109, %s112
    %p121 = scmp.eq.s32.totalorder %s15, 1
    %p122 = por %p120, %p121
    %p123 = scmp.ne.s32.totalorder %s112, %s113
    %p124 = scmp.eq.s32.totalorder %s15, 0
    %p125 = por %p123, %p124
    %p126 = scmp.ne.s32.totalorder %s112, %s113
    %p127 = scmp.eq.s32.totalorder %s16, 1
    %p128 = por %p126, %p127
    %p130 = scmp.ne.s32.totalorder %s113, %s129
    %p131 = scmp.eq.s32.totalorder %s16, 0
    %p132 = por %p130, %p131
    %p133 = scmp.le.s32.totalorder 1, %s10
    %p134 = scmp.lt.s32.totalorder %s10, 3
    %p135 = pnand %p133, %p134
    %p136 = pneg %p135
    // Predicated region
    $region9: #{basic_conv3d.1} parent=5 // pred_check
      _
    $region10: #{basic_conv3d.1} parent=5 // pred_check_branch
      %138 = sbr.rel (%p135) target = $region12
    $region11: #{basic_conv3d.1} parent=5 // pred_region
      %s139 = ssub.s32 %s10, 1
      // Predicated region
      $region13: #{basic_conv3d.1} parent=11 // pred_check
        %p140 = pneg %p57
      $region14: #{basic_conv3d.1} parent=11 // pred_check_branch
        %142 = sbr.rel (%p140) target = $region16
      $region15: #{basic_conv3d.1} parent=11 // pred_region
        _
      $region16: #{basic_conv3d.1} parent=11 // pred_fallthru
        _
      // Predicated region
      $region17: #{basic_conv3d.1} parent=11 // pred_check
        %p143 = pneg %p78
      $region18: #{basic_conv3d.1} parent=11 // pred_check_branch
        %145 = sbr.rel (%p143) target = $region20
      $region19: #{basic_conv3d.1} parent=11 // pred_region
        _
      $region20: #{basic_conv3d.1} parent=11 // pred_fallthru
        _
      // Predicated region
      $region21: #{basic_conv3d.1} parent=11 // pred_check
        %p146 = pneg %p99
      $region22: #{basic_conv3d.1} parent=11 // pred_check_branch
        %148 = sbr.rel (%p146) target = $region24
      $region23: #{basic_conv3d.1} parent=11 // pred_region
        _
      $region24: #{basic_conv3d.1} parent=11 // pred_fallthru
        _
    $region12: #{basic_conv3d.1} parent=5 // pred_fallthru
      _
    %p149 = scmp.lt.s32.totalorder %s10, 2
    // Predicated region
    $region25: #{basic_conv3d.1} parent=5 // pred_check
      %p150 = pneg %p149
    $region26: #{basic_conv3d.1} parent=5 // pred_check_branch
      %152 = sbr.rel (%p150) target = $region28
    $region27: #{basic_conv3d.1} parent=5 // pred_region
      // Predicated region
      $region29: #{basic_conv3d.1} parent=27 // pred_check
        %p153 = pneg %p30
      $region30: #{basic_conv3d.1} parent=27 // pred_check_branch
        %155 = sbr.rel (%p153) target = $region32
      $region31: #{basic_conv3d.1} parent=27 // pred_region
        %p156 = scmp.lt.s32.totalorder %s10, 1
        %s157 = scalar_select %p156, %s10, 1
        %s158 = smul.addr %s157, 16
        %s159 = smul.addr %s158, 2
        %s160 = scalar_lea.vmem %s0, %s159
      $region32: #{basic_conv3d.1} parent=27 // pred_fallthru
        _
    $region28: #{basic_conv3d.1} parent=5 // pred_fallthru
      _
    %p161 = scmp.le.s32.totalorder 1, %s10
    %p162 = scmp.lt.s32.totalorder %s10, 3
    %p163 = pnand %p161, %p162
    %p164 = pneg %p163
    // Predicated region
    $region33: #{basic_conv3d.1} parent=5 // pred_check
      _
    $region34: #{basic_conv3d.1} parent=5 // pred_check_branch
      %166 = sbr.rel (%p163) target = $region36
    $region35: #{basic_conv3d.1} parent=5 // pred_region
      %s167 = ssub.s32 %s10, 1
      %p168 = scmp.lt.s32.totalorder %s15, 1
      %s169 = scalar_select %p168, %s15, 1
      %s170 = smul.addr %s169, 16
      %s171 = smul.addr %s170, 2
      %s172 = scalar_lea.vmem %s0, %s171
      %p173 = pneg %p36
      %p174 = pneg %p33
      %p175 = pneg %p57
      %p176 = pneg %p54
      %p177 = pneg %p78
      %p178 = pneg %p75
      %p179 = pneg %p99
      %p180 = pneg %p96
      %p181 = pneg %p125
      %p182 = pneg %p122
      %p183 = scmp.lt.s32.totalorder %s15, 1
      %s184 = scalar_select %p183, %s15, 1
      %s185 = smul.addr %s184, 16
      %s186 = smul.addr %s185, 8
      %s187 = scalar_lea.vmem %s4, %s186
      %p188 = scmp.lt.s32.totalorder %s15, 1
      %s189 = scalar_select %p188, %s15, 1
      %s190 = smul.addr %s189, 16
      %s191 = smul.addr %s190, 2
      %s192 = scalar_lea.vmem %s0, %s191
      %p193 = scmp.lt.s32.totalorder %s15, 1
      %s194 = scalar_select %p193, %s15, 1
      %s195 = smul.addr %s194, 16
      %s196 = smul.addr %s195, 8
      %s197 = scalar_lea.vmem %s4, %s196
      %199 = vst [vmem:[#allocation2] sm:$0x3f] 0
      %200 = vst [vmem:[#allocation2 + $0x26] sm:$0x3f] 0
      %v201 = vld [vmem:[%s192] sm:$0xff]
      %v202 = vld [vmem:[%s192 + $0x8] sm:$0xff]
      %v203 = vld [vmem:[%s192 + $0x10] sm:$0xff]
      %v204 = vld [vmem:[%s192 + $0x18] sm:$0xff]
      %205 = vst [vmem:[#allocation2 + $0x6] sm:$0xff] %v201
      %206 = vst [vmem:[#allocation2 + $0xe] sm:$0xff] %v202
      %207 = vst [vmem:[#allocation2 + $0x16] sm:$0xff] %v203
      %208 = vst [vmem:[#allocation2 + $0x1e] sm:$0xff] %v204
      %v209 = vld [vmem:[#allocation2] sm:$0xff]
      %v210 = vld [vmem:[#allocation2 + $0x8] sm:$0xff]
      %v211 = vld [vmem:[#allocation2 + $0x10] sm:$0xff]
      %v212 = vld [vmem:[#allocation2 + $0x18] sm:$0xff]
      %v213 = vld [vmem:[#allocation2 + $0x20] sm:$0x3]
      %v214 = vld [vmem:[%s2] sm:$0x11]
      %v215 = vld [vmem:[%s2 + $0x8] sm:$0x11]
      %v216 = vld [vmem:[%s2 + $0x10] sm:$0x11]
      %v217 = vld [vmem:[%s2 + $0x18] sm:$0x11]
      %v218 = vld [vmem:[%s2 + $0x20] sm:$0x11]
      %v219 = vld [vmem:[%s2 + $0x28] sm:$0x11]
      %v220 = vld [vmem:[%s2 + $0x30] sm:$0x11]
      %v221 = vld [vmem:[%s2 + $0x38] sm:$0x11]
      %v230 = vunpack.c.l.b16 %v214
      %v231 = vunpack.c.h.b16 %v214
      %v232 = vunpack.c.l.b16 %v215
      %v233 = vunpack.c.h.b16 %v215
      %v234 = vunpack.c.l.b16 %v216
      %v235 = vunpack.c.h.b16 %v216
      %v236 = vunpack.c.l.b16 %v217
      %v237 = vunpack.c.h.b16 %v217
      %v238 = vunpack.c.l.b16 %v218
      %v239 = vunpack.c.h.b16 %v218
      %v240 = vunpack.c.l.b16 %v219
      %v241 = vunpack.c.h.b16 %v219
      %v242 = vunpack.c.l.b16 %v220
      %v243 = vunpack.c.h.b16 %v220
      %v244 = vunpack.c.l.b16 %v221
      %v245 = vunpack.c.h.b16 %v221
      %v246 = vpack.c.b16 %v230, %v230
      %v247 = vpack.c.b16 %v231, %v231
      %v248 = vpack.c.b16 %v232, %v232
      %v249 = vpack.c.b16 %v233, %v233
      %v250 = vpack.c.b16 %v234, %v234
      %v251 = vpack.c.b16 %v235, %v235
      %v252 = vpack.c.b16 %v236, %v236
      %v253 = vpack.c.b16 %v237, %v237
      %v254 = vpack.c.b16 %v238, %v238
      %v255 = vpack.c.b16 %v239, %v239
      %v256 = vpack.c.b16 %v240, %v240
      %v257 = vpack.c.b16 %v241, %v241
      %v258 = vpack.c.b16 %v242, %v242
      %v259 = vpack.c.b16 %v243, %v243
      %v260 = vpack.c.b16 %v244, %v244
      %v261 = vpack.c.b16 %v245, %v245
      %v263 = vpack.i.b16 %v246, %v246
      %v265 = vlaneseq
      %v266 = vshrl.u32 %v265, 7
      %v267 = vsub.s32 0, %v266
      %v268 = vrot.slane %v263, %v267
      %v270 = vpack.i.b16 %v247, %v247
      %v272 = vlaneseq
      %v273 = vshrl.u32 %v272, 7
      %v274 = vsub.s32 0, %v273
      %v275 = vrot.slane %v270, %v274
      %v277 = vpack.i.b16 %v248, %v248
      %v279 = vlaneseq
      %v280 = vshrl.u32 %v279, 7
      %v281 = vsub.s32 0, %v280
      %v282 = vrot.slane %v277, %v281
      %v284 = vpack.i.b16 %v249, %v249
      %v286 = vlaneseq
      %v287 = vshrl.u32 %v286, 7
      %v288 = vsub.s32 0, %v287
      %v289 = vrot.slane %v284, %v288
      %v291 = vpack.i.b16 %v250, %v250
      %v293 = vlaneseq
      %v294 = vshrl.u32 %v293, 7
      %v295 = vsub.s32 0, %v294
      %v296 = vrot.slane %v291, %v295
      %v298 = vpack.i.b16 %v251, %v251
      %v300 = vlaneseq
      %v301 = vshrl.u32 %v300, 7
      %v302 = vsub.s32 0, %v301
      %v303 = vrot.slane %v298, %v302
      %v305 = vpack.i.b16 %v252, %v252
      %v307 = vlaneseq
      %v308 = vshrl.u32 %v307, 7
      %v309 = vsub.s32 0, %v308
      %v310 = vrot.slane %v305, %v309
      %v312 = vpack.i.b16 %v253, %v253
      %v314 = vlaneseq
      %v315 = vshrl.u32 %v314, 7
      %v316 = vsub.s32 0, %v315
      %v317 = vrot.slane %v312, %v316
      %v319 = vpack.i.b16 %v254, %v254
      %v321 = vlaneseq
      %v322 = vshrl.u32 %v321, 7
      %v323 = vsub.s32 0, %v322
      %v324 = vrot.slane %v319, %v323
      %v326 = vpack.i.b16 %v255, %v255
      %v328 = vlaneseq
      %v329 = vshrl.u32 %v328, 7
      %v330 = vsub.s32 0, %v329
      %v331 = vrot.slane %v326, %v330
      %v333 = vpack.i.b16 %v256, %v256
      %v335 = vlaneseq
      %v336 = vshrl.u32 %v335, 7
      %v337 = vsub.s32 0, %v336
      %v338 = vrot.slane %v333, %v337
      %v340 = vpack.i.b16 %v257, %v257
      %v342 = vlaneseq
      %v343 = vshrl.u32 %v342, 7
      %v344 = vsub.s32 0, %v343
      %v345 = vrot.slane %v340, %v344
      %v347 = vpack.i.b16 %v258, %v258
      %v349 = vlaneseq
      %v350 = vshrl.u32 %v349, 7
      %v351 = vsub.s32 0, %v350
      %v352 = vrot.slane %v347, %v351
      %v354 = vpack.i.b16 %v259, %v259
      %v356 = vlaneseq
      %v357 = vshrl.u32 %v356, 7
      %v358 = vsub.s32 0, %v357
      %v359 = vrot.slane %v354, %v358
      %v361 = vpack.i.b16 %v260, %v260
      %v363 = vlaneseq
      %v364 = vshrl.u32 %v363, 7
      %v365 = vsub.s32 0, %v364
      %v366 = vrot.slane %v361, %v365
      %v368 = vpack.i.b16 %v261, %v261
      %v370 = vlaneseq
      %v371 = vshrl.u32 %v370, 7
      %v372 = vsub.s32 0, %v371
      %v373 = vrot.slane %v368, %v372
      %v390 = vcombine.low %v268, %v275
      %v391 = vcombine.low %v282, %v289
      %v393 = vunpack.c.l.s4 1983009808
      %v394 = vunpack.c.0.s8 %v393
      %v395 = vlaneseq
      %v396 = vshrl.u32 %v395, 7
      %v397 = vsub.s32 %v394, %v396
      %v398 = vrot.slane %v390, %v397
      %v400 = vunpack.c.l.s4 1983009808
      %v401 = vunpack.c.0.s8 %v400
      %v402 = vlaneseq
      %v403 = vshrl.u32 %v402, 7
      %v404 = vsub.s32 %v401, %v403
      %v405 = vrot.slane %v391, %v404
      %v406 = vcombine.low %v398, %v405
      %v407 = vcombine.low %v296, %v303
      %v408 = vcombine.low %v310, %v317
      %v410 = vunpack.c.l.s4 1983009808
      %v411 = vunpack.c.0.s8 %v410
      %v412 = vlaneseq
      %v413 = vshrl.u32 %v412, 7
      %v414 = vsub.s32 %v411, %v413
      %v415 = vrot.slane %v407, %v414
      %v417 = vunpack.c.l.s4 1983009808
      %v418 = vunpack.c.0.s8 %v417
      %v419 = vlaneseq
      %v420 = vshrl.u32 %v419, 7
      %v421 = vsub.s32 %v418, %v420
      %v422 = vrot.slane %v408, %v421
      %v423 = vcombine.low %v415, %v422
      %v424 = vcombine.low %v324, %v331
      %v425 = vcombine.low %v338, %v345
      %v427 = vunpack.c.l.s4 1983009808
      %v428 = vunpack.c.0.s8 %v427
      %v429 = vlaneseq
      %v430 = vshrl.u32 %v429, 7
      %v431 = vsub.s32 %v428, %v430
      %v432 = vrot.slane %v424, %v431
      %v434 = vunpack.c.l.s4 1983009808
      %v435 = vunpack.c.0.s8 %v434
      %v436 = vlaneseq
      %v437 = vshrl.u32 %v436, 7
      %v438 = vsub.s32 %v435, %v437
      %v439 = vrot.slane %v425, %v438
      %v440 = vcombine.low %v432, %v439
      %v441 = vcombine.low %v352, %v359
      %v442 = vcombine.low %v366, %v373
      %v444 = vunpack.c.l.s4 1983009808
      %v445 = vunpack.c.0.s8 %v444
      %v446 = vlaneseq
      %v447 = vshrl.u32 %v446, 7
      %v448 = vsub.s32 %v445, %v447
      %v449 = vrot.slane %v441, %v448
      %v451 = vunpack.c.l.s4 1983009808
      %v452 = vunpack.c.0.s8 %v451
      %v453 = vlaneseq
      %v454 = vshrl.u32 %v453, 7
      %v455 = vsub.s32 %v452, %v454
      %v456 = vrot.slane %v442, %v455
      %v457 = vcombine.low %v449, %v456
      %458 = vrot.lane.b32.xlu0 %v406, 111
      %v459 = vpop.permute.xlu0 %458
      %460 = vrot.lane.b32.xlu0 %v423, 111
      %v461 = vpop.permute.xlu0 %460
      %462 = vrot.lane.b32.xlu0 %v440, 111
      %v463 = vpop.permute.xlu0 %462
      %464 = vrot.lane.b32.xlu0 %v457, 111
      %v465 = vpop.permute.xlu0 %464
      %v466 = vrot.slane %v459, 6
      %v467 = vrot.slane %v461, 6
      %v468 = vrot.slane %v463, 6
      %v469 = vrot.slane %v465, 6
      %vm470 = vcmask 908288
      %v471 = vsel %vm470, %v466, %v459
      %vm472 = vcmask 1041408
      %v473 = vsel %vm472, %v466, %v467
      %v474 = vsel %vm470, %v473, %v461
      %v475 = vsel %vm472, %v467, %v468
      %v476 = vsel %vm470, %v475, %v463
      %v477 = vsel %vm472, %v468, %v469
      %v478 = vsel %vm470, %v477, %v465
      %v484 = vmul.bf16 %v209, %v471
      %v485 = vmul.bf16 %v210, %v474
      %v486 = vmul.bf16 %v211, %v476
      %v487 = vmul.bf16 %v212, %v478
      %v488 = vmul.bf16 %v213, %v469
      %v489 = vshrl.u32 %v246, 16
      %v490 = vpack.i.b16 %v489, %v489
      %v492 = vlaneseq
      %v493 = vshrl.u32 %v492, 7
      %v494 = vsub.s32 0, %v493
      %v495 = vrot.slane %v490, %v494
      %v496 = vshrl.u32 %v247, 16
      %v497 = vpack.i.b16 %v496, %v496
      %v499 = vlaneseq
      %v500 = vshrl.u32 %v499, 7
      %v501 = vsub.s32 0, %v500
      %v502 = vrot.slane %v497, %v501
      %v503 = vshrl.u32 %v248, 16
      %v504 = vpack.i.b16 %v503, %v503
      %v506 = vlaneseq
      %v507 = vshrl.u32 %v506, 7
      %v508 = vsub.s32 0, %v507
      %v509 = vrot.slane %v504, %v508
      %v510 = vshrl.u32 %v249, 16
      %v511 = vpack.i.b16 %v510, %v510
      %v513 = vlaneseq
      %v514 = vshrl.u32 %v513, 7
      %v515 = vsub.s32 0, %v514
      %v516 = vrot.slane %v511, %v515
      %v517 = vshrl.u32 %v250, 16
      %v518 = vpack.i.b16 %v517, %v517
      %v520 = vlaneseq
      %v521 = vshrl.u32 %v520, 7
      %v522 = vsub.s32 0, %v521
      %v523 = vrot.slane %v518, %v522
      %v524 = vshrl.u32 %v251, 16
      %v525 = vpack.i.b16 %v524, %v524
      %v527 = vlaneseq
      %v528 = vshrl.u32 %v527, 7
      %v529 = vsub.s32 0, %v528
      %v530 = vrot.slane %v525, %v529
      %v531 = vshrl.u32 %v252, 16
      %v532 = vpack.i.b16 %v531, %v531
      %v534 = vlaneseq
      %v535 = vshrl.u32 %v534, 7
      %v536 = vsub.s32 0, %v535
      %v537 = vrot.slane %v532, %v536
      %v538 = vshrl.u32 %v253, 16
      %v539 = vpack.i.b16 %v538, %v538
      %v541 = vlaneseq
      %v542 = vshrl.u32 %v541, 7
      %v543 = vsub.s32 0, %v542
      %v544 = vrot.slane %v539, %v543
      %v545 = vshrl.u32 %v254, 16
      %v546 = vpack.i.b16 %v545, %v545
      %v548 = vlaneseq
      %v549 = vshrl.u32 %v548, 7
      %v550 = vsub.s32 0, %v549
      %v551 = vrot.slane %v546, %v550
      %v552 = vshrl.u32 %v255, 16
      %v553 = vpack.i.b16 %v552, %v552
      %v555 = vlaneseq
      %v556 = vshrl.u32 %v555, 7
      %v557 = vsub.s32 0, %v556
      %v558 = vrot.slane %v553, %v557
      %v559 = vshrl.u32 %v256, 16
      %v560 = vpack.i.b16 %v559, %v559
      %v562 = vlaneseq
      %v563 = vshrl.u32 %v562, 7
      %v564 = vsub.s32 0, %v563
      %v565 = vrot.slane %v560, %v564
      %v566 = vshrl.u32 %v257, 16
      %v567 = vpack.i.b16 %v566, %v566
      %v569 = vlaneseq
      %v570 = vshrl.u32 %v569, 7
      %v571 = vsub.s32 0, %v570
      %v572 = vrot.slane %v567, %v571
      %v573 = vshrl.u32 %v258, 16
      %v574 = vpack.i.b16 %v573, %v573
      %v576 = vlaneseq
      %v577 = vshrl.u32 %v576, 7
      %v578 = vsub.s32 0, %v577
      %v579 = vrot.slane %v574, %v578
      %v580 = vshrl.u32 %v259, 16
      %v581 = vpack.i.b16 %v580, %v580
      %v583 = vlaneseq
      %v584 = vshrl.u32 %v583, 7
      %v585 = vsub.s32 0, %v584
      %v586 = vrot.slane %v581, %v585
      %v587 = vshrl.u32 %v260, 16
      %v588 = vpack.i.b16 %v587, %v587
      %v590 = vlaneseq
      %v591 = vshrl.u32 %v590, 7
      %v592 = vsub.s32 0, %v591
      %v593 = vrot.slane %v588, %v592
      %v594 = vshrl.u32 %v261, 16
      %v595 = vpack.i.b16 %v594, %v594
      %v597 = vlaneseq
      %v598 = vshrl.u32 %v597, 7
      %v599 = vsub.s32 0, %v598
      %v600 = vrot.slane %v595, %v599
      %v617 = vcombine.low %v495, %v502
      %v618 = vcombine.low %v509, %v516
      %v620 = vunpack.c.l.s4 1983009808
      %v621 = vunpack.c.0.s8 %v620
      %v622 = vlaneseq
      %v623 = vshrl.u32 %v622, 7
      %v624 = vsub.s32 %v621, %v623
      %v625 = vrot.slane %v617, %v624
      %v627 = vunpack.c.l.s4 1983009808
      %v628 = vunpack.c.0.s8 %v627
      %v629 = vlaneseq
      %v630 = vshrl.u32 %v629, 7
      %v631 = vsub.s32 %v628, %v630
      %v632 = vrot.slane %v618, %v631
      %v633 = vcombine.low %v625, %v632
      %v634 = vcombine.low %v523, %v530
      %v635 = vcombine.low %v537, %v544
      %v637 = vunpack.c.l.s4 1983009808
      %v638 = vunpack.c.0.s8 %v637
      %v639 = vlaneseq
      %v640 = vshrl.u32 %v639, 7
      %v641 = vsub.s32 %v638, %v640
      %v642 = vrot.slane %v634, %v641
      %v644 = vunpack.c.l.s4 1983009808
      %v645 = vunpack.c.0.s8 %v644
      %v646 = vlaneseq
      %v647 = vshrl.u32 %v646, 7
      %v648 = vsub.s32 %v645, %v647
      %v649 = vrot.slane %v635, %v648
      %v650 = vcombine.low %v642, %v649
      %v651 = vcombine.low %v551, %v558
      %v652 = vcombine.low %v565, %v572
      %v654 = vunpack.c.l.s4 1983009808
      %v655 = vunpack.c.0.s8 %v654
      %v656 = vlaneseq
      %v657 = vshrl.u32 %v656, 7
      %v658 = vsub.s32 %v655, %v657
      %v659 = vrot.slane %v651, %v658
      %v661 = vunpack.c.l.s4 1983009808
      %v662 = vunpack.c.0.s8 %v661
      %v663 = vlaneseq
      %v664 = vshrl.u32 %v663, 7
      %v665 = vsub.s32 %v662, %v664
      %v666 = vrot.slane %v652, %v665
      %v667 = vcombine.low %v659, %v666
      %v668 = vcombine.low %v579, %v586
      %v669 = vcombine.low %v593, %v600
      %v671 = vunpack.c.l.s4 1983009808
      %v672 = vunpack.c.0.s8 %v671
      %v673 = vlaneseq
      %v674 = vshrl.u32 %v673, 7
      %v675 = vsub.s32 %v672, %v674
      %v676 = vrot.slane %v668, %v675
      %v678 = vunpack.c.l.s4 1983009808
      %v679 = vunpack.c.0.s8 %v678
      %v680 = vlaneseq
      %v681 = vshrl.u32 %v680, 7
      %v682 = vsub.s32 %v679, %v681
      %v683 = vrot.slane %v669, %v682
      %v684 = vcombine.low %v676, %v683
      %685 = vrot.lane.b32.xlu0 %v633, 112
      %v686 = vpop.permute.xlu0 %685
      %687 = vrot.lane.b32.xlu0 %v650, 112
      %v688 = vpop.permute.xlu0 %687
      %689 = vrot.lane.b32.xlu0 %v667, 112
      %v690 = vpop.permute.xlu0 %689
      %691 = vrot.lane.b32.xlu0 %v684, 112
      %v692 = vpop.permute.xlu0 %691
      %v693 = vrot.slane %v686, 6
      %v694 = vrot.slane %v688, 6
      %v695 = vrot.slane %v690, 6
      %v696 = vrot.slane %v692, 6
      %vm697 = vcmask 916480
      %v698 = vsel %vm697, %v693, %v686
      %v699 = vsel %vm472, %v693, %v694
      %v700 = vsel %vm697, %v699, %v688
      %v701 = vsel %vm472, %v694, %v695
      %v702 = vsel %vm697, %v701, %v690
      %v703 = vsel %vm472, %v695, %v696
      %v704 = vsel %vm697, %v703, %v692
      %v710 = vmul.bf16 %v209, %v698
      %v711 = vmul.bf16 %v210, %v700
      %v712 = vmul.bf16 %v211, %v702
      %v713 = vmul.bf16 %v212, %v704
      %v714 = vmul.bf16 %v213, %v696
      %v715 = vld [vmem:[%s2] sm:$0x22]
      %v716 = vld [vmem:[%s2 + $0x8] sm:$0x22]
      %v717 = vld [vmem:[%s2 + $0x10] sm:$0x22]
      %v718 = vld [vmem:[%s2 + $0x18] sm:$0x22]
      %v719 = vld [vmem:[%s2 + $0x20] sm:$0x22]
      %v720 = vld [vmem:[%s2 + $0x28] sm:$0x22]
      %v721 = vld [vmem:[%s2 + $0x30] sm:$0x22]
      %v722 = vld [vmem:[%s2 + $0x38] sm:$0x22]
      %v731 = vunpack.c.l.b16 %v715
      %v732 = vunpack.c.h.b16 %v715
      %v733 = vunpack.c.l.b16 %v716
      %v734 = vunpack.c.h.b16 %v716
      %v735 = vunpack.c.l.b16 %v717
      %v736 = vunpack.c.h.b16 %v717
      %v737 = vunpack.c.l.b16 %v718
      %v738 = vunpack.c.h.b16 %v718
      %v739 = vunpack.c.l.b16 %v719
      %v740 = vunpack.c.h.b16 %v719
      %v741 = vunpack.c.l.b16 %v720
      %v742 = vunpack.c.h.b16 %v720
      %v743 = vunpack.c.l.b16 %v721
      %v744 = vunpack.c.h.b16 %v721
      %v745 = vunpack.c.l.b16 %v722
      %v746 = vunpack.c.h.b16 %v722
      %v747 = vpack.c.b16 %v731, %v731
      %v748 = vpack.c.b16 %v732, %v732
      %v749 = vpack.c.b16 %v733, %v733
      %v750 = vpack.c.b16 %v734, %v734
      %v751 = vpack.c.b16 %v735, %v735
      %v752 = vpack.c.b16 %v736, %v736
      %v753 = vpack.c.b16 %v737, %v737
      %v754 = vpack.c.b16 %v738, %v738
      %v755 = vpack.c.b16 %v739, %v739
      %v756 = vpack.c.b16 %v740, %v740
      %v757 = vpack.c.b16 %v741, %v741
      %v758 = vpack.c.b16 %v742, %v742
      %v759 = vpack.c.b16 %v743, %v743
      %v760 = vpack.c.b16 %v744, %v744
      %v761 = vpack.c.b16 %v745, %v745
      %v762 = vpack.c.b16 %v746, %v746
      %v764 = vpack.i.b16 %v747, %v747
      %v766 = vlaneseq
      %v767 = vshrl.u32 %v766, 7
      %v768 = vsub.s32 1, %v767
      %v769 = vrot.slane %v764, %v768
      %v771 = vpack.i.b16 %v748, %v748
      %v773 = vlaneseq
      %v774 = vshrl.u32 %v773, 7
      %v775 = vsub.s32 1, %v774
      %v776 = vrot.slane %v771, %v775
      %v778 = vpack.i.b16 %v749, %v749
      %v780 = vlaneseq
      %v781 = vshrl.u32 %v780, 7
      %v782 = vsub.s32 1, %v781
      %v783 = vrot.slane %v778, %v782
      %v785 = vpack.i.b16 %v750, %v750
      %v787 = vlaneseq
      %v788 = vshrl.u32 %v787, 7
      %v789 = vsub.s32 1, %v788
      %v790 = vrot.slane %v785, %v789
      %v792 = vpack.i.b16 %v751, %v751
      %v794 = vlaneseq
      %v795 = vshrl.u32 %v794, 7
      %v796 = vsub.s32 1, %v795
      %v797 = vrot.slane %v792, %v796
      %v799 = vpack.i.b16 %v752, %v752
      %v801 = vlaneseq
      %v802 = vshrl.u32 %v801, 7
      %v803 = vsub.s32 1, %v802
      %v804 = vrot.slane %v799, %v803
      %v806 = vpack.i.b16 %v753, %v753
      %v808 = vlaneseq
      %v809 = vshrl.u32 %v808, 7
      %v810 = vsub.s32 1, %v809
      %v811 = vrot.slane %v806, %v810
      %v813 = vpack.i.b16 %v754, %v754
      %v815 = vlaneseq
      %v816 = vshrl.u32 %v815, 7
      %v817 = vsub.s32 1, %v816
      %v818 = vrot.slane %v813, %v817
      %v820 = vpack.i.b16 %v755, %v755
      %v822 = vlaneseq
      %v823 = vshrl.u32 %v822, 7
      %v824 = vsub.s32 1, %v823
      %v825 = vrot.slane %v820, %v824
      %v827 = vpack.i.b16 %v756, %v756
      %v829 = vlaneseq
      %v830 = vshrl.u32 %v829, 7
      %v831 = vsub.s32 1, %v830
      %v832 = vrot.slane %v827, %v831
      %v834 = vpack.i.b16 %v757, %v757
      %v836 = vlaneseq
      %v837 = vshrl.u32 %v836, 7
      %v838 = vsub.s32 1, %v837
      %v839 = vrot.slane %v834, %v838
      %v841 = vpack.i.b16 %v758, %v758
      %v843 = vlaneseq
      %v844 = vshrl.u32 %v843, 7
      %v845 = vsub.s32 1, %v844
      %v846 = vrot.slane %v841, %v845
      %v848 = vpack.i.b16 %v759, %v759
      %v850 = vlaneseq
      %v851 = vshrl.u32 %v850, 7
      %v852 = vsub.s32 1, %v851
      %v853 = vrot.slane %v848, %v852
      %v855 = vpack.i.b16 %v760, %v760
      %v857 = vlaneseq
      %v858 = vshrl.u32 %v857, 7
      %v859 = vsub.s32 1, %v858
      %v860 = vrot.slane %v855, %v859
      %v862 = vpack.i.b16 %v761, %v761
      %v864 = vlaneseq
      %v865 = vshrl.u32 %v864, 7
      %v866 = vsub.s32 1, %v865
      %v867 = vrot.slane %v862, %v866
      %v869 = vpack.i.b16 %v762, %v762
      %v871 = vlaneseq
      %v872 = vshrl.u32 %v871, 7
      %v873 = vsub.s32 1, %v872
      %v874 = vrot.slane %v869, %v873
      %v891 = vcombine.low %v769, %v776
      %v892 = vcombine.low %v783, %v790
      %v894 = vunpack.c.l.s4 1983009808
      %v895 = vunpack.c.0.s8 %v894
      %v896 = vlaneseq
      %v897 = vshrl.u32 %v896, 7
      %v898 = vsub.s32 %v895, %v897
      %v899 = vrot.slane %v891, %v898
      %v901 = vunpack.c.l.s4 1983009808
      %v902 = vunpack.c.0.s8 %v901
      %v903 = vlaneseq
      %v904 = vshrl.u32 %v903, 7
      %v905 = vsub.s32 %v902, %v904
      %v906 = vrot.slane %v892, %v905
      %v907 = vcombine.low %v899, %v906
      %v908 = vcombine.low %v797, %v804
      %v909 = vcombine.low %v811, %v818
      %v911 = vunpack.c.l.s4 1983009808
      %v912 = vunpack.c.0.s8 %v911
      %v913 = vlaneseq
      %v914 = vshrl.u32 %v913, 7
      %v915 = vsub.s32 %v912, %v914
      %v916 = vrot.slane %v908, %v915
      %v918 = vunpack.c.l.s4 1983009808
      %v919 = vunpack.c.0.s8 %v918
      %v920 = vlaneseq
      %v921 = vshrl.u32 %v920, 7
      %v922 = vsub.s32 %v919, %v921
      %v923 = vrot.slane %v909, %v922
      %v924 = vcombine.low %v916, %v923
      %v925 = vcombine.low %v825, %v832
      %v926 = vcombine.low %v839, %v846
      %v928 = vunpack.c.l.s4 1983009808
      %v929 = vunpack.c.0.s8 %v928
      %v930 = vlaneseq
      %v931 = vshrl.u32 %v930, 7
      %v932 = vsub.s32 %v929, %v931
      %v933 = vrot.slane %v925, %v932
      %v935 = vunpack.c.l.s4 1983009808
      %v936 = vunpack.c.0.s8 %v935
      %v937 = vlaneseq
      %v938 = vshrl.u32 %v937, 7
      %v939 = vsub.s32 %v936, %v938
      %v940 = vrot.slane %v926, %v939
      %v941 = vcombine.low %v933, %v940
      %v942 = vcombine.low %v853, %v860
      %v943 = vcombine.low %v867, %v874
      %v945 = vunpack.c.l.s4 1983009808
      %v946 = vunpack.c.0.s8 %v945
      %v947 = vlaneseq
      %v948 = vshrl.u32 %v947, 7
      %v949 = vsub.s32 %v946, %v948
      %v950 = vrot.slane %v942, %v949
      %v952 = vunpack.c.l.s4 1983009808
      %v953 = vunpack.c.0.s8 %v952
      %v954 = vlaneseq
      %v955 = vshrl.u32 %v954, 7
      %v956 = vsub.s32 %v953, %v955
      %v957 = vrot.slane %v943, %v956
      %v958 = vcombine.low %v950, %v957
      %959 = vrot.lane.b32.xlu0 %v907, 113
      %v960 = vpop.permute.xlu0 %959
      %961 = vrot.lane.b32.xlu0 %v924, 113
      %v962 = vpop.permute.xlu0 %961
      %963 = vrot.lane.b32.xlu0 %v941, 113
      %v964 = vpop.permute.xlu0 %963
      %965 = vrot.lane.b32.xlu0 %v958, 113
      %v966 = vpop.permute.xlu0 %965
      %v967 = vrot.slane %v960, 6
      %v968 = vrot.slane %v962, 6
      %v969 = vrot.slane %v964, 6
      %v970 = vrot.slane %v966, 6
      %vm971 = vcmask 924672
      %v972 = vsel %vm971, %v967, %v960
      %v973 = vsel %vm472, %v967, %v968
      %v974 = vsel %vm971, %v973, %v962
      %v975 = vsel %vm472, %v968, %v969
      %v976 = vsel %vm971, %v975, %v964
      %v977 = vsel %vm472, %v969, %v970
      %v978 = vsel %vm971, %v977, %v966
      %v984 = vmul.bf16 %v209, %v972
      %v985 = vmul.bf16 %v210, %v974
      %v986 = vmul.bf16 %v211, %v976
      %v987 = vmul.bf16 %v212, %v978
      %v988 = vmul.bf16 %v213, %v970
      %v989 = vshrl.u32 %v747, 16
      %v990 = vpack.i.b16 %v989, %v989
      %v992 = vlaneseq
      %v993 = vshrl.u32 %v992, 7
      %v994 = vsub.s32 1, %v993
      %v995 = vrot.slane %v990, %v994
      %v996 = vshrl.u32 %v748, 16
      %v997 = vpack.i.b16 %v996, %v996
      %v999 = vlaneseq
      %v1000 = vshrl.u32 %v999, 7
      %v1001 = vsub.s32 1, %v1000
      %v1002 = vrot.slane %v997, %v1001
      %v1003 = vshrl.u32 %v749, 16
      %v1004 = vpack.i.b16 %v1003, %v1003
      %v1006 = vlaneseq
      %v1007 = vshrl.u32 %v1006, 7
      %v1008 = vsub.s32 1, %v1007
      %v1009 = vrot.slane %v1004, %v1008
      %v1010 = vshrl.u32 %v750, 16
      %v1011 = vpack.i.b16 %v1010, %v1010
      %v1013 = vlaneseq
      %v1014 = vshrl.u32 %v1013, 7
      %v1015 = vsub.s32 1, %v1014
      %v1016 = vrot.slane %v1011, %v1015
      %v1017 = vshrl.u32 %v751, 16
      %v1018 = vpack.i.b16 %v1017, %v1017
      %v1020 = vlaneseq
      %v1021 = vshrl.u32 %v1020, 7
      %v1022 = vsub.s32 1, %v1021
      %v1023 = vrot.slane %v1018, %v1022
      %v1024 = vshrl.u32 %v752, 16
      %v1025 = vpack.i.b16 %v1024, %v1024
      %v1027 = vlaneseq
      %v1028 = vshrl.u32 %v1027, 7
      %v1029 = vsub.s32 1, %v1028
      %v1030 = vrot.slane %v1025, %v1029
      %v1031 = vshrl.u32 %v753, 16
      %v1032 = vpack.i.b16 %v1031, %v1031
      %v1034 = vlaneseq
      %v1035 = vshrl.u32 %v1034, 7
      %v1036 = vsub.s32 1, %v1035
      %v1037 = vrot.slane %v1032, %v1036
      %v1038 = vshrl.u32 %v754, 16
      %v1039 = vpack.i.b16 %v1038, %v1038
      %v1041 = vlaneseq
      %v1042 = vshrl.u32 %v1041, 7
      %v1043 = vsub.s32 1, %v1042
      %v1044 = vrot.slane %v1039, %v1043
      %v1045 = vshrl.u32 %v755, 16
      %v1046 = vpack.i.b16 %v1045, %v1045
      %v1048 = vlaneseq
      %v1049 = vshrl.u32 %v1048, 7
      %v1050 = vsub.s32 1, %v1049
      %v1051 = vrot.slane %v1046, %v1050
      %v1052 = vshrl.u32 %v756, 16
      %v1053 = vpack.i.b16 %v1052, %v1052
      %v1055 = vlaneseq
      %v1056 = vshrl.u32 %v1055, 7
      %v1057 = vsub.s32 1, %v1056
      %v1058 = vrot.slane %v1053, %v1057
      %v1059 = vshrl.u32 %v757, 16
      %v1060 = vpack.i.b16 %v1059, %v1059
      %v1062 = vlaneseq
      %v1063 = vshrl.u32 %v1062, 7
      %v1064 = vsub.s32 1, %v1063
      %v1065 = vrot.slane %v1060, %v1064
      %v1066 = vshrl.u32 %v758, 16
      %v1067 = vpack.i.b16 %v1066, %v1066
      %v1069 = vlaneseq
      %v1070 = vshrl.u32 %v1069, 7
      %v1071 = vsub.s32 1, %v1070
      %v1072 = vrot.slane %v1067, %v1071
      %v1073 = vshrl.u32 %v759, 16
      %v1074 = vpack.i.b16 %v1073, %v1073
      %v1076 = vlaneseq
      %v1077 = vshrl.u32 %v1076, 7
      %v1078 = vsub.s32 1, %v1077
      %v1079 = vrot.slane %v1074, %v1078
      %v1080 = vshrl.u32 %v760, 16
      %v1081 = vpack.i.b16 %v1080, %v1080
      %v1083 = vlaneseq
      %v1084 = vshrl.u32 %v1083, 7
      %v1085 = vsub.s32 1, %v1084
      %v1086 = vrot.slane %v1081, %v1085
      %v1087 = vshrl.u32 %v761, 16
      %v1088 = vpack.i.b16 %v1087, %v1087
      %v1090 = vlaneseq
      %v1091 = vshrl.u32 %v1090, 7
      %v1092 = vsub.s32 1, %v1091
      %v1093 = vrot.slane %v1088, %v1092
      %v1094 = vshrl.u32 %v762, 16
      %v1095 = vpack.i.b16 %v1094, %v1094
      %v1097 = vlaneseq
      %v1098 = vshrl.u32 %v1097, 7
      %v1099 = vsub.s32 1, %v1098
      %v1100 = vrot.slane %v1095, %v1099
      %v1117 = vcombine.low %v995, %v1002
      %v1118 = vcombine.low %v1009, %v1016
      %v1120 = vunpack.c.l.s4 1983009808
      %v1121 = vunpack.c.0.s8 %v1120
      %v1122 = vlaneseq
      %v1123 = vshrl.u32 %v1122, 7
      %v1124 = vsub.s32 %v1121, %v1123
      %v1125 = vrot.slane %v1117, %v1124
      %v1127 = vunpack.c.l.s4 1983009808
      %v1128 = vunpack.c.0.s8 %v1127
      %v1129 = vlaneseq
      %v1130 = vshrl.u32 %v1129, 7
      %v1131 = vsub.s32 %v1128, %v1130
      %v1132 = vrot.slane %v1118, %v1131
      %v1133 = vcombine.low %v1125, %v1132
      %v1134 = vcombine.low %v1023, %v1030
      %v1135 = vcombine.low %v1037, %v1044
      %v1137 = vunpack.c.l.s4 1983009808
      %v1138 = vunpack.c.0.s8 %v1137
      %v1139 = vlaneseq
      %v1140 = vshrl.u32 %v1139, 7
      %v1141 = vsub.s32 %v1138, %v1140
      %v1142 = vrot.slane %v1134, %v1141
      %v1144 = vunpack.c.l.s4 1983009808
      %v1145 = vunpack.c.0.s8 %v1144
      %v1146 = vlaneseq
      %v1147 = vshrl.u32 %v1146, 7
      %v1148 = vsub.s32 %v1145, %v1147
      %v1149 = vrot.slane %v1135, %v1148
      %v1150 = vcombine.low %v1142, %v1149
      %v1151 = vcombine.low %v1051, %v1058
      %v1152 = vcombine.low %v1065, %v1072
      %v1154 = vunpack.c.l.s4 1983009808
      %v1155 = vunpack.c.0.s8 %v1154
      %v1156 = vlaneseq
      %v1157 = vshrl.u32 %v1156, 7
      %v1158 = vsub.s32 %v1155, %v1157
      %v1159 = vrot.slane %v1151, %v1158
      %v1161 = vunpack.c.l.s4 1983009808
      %v1162 = vunpack.c.0.s8 %v1161
      %v1163 = vlaneseq
      %v1164 = vshrl.u32 %v1163, 7
      %v1165 = vsub.s32 %v1162, %v1164
      %v1166 = vrot.slane %v1152, %v1165
      %v1167 = vcombine.low %v1159, %v1166
      %v1168 = vcombine.low %v1079, %v1086
      %v1169 = vcombine.low %v1093, %v1100
      %v1171 = vunpack.c.l.s4 1983009808
      %v1172 = vunpack.c.0.s8 %v1171
      %v1173 = vlaneseq
      %v1174 = vshrl.u32 %v1173, 7
      %v1175 = vsub.s32 %v1172, %v1174
      %v1176 = vrot.slane %v1168, %v1175
      %v1178 = vunpack.c.l.s4 1983009808
      %v1179 = vunpack.c.0.s8 %v1178
      %v1180 = vlaneseq
      %v1181 = vshrl.u32 %v1180, 7
      %v1182 = vsub.s32 %v1179, %v1181
      %v1183 = vrot.slane %v1169, %v1182
      %v1184 = vcombine.low %v1176, %v1183
      %1185 = vrot.lane.b32.xlu0 %v1133, 127
      %v1186 = vpop.permute.xlu0 %1185
      %1187 = vrot.lane.b32.xlu0 %v1150, 127
      %v1188 = vpop.permute.xlu0 %1187
      %1189 = vrot.lane.b32.xlu0 %v1167, 127
      %v1190 = vpop.permute.xlu0 %1189
      %1191 = vrot.lane.b32.xlu0 %v1184, 127
      %v1192 = vpop.permute.xlu0 %1191
      %v1193 = vrot.slane %v1186, 6
      %v1194 = vrot.slane %v1188, 6
      %v1195 = vrot.slane %v1190, 6
      %v1196 = vrot.slane %v1192, 6
      %vm1197 = vcmask 1039360
      %v1198 = vsel %vm1197, %v1193, %v1186
      %v1199 = vsel %vm472, %v1193, %v1194
      %v1200 = vsel %vm1197, %v1199, %v1188
      %v1201 = vsel %vm472, %v1194, %v1195
      %v1202 = vsel %vm1197, %v1201, %v1190
      %v1203 = vsel %vm472, %v1195, %v1196
      %v1204 = vsel %vm1197, %v1203, %v1192
      %v1210 = vmul.bf16 %v209, %v1198
      %v1211 = vmul.bf16 %v210, %v1200
      %v1212 = vmul.bf16 %v211, %v1202
      %v1213 = vmul.bf16 %v212, %v1204
      %v1214 = vmul.bf16 %v213, %v1196
      %v1215 = vld [vmem:[#allocation2 + $0x2] sm:$0xff]
      %v1216 = vld [vmem:[#allocation2 + $0xa] sm:$0xff]
      %v1217 = vld [vmem:[#allocation2 + $0x12] sm:$0xff]
      %v1218 = vld [vmem:[#allocation2 + $0x1a] sm:$0xff]
      %v1219 = vld [vmem:[#allocation2 + $0x22] sm:$0x3]
      %v1220 = vld [vmem:[%s2] sm:$0x44]
      %v1221 = vld [vmem:[%s2 + $0x8] sm:$0x44]
      %v1222 = vld [vmem:[%s2 + $0x10] sm:$0x44]
      %v1223 = vld [vmem:[%s2 + $0x18] sm:$0x44]
      %v1224 = vld [vmem:[%s2 + $0x20] sm:$0x44]
      %v1225 = vld [vmem:[%s2 + $0x28] sm:$0x44]
      %v1226 = vld [vmem:[%s2 + $0x30] sm:$0x44]
      %v1227 = vld [vmem:[%s2 + $0x38] sm:$0x44]
      %v1236 = vunpack.c.l.b16 %v1220
      %v1237 = vunpack.c.h.b16 %v1220
      %v1238 = vunpack.c.l.b16 %v1221
      %v1239 = vunpack.c.h.b16 %v1221
      %v1240 = vunpack.c.l.b16 %v1222
      %v1241 = vunpack.c.h.b16 %v1222
      %v1242 = vunpack.c.l.b16 %v1223
      %v1243 = vunpack.c.h.b16 %v1223
      %v1244 = vunpack.c.l.b16 %v1224
      %v1245 = vunpack.c.h.b16 %v1224
      %v1246 = vunpack.c.l.b16 %v1225
      %v1247 = vunpack.c.h.b16 %v1225
      %v1248 = vunpack.c.l.b16 %v1226
      %v1249 = vunpack.c.h.b16 %v1226
      %v1250 = vunpack.c.l.b16 %v1227
      %v1251 = vunpack.c.h.b16 %v1227
      %v1252 = vpack.c.b16 %v1236, %v1236
      %v1253 = vpack.c.b16 %v1237, %v1237
      %v1254 = vpack.c.b16 %v1238, %v1238
      %v1255 = vpack.c.b16 %v1239, %v1239
      %v1256 = vpack.c.b16 %v1240, %v1240
      %v1257 = vpack.c.b16 %v1241, %v1241
      %v1258 = vpack.c.b16 %v1242, %v1242
      %v1259 = vpack.c.b16 %v1243, %v1243
      %v1260 = vpack.c.b16 %v1244, %v1244
      %v1261 = vpack.c.b16 %v1245, %v1245
      %v1262 = vpack.c.b16 %v1246, %v1246
      %v1263 = vpack.c.b16 %v1247, %v1247
      %v1264 = vpack.c.b16 %v1248, %v1248
      %v1265 = vpack.c.b16 %v1249, %v1249
      %v1266 = vpack.c.b16 %v1250, %v1250
      %v1267 = vpack.c.b16 %v1251, %v1251
      %v1269 = vshrl.u32 %v1252, 16
      %v1270 = vpack.i.b16 %v1269, %v1269
      %v1272 = vlaneseq
      %v1273 = vshrl.u32 %v1272, 7
      %v1274 = vsub.s32 2, %v1273
      %v1275 = vrot.slane %v1270, %v1274
      %v1277 = vshrl.u32 %v1253, 16
      %v1278 = vpack.i.b16 %v1277, %v1277
      %v1280 = vlaneseq
      %v1281 = vshrl.u32 %v1280, 7
      %v1282 = vsub.s32 2, %v1281
      %v1283 = vrot.slane %v1278, %v1282
      %v1285 = vshrl.u32 %v1254, 16
      %v1286 = vpack.i.b16 %v1285, %v1285
      %v1288 = vlaneseq
      %v1289 = vshrl.u32 %v1288, 7
      %v1290 = vsub.s32 2, %v1289
      %v1291 = vrot.slane %v1286, %v1290
      %v1293 = vshrl.u32 %v1255, 16
      %v1294 = vpack.i.b16 %v1293, %v1293
      %v1296 = vlaneseq
      %v1297 = vshrl.u32 %v1296, 7
      %v1298 = vsub.s32 2, %v1297
      %v1299 = vrot.slane %v1294, %v1298
      %v1301 = vshrl.u32 %v1256, 16
      %v1302 = vpack.i.b16 %v1301, %v1301
      %v1304 = vlaneseq
      %v1305 = vshrl.u32 %v1304, 7
      %v1306 = vsub.s32 2, %v1305
      %v1307 = vrot.slane %v1302, %v1306
      %v1309 = vshrl.u32 %v1257, 16
      %v1310 = vpack.i.b16 %v1309, %v1309
      %v1312 = vlaneseq
      %v1313 = vshrl.u32 %v1312, 7
      %v1314 = vsub.s32 2, %v1313
      %v1315 = vrot.slane %v1310, %v1314
      %v1317 = vshrl.u32 %v1258, 16
      %v1318 = vpack.i.b16 %v1317, %v1317
      %v1320 = vlaneseq
      %v1321 = vshrl.u32 %v1320, 7
      %v1322 = vsub.s32 2, %v1321
      %v1323 = vrot.slane %v1318, %v1322
      %v1325 = vshrl.u32 %v1259, 16
      %v1326 = vpack.i.b16 %v1325, %v1325
      %v1328 = vlaneseq
      %v1329 = vshrl.u32 %v1328, 7
      %v1330 = vsub.s32 2, %v1329
      %v1331 = vrot.slane %v1326, %v1330
      %v1333 = vshrl.u32 %v1260, 16
      %v1334 = vpack.i.b16 %v1333, %v1333
      %v1336 = vlaneseq
      %v1337 = vshrl.u32 %v1336, 7
      %v1338 = vsub.s32 2, %v1337
      %v1339 = vrot.slane %v1334, %v1338
      %v1341 = vshrl.u32 %v1261, 16
      %v1342 = vpack.i.b16 %v1341, %v1341
      %v1344 = vlaneseq
      %v1345 = vshrl.u32 %v1344, 7
      %v1346 = vsub.s32 2, %v1345
      %v1347 = vrot.slane %v1342, %v1346
      %v1349 = vshrl.u32 %v1262, 16
      %v1350 = vpack.i.b16 %v1349, %v1349
      %v1352 = vlaneseq
      %v1353 = vshrl.u32 %v1352, 7
      %v1354 = vsub.s32 2, %v1353
      %v1355 = vrot.slane %v1350, %v1354
      %v1357 = vshrl.u32 %v1263, 16
      %v1358 = vpack.i.b16 %v1357, %v1357
      %v1360 = vlaneseq
      %v1361 = vshrl.u32 %v1360, 7
      %v1362 = vsub.s32 2, %v1361
      %v1363 = vrot.slane %v1358, %v1362
      %v1365 = vshrl.u32 %v1264, 16
      %v1366 = vpack.i.b16 %v1365, %v1365
      %v1368 = vlaneseq
      %v1369 = vshrl.u32 %v1368, 7
      %v1370 = vsub.s32 2, %v1369
      %v1371 = vrot.slane %v1366, %v1370
      %v1373 = vshrl.u32 %v1265, 16
      %v1374 = vpack.i.b16 %v1373, %v1373
      %v1376 = vlaneseq
      %v1377 = vshrl.u32 %v1376, 7
      %v1378 = vsub.s32 2, %v1377
      %v1379 = vrot.slane %v1374, %v1378
      %v1381 = vshrl.u32 %v1266, 16
      %v1382 = vpack.i.b16 %v1381, %v1381
      %v1384 = vlaneseq
      %v1385 = vshrl.u32 %v1384, 7
      %v1386 = vsub.s32 2, %v1385
      %v1387 = vrot.slane %v1382, %v1386
      %v1389 = vshrl.u32 %v1267, 16
      %v1390 = vpack.i.b16 %v1389, %v1389
      %v1392 = vlaneseq
      %v1393 = vshrl.u32 %v1392, 7
      %v1394 = vsub.s32 2, %v1393
      %v1395 = vrot.slane %v1390, %v1394
      %v1412 = vcombine.low %v1275, %v1283
      %v1413 = vcombine.low %v1291, %v1299
      %v1415 = vunpack.c.l.s4 1983009808
      %v1416 = vunpack.c.0.s8 %v1415
      %v1417 = vlaneseq
      %v1418 = vshrl.u32 %v1417, 7
      %v1419 = vsub.s32 %v1416, %v1418
      %v1420 = vrot.slane %v1412, %v1419
      %v1422 = vunpack.c.l.s4 1983009808
      %v1423 = vunpack.c.0.s8 %v1422
      %v1424 = vlaneseq
      %v1425 = vshrl.u32 %v1424, 7
      %v1426 = vsub.s32 %v1423, %v1425
      %v1427 = vrot.slane %v1413, %v1426
      %v1428 = vcombine.low %v1420, %v1427
      %v1429 = vcombine.low %v1307, %v1315
      %v1430 = vcombine.low %v1323, %v1331
      %v1432 = vunpack.c.l.s4 1983009808
      %v1433 = vunpack.c.0.s8 %v1432
      %v1434 = vlaneseq
      %v1435 = vshrl.u32 %v1434, 7
      %v1436 = vsub.s32 %v1433, %v1435
      %v1437 = vrot.slane %v1429, %v1436
      %v1439 = vunpack.c.l.s4 1983009808
      %v1440 = vunpack.c.0.s8 %v1439
      %v1441 = vlaneseq
      %v1442 = vshrl.u32 %v1441, 7
      %v1443 = vsub.s32 %v1440, %v1442
      %v1444 = vrot.slane %v1430, %v1443
      %v1445 = vcombine.low %v1437, %v1444
      %v1446 = vcombine.low %v1339, %v1347
      %v1447 = vcombine.low %v1355, %v1363
      %v1449 = vunpack.c.l.s4 1983009808
      %v1450 = vunpack.c.0.s8 %v1449
      %v1451 = vlaneseq
      %v1452 = vshrl.u32 %v1451, 7
      %v1453 = vsub.s32 %v1450, %v1452
      %v1454 = vrot.slane %v1446, %v1453
      %v1456 = vunpack.c.l.s4 1983009808
      %v1457 = vunpack.c.0.s8 %v1456
      %v1458 = vlaneseq
      %v1459 = vshrl.u32 %v1458, 7
      %v1460 = vsub.s32 %v1457, %v1459
      %v1461 = vrot.slane %v1447, %v1460
      %v1462 = vcombine.low %v1454, %v1461
      %v1463 = vcombine.low %v1371, %v1379
      %v1464 = vcombine.low %v1387, %v1395
      %v1466 = vunpack.c.l.s4 1983009808
      %v1467 = vunpack.c.0.s8 %v1466
      %v1468 = vlaneseq
      %v1469 = vshrl.u32 %v1468, 7
      %v1470 = vsub.s32 %v1467, %v1469
      %v1471 = vrot.slane %v1463, %v1470
      %v1473 = vunpack.c.l.s4 1983009808
      %v1474 = vunpack.c.0.s8 %v1473
      %v1475 = vlaneseq
      %v1476 = vshrl.u32 %v1475, 7
      %v1477 = vsub.s32 %v1474, %v1476
      %v1478 = vrot.slane %v1464, %v1477
      %v1479 = vcombine.low %v1471, %v1478
      %1480 = vrot.lane.b32.xlu0 %v1428, 1
      %v1481 = vpop.permute.xlu0 %1480
      %1482 = vrot.lane.b32.xlu0 %v1445, 1
      %v1483 = vpop.permute.xlu0 %1482
      %1484 = vrot.lane.b32.xlu0 %v1462, 1
      %v1485 = vpop.permute.xlu0 %1484
      %1486 = vrot.lane.b32.xlu0 %v1479, 1
      %v1487 = vpop.permute.xlu0 %1486
      %v1488 = vrot.slane %v1481, 6
      %v1489 = vrot.slane %v1483, 6
      %v1490 = vrot.slane %v1485, 6
      %v1491 = vrot.slane %v1487, 6
      %vm1492 = vcmask 7168
      %v1493 = vsel %vm1492, %v1488, %v1481
      %v1494 = vsel %vm472, %v1488, %v1489
      %v1495 = vsel %vm1492, %v1494, %v1483
      %v1496 = vsel %vm472, %v1489, %v1490
      %v1497 = vsel %vm1492, %v1496, %v1485
      %v1498 = vsel %vm472, %v1490, %v1491
      %v1499 = vsel %vm1492, %v1498, %v1487
      %v1505 = vmul.bf16 %v1215, %v1493
      %v1506 = vmul.bf16 %v1216, %v1495
      %v1507 = vmul.bf16 %v1217, %v1497
      %v1508 = vmul.bf16 %v1218, %v1499
      %v1509 = vmul.bf16 %v1219, %v1491
      %v1510 = vld [vmem:[%s2] sm:$0x88]
      %v1511 = vld [vmem:[%s2 + $0x8] sm:$0x88]
      %v1512 = vld [vmem:[%s2 + $0x10] sm:$0x88]
      %v1513 = vld [vmem:[%s2 + $0x18] sm:$0x88]
      %v1514 = vld [vmem:[%s2 + $0x20] sm:$0x88]
      %v1515 = vld [vmem:[%s2 + $0x28] sm:$0x88]
      %v1516 = vld [vmem:[%s2 + $0x30] sm:$0x88]
      %v1517 = vld [vmem:[%s2 + $0x38] sm:$0x88]
      %v1526 = vunpack.c.l.b16 %v1510
      %v1527 = vunpack.c.h.b16 %v1510
      %v1528 = vunpack.c.l.b16 %v1511
      %v1529 = vunpack.c.h.b16 %v1511
      %v1530 = vunpack.c.l.b16 %v1512
      %v1531 = vunpack.c.h.b16 %v1512
      %v1532 = vunpack.c.l.b16 %v1513
      %v1533 = vunpack.c.h.b16 %v1513
      %v1534 = vunpack.c.l.b16 %v1514
      %v1535 = vunpack.c.h.b16 %v1514
      %v1536 = vunpack.c.l.b16 %v1515
      %v1537 = vunpack.c.h.b16 %v1515
      %v1538 = vunpack.c.l.b16 %v1516
      %v1539 = vunpack.c.h.b16 %v1516
      %v1540 = vunpack.c.l.b16 %v1517
      %v1541 = vunpack.c.h.b16 %v1517
      %v1542 = vpack.c.b16 %v1526, %v1526
      %v1543 = vpack.c.b16 %v1527, %v1527
      %v1544 = vpack.c.b16 %v1528, %v1528
      %v1545 = vpack.c.b16 %v1529, %v1529
      %v1546 = vpack.c.b16 %v1530, %v1530
      %v1547 = vpack.c.b16 %v1531, %v1531
      %v1548 = vpack.c.b16 %v1532, %v1532
      %v1549 = vpack.c.b16 %v1533, %v1533
      %v1550 = vpack.c.b16 %v1534, %v1534
      %v1551 = vpack.c.b16 %v1535, %v1535
      %v1552 = vpack.c.b16 %v1536, %v1536
      %v1553 = vpack.c.b16 %v1537, %v1537
      %v1554 = vpack.c.b16 %v1538, %v1538
      %v1555 = vpack.c.b16 %v1539, %v1539
      %v1556 = vpack.c.b16 %v1540, %v1540
      %v1557 = vpack.c.b16 %v1541, %v1541
      %v1559 = vpack.i.b16 %v1542, %v1542
      %v1561 = vlaneseq
      %v1562 = vshrl.u32 %v1561, 7
      %v1563 = vsub.s32 3, %v1562
      %v1564 = vrot.slane %v1559, %v1563
      %v1566 = vpack.i.b16 %v1543, %v1543
      %v1568 = vlaneseq
      %v1569 = vshrl.u32 %v1568, 7
      %v1570 = vsub.s32 3, %v1569
      %v1571 = vrot.slane %v1566, %v1570
      %v1573 = vpack.i.b16 %v1544, %v1544
      %v1575 = vlaneseq
      %v1576 = vshrl.u32 %v1575, 7
      %v1577 = vsub.s32 3, %v1576
      %v1578 = vrot.slane %v1573, %v1577
      %v1580 = vpack.i.b16 %v1545, %v1545
      %v1582 = vlaneseq
      %v1583 = vshrl.u32 %v1582, 7
      %v1584 = vsub.s32 3, %v1583
      %v1585 = vrot.slane %v1580, %v1584
      %v1587 = vpack.i.b16 %v1546, %v1546
      %v1589 = vlaneseq
      %v1590 = vshrl.u32 %v1589, 7
      %v1591 = vsub.s32 3, %v1590
      %v1592 = vrot.slane %v1587, %v1591
      %v1594 = vpack.i.b16 %v1547, %v1547
      %v1596 = vlaneseq
      %v1597 = vshrl.u32 %v1596, 7
      %v1598 = vsub.s32 3, %v1597
      %v1599 = vrot.slane %v1594, %v1598
      %v1601 = vpack.i.b16 %v1548, %v1548
      %v1603 = vlaneseq
      %v1604 = vshrl.u32 %v1603, 7
      %v1605 = vsub.s32 3, %v1604
      %v1606 = vrot.slane %v1601, %v1605
      %v1608 = vpack.i.b16 %v1549, %v1549
      %v1610 = vlaneseq
      %v1611 = vshrl.u32 %v1610, 7
      %v1612 = vsub.s32 3, %v1611
      %v1613 = vrot.slane %v1608, %v1612
      %v1615 = vpack.i.b16 %v1550, %v1550
      %v1617 = vlaneseq
      %v1618 = vshrl.u32 %v1617, 7
      %v1619 = vsub.s32 3, %v1618
      %v1620 = vrot.slane %v1615, %v1619
      %v1622 = vpack.i.b16 %v1551, %v1551
      %v1624 = vlaneseq
      %v1625 = vshrl.u32 %v1624, 7
      %v1626 = vsub.s32 3, %v1625
      %v1627 = vrot.slane %v1622, %v1626
      %v1629 = vpack.i.b16 %v1552, %v1552
      %v1631 = vlaneseq
      %v1632 = vshrl.u32 %v1631, 7
      %v1633 = vsub.s32 3, %v1632
      %v1634 = vrot.slane %v1629, %v1633
      %v1636 = vpack.i.b16 %v1553, %v1553
      %v1638 = vlaneseq
      %v1639 = vshrl.u32 %v1638, 7
      %v1640 = vsub.s32 3, %v1639
      %v1641 = vrot.slane %v1636, %v1640
      %v1643 = vpack.i.b16 %v1554, %v1554
      %v1645 = vlaneseq
      %v1646 = vshrl.u32 %v1645, 7
      %v1647 = vsub.s32 3, %v1646
      %v1648 = vrot.slane %v1643, %v1647
      %v1650 = vpack.i.b16 %v1555, %v1555
      %v1652 = vlaneseq
      %v1653 = vshrl.u32 %v1652, 7
      %v1654 = vsub.s32 3, %v1653
      %v1655 = vrot.slane %v1650, %v1654
      %v1657 = vpack.i.b16 %v1556, %v1556
      %v1659 = vlaneseq
      %v1660 = vshrl.u32 %v1659, 7
      %v1661 = vsub.s32 3, %v1660
      %v1662 = vrot.slane %v1657, %v1661
      %v1664 = vpack.i.b16 %v1557, %v1557
      %v1666 = vlaneseq
      %v1667 = vshrl.u32 %v1666, 7
      %v1668 = vsub.s32 3, %v1667
      %v1669 = vrot.slane %v1664, %v1668
      %v1686 = vcombine.low %v1564, %v1571
      %v1687 = vcombine.low %v1578, %v1585
      %v1689 = vunpack.c.l.s4 1983009808
      %v1690 = vunpack.c.0.s8 %v1689
      %v1691 = vlaneseq
      %v1692 = vshrl.u32 %v1691, 7
      %v1693 = vsub.s32 %v1690, %v1692
      %v1694 = vrot.slane %v1686, %v1693
      %v1696 = vunpack.c.l.s4 1983009808
      %v1697 = vunpack.c.0.s8 %v1696
      %v1698 = vlaneseq
      %v1699 = vshrl.u32 %v1698, 7
      %v1700 = vsub.s32 %v1697, %v1699
      %v1701 = vrot.slane %v1687, %v1700
      %v1702 = vcombine.low %v1694, %v1701
      %v1703 = vcombine.low %v1592, %v1599
      %v1704 = vcombine.low %v1606, %v1613
      %v1706 = vunpack.c.l.s4 1983009808
      %v1707 = vunpack.c.0.s8 %v1706
      %v1708 = vlaneseq
      %v1709 = vshrl.u32 %v1708, 7
      %v1710 = vsub.s32 %v1707, %v1709
      %v1711 = vrot.slane %v1703, %v1710
      %v1713 = vunpack.c.l.s4 1983009808
      %v1714 = vunpack.c.0.s8 %v1713
      %v1715 = vlaneseq
      %v1716 = vshrl.u32 %v1715, 7
      %v1717 = vsub.s32 %v1714, %v1716
      %v1718 = vrot.slane %v1704, %v1717
      %v1719 = vcombine.low %v1711, %v1718
      %v1720 = vcombine.low %v1620, %v1627
      %v1721 = vcombine.low %v1634, %v1641
      %v1723 = vunpack.c.l.s4 1983009808
      %v1724 = vunpack.c.0.s8 %v1723
      %v1725 = vlaneseq
      %v1726 = vshrl.u32 %v1725, 7
      %v1727 = vsub.s32 %v1724, %v1726
      %v1728 = vrot.slane %v1720, %v1727
      %v1730 = vunpack.c.l.s4 1983009808
      %v1731 = vunpack.c.0.s8 %v1730
      %v1732 = vlaneseq
      %v1733 = vshrl.u32 %v1732, 7
      %v1734 = vsub.s32 %v1731, %v1733
      %v1735 = vrot.slane %v1721, %v1734
      %v1736 = vcombine.low %v1728, %v1735
      %v1737 = vcombine.low %v1648, %v1655
      %v1738 = vcombine.low %v1662, %v1669
      %v1740 = vunpack.c.l.s4 1983009808
      %v1741 = vunpack.c.0.s8 %v1740
      %v1742 = vlaneseq
      %v1743 = vshrl.u32 %v1742, 7
      %v1744 = vsub.s32 %v1741, %v1743
      %v1745 = vrot.slane %v1737, %v1744
      %v1747 = vunpack.c.l.s4 1983009808
      %v1748 = vunpack.c.0.s8 %v1747
      %v1749 = vlaneseq
      %v1750 = vshrl.u32 %v1749, 7
      %v1751 = vsub.s32 %v1748, %v1750
      %v1752 = vrot.slane %v1738, %v1751
      %v1753 = vcombine.low %v1745, %v1752
      %1754 = vrot.lane.b32.xlu0 %v1702, 15
      %v1755 = vpop.permute.xlu0 %1754
      %1756 = vrot.lane.b32.xlu0 %v1719, 15
      %v1757 = vpop.permute.xlu0 %1756
      %1758 = vrot.lane.b32.xlu0 %v1736, 15
      %v1759 = vpop.permute.xlu0 %1758
      %1760 = vrot.lane.b32.xlu0 %v1753, 15
      %v1761 = vpop.permute.xlu0 %1760
      %v1762 = vrot.slane %v1755, 6
      %v1763 = vrot.slane %v1757, 6
      %v1764 = vrot.slane %v1759, 6
      %v1765 = vrot.slane %v1761, 6
      %vm1766 = vcmask 121856
      %v1767 = vsel %vm1766, %v1762, %v1755
      %v1768 = vsel %vm472, %v1762, %v1763
      %v1769 = vsel %vm1766, %v1768, %v1757
      %v1770 = vsel %vm472, %v1763, %v1764
      %v1771 = vsel %vm1766, %v1770, %v1759
      %v1772 = vsel %vm472, %v1764, %v1765
      %v1773 = vsel %vm1766, %v1772, %v1761
      %v1779 = vmul.bf16 %v1215, %v1767
      %v1780 = vmul.bf16 %v1216, %v1769
      %v1781 = vmul.bf16 %v1217, %v1771
      %v1782 = vmul.bf16 %v1218, %v1773
      %v1783 = vmul.bf16 %v1219, %v1765
      %v1784 = vshrl.u32 %v1542, 16
      %v1785 = vpack.i.b16 %v1784, %v1784
      %v1787 = vlaneseq
      %v1788 = vshrl.u32 %v1787, 7
      %v1789 = vsub.s32 3, %v1788
      %v1790 = vrot.slane %v1785, %v1789
      %v1791 = vshrl.u32 %v1543, 16
      %v1792 = vpack.i.b16 %v1791, %v1791
      %v1794 = vlaneseq
      %v1795 = vshrl.u32 %v1794, 7
      %v1796 = vsub.s32 3, %v1795
      %v1797 = vrot.slane %v1792, %v1796
      %v1798 = vshrl.u32 %v1544, 16
      %v1799 = vpack.i.b16 %v1798, %v1798
      %v1801 = vlaneseq
      %v1802 = vshrl.u32 %v1801, 7
      %v1803 = vsub.s32 3, %v1802
      %v1804 = vrot.slane %v1799, %v1803
      %v1805 = vshrl.u32 %v1545, 16
      %v1806 = vpack.i.b16 %v1805, %v1805
      %v1808 = vlaneseq
      %v1809 = vshrl.u32 %v1808, 7
      %v1810 = vsub.s32 3, %v1809
      %v1811 = vrot.slane %v1806, %v1810
      %v1812 = vshrl.u32 %v1546, 16
      %v1813 = vpack.i.b16 %v1812, %v1812
      %v1815 = vlaneseq
      %v1816 = vshrl.u32 %v1815, 7
      %v1817 = vsub.s32 3, %v1816
      %v1818 = vrot.slane %v1813, %v1817
      %v1819 = vshrl.u32 %v1547, 16
      %v1820 = vpack.i.b16 %v1819, %v1819
      %v1822 = vlaneseq
      %v1823 = vshrl.u32 %v1822, 7
      %v1824 = vsub.s32 3, %v1823
      %v1825 = vrot.slane %v1820, %v1824
      %v1826 = vshrl.u32 %v1548, 16
      %v1827 = vpack.i.b16 %v1826, %v1826
      %v1829 = vlaneseq
      %v1830 = vshrl.u32 %v1829, 7
      %v1831 = vsub.s32 3, %v1830
      %v1832 = vrot.slane %v1827, %v1831
      %v1833 = vshrl.u32 %v1549, 16
      %v1834 = vpack.i.b16 %v1833, %v1833
      %v1836 = vlaneseq
      %v1837 = vshrl.u32 %v1836, 7
      %v1838 = vsub.s32 3, %v1837
      %v1839 = vrot.slane %v1834, %v1838
      %v1840 = vshrl.u32 %v1550, 16
      %v1841 = vpack.i.b16 %v1840, %v1840
      %v1843 = vlaneseq
      %v1844 = vshrl.u32 %v1843, 7
      %v1845 = vsub.s32 3, %v1844
      %v1846 = vrot.slane %v1841, %v1845
      %v1847 = vshrl.u32 %v1551, 16
      %v1848 = vpack.i.b16 %v1847, %v1847
      %v1850 = vlaneseq
      %v1851 = vshrl.u32 %v1850, 7
      %v1852 = vsub.s32 3, %v1851
      %v1853 = vrot.slane %v1848, %v1852
      %v1854 = vshrl.u32 %v1552, 16
      %v1855 = vpack.i.b16 %v1854, %v1854
      %v1857 = vlaneseq
      %v1858 = vshrl.u32 %v1857, 7
      %v1859 = vsub.s32 3, %v1858
      %v1860 = vrot.slane %v1855, %v1859
      %v1861 = vshrl.u32 %v1553, 16
      %v1862 = vpack.i.b16 %v1861, %v1861
      %v1864 = vlaneseq
      %v1865 = vshrl.u32 %v1864, 7
      %v1866 = vsub.s32 3, %v1865
      %v1867 = vrot.slane %v1862, %v1866
      %v1868 = vshrl.u32 %v1554, 16
      %v1869 = vpack.i.b16 %v1868, %v1868
      %v1871 = vlaneseq
      %v1872 = vshrl.u32 %v1871, 7
      %v1873 = vsub.s32 3, %v1872
      %v1874 = vrot.slane %v1869, %v1873
      %v1875 = vshrl.u32 %v1555, 16
      %v1876 = vpack.i.b16 %v1875, %v1875
      %v1878 = vlaneseq
      %v1879 = vshrl.u32 %v1878, 7
      %v1880 = vsub.s32 3, %v1879
      %v1881 = vrot.slane %v1876, %v1880
      %v1882 = vshrl.u32 %v1556, 16
      %v1883 = vpack.i.b16 %v1882, %v1882
      %v1885 = vlaneseq
      %v1886 = vshrl.u32 %v1885, 7
      %v1887 = vsub.s32 3, %v1886
      %v1888 = vrot.slane %v1883, %v1887
      %v1889 = vshrl.u32 %v1557, 16
      %v1890 = vpack.i.b16 %v1889, %v1889
      %v1892 = vlaneseq
      %v1893 = vshrl.u32 %v1892, 7
      %v1894 = vsub.s32 3, %v1893
      %v1895 = vrot.slane %v1890, %v1894
      %v1912 = vcombine.low %v1790, %v1797
      %v1913 = vcombine.low %v1804, %v1811
      %v1915 = vunpack.c.l.s4 1983009808
      %v1916 = vunpack.c.0.s8 %v1915
      %v1917 = vlaneseq
      %v1918 = vshrl.u32 %v1917, 7
      %v1919 = vsub.s32 %v1916, %v1918
      %v1920 = vrot.slane %v1912, %v1919
      %v1922 = vunpack.c.l.s4 1983009808
      %v1923 = vunpack.c.0.s8 %v1922
      %v1924 = vlaneseq
      %v1925 = vshrl.u32 %v1924, 7
      %v1926 = vsub.s32 %v1923, %v1925
      %v1927 = vrot.slane %v1913, %v1926
      %v1928 = vcombine.low %v1920, %v1927
      %v1929 = vcombine.low %v1818, %v1825
      %v1930 = vcombine.low %v1832, %v1839
      %v1932 = vunpack.c.l.s4 1983009808
      %v1933 = vunpack.c.0.s8 %v1932
      %v1934 = vlaneseq
      %v1935 = vshrl.u32 %v1934, 7
      %v1936 = vsub.s32 %v1933, %v1935
      %v1937 = vrot.slane %v1929, %v1936
      %v1939 = vunpack.c.l.s4 1983009808
      %v1940 = vunpack.c.0.s8 %v1939
      %v1941 = vlaneseq
      %v1942 = vshrl.u32 %v1941, 7
      %v1943 = vsub.s32 %v1940, %v1942
      %v1944 = vrot.slane %v1930, %v1943
      %v1945 = vcombine.low %v1937, %v1944
      %v1946 = vcombine.low %v1846, %v1853
      %v1947 = vcombine.low %v1860, %v1867
      %v1949 = vunpack.c.l.s4 1983009808
      %v1950 = vunpack.c.0.s8 %v1949
      %v1951 = vlaneseq
      %v1952 = vshrl.u32 %v1951, 7
      %v1953 = vsub.s32 %v1950, %v1952
      %v1954 = vrot.slane %v1946, %v1953
      %v1956 = vunpack.c.l.s4 1983009808
      %v1957 = vunpack.c.0.s8 %v1956
      %v1958 = vlaneseq
      %v1959 = vshrl.u32 %v1958, 7
      %v1960 = vsub.s32 %v1957, %v1959
      %v1961 = vrot.slane %v1947, %v1960
      %v1962 = vcombine.low %v1954, %v1961
      %v1963 = vcombine.low %v1874, %v1881
      %v1964 = vcombine.low %v1888, %v1895
      %v1966 = vunpack.c.l.s4 1983009808
      %v1967 = vunpack.c.0.s8 %v1966
      %v1968 = vlaneseq
      %v1969 = vshrl.u32 %v1968, 7
      %v1970 = vsub.s32 %v1967, %v1969
      %v1971 = vrot.slane %v1963, %v1970
      %v1973 = vunpack.c.l.s4 1983009808
      %v1974 = vunpack.c.0.s8 %v1973
      %v1975 = vlaneseq
      %v1976 = vshrl.u32 %v1975, 7
      %v1977 = vsub.s32 %v1974, %v1976
      %v1978 = vrot.slane %v1964, %v1977
      %v1979 = vcombine.low %v1971, %v1978
      %1980 = vrot.lane.b32.xlu0 %v1928, 16
      %v1981 = vpop.permute.xlu0 %1980
      %1982 = vrot.lane.b32.xlu0 %v1945, 16
      %v1983 = vpop.permute.xlu0 %1982
      %1984 = vrot.lane.b32.xlu0 %v1962, 16
      %v1985 = vpop.permute.xlu0 %1984
      %1986 = vrot.lane.b32.xlu0 %v1979, 16
      %v1987 = vpop.permute.xlu0 %1986
      %v1988 = vrot.slane %v1981, 6
      %v1989 = vrot.slane %v1983, 6
      %v1990 = vrot.slane %v1985, 6
      %v1991 = vrot.slane %v1987, 6
      %vm1992 = vcmask 130048
      %v1993 = vsel %vm1992, %v1988, %v1981
      %v1994 = vsel %vm472, %v1988, %v1989
      %v1995 = vsel %vm1992, %v1994, %v1983
      %v1996 = vsel %vm472, %v1989, %v1990
      %v1997 = vsel %vm1992, %v1996, %v1985
      %v1998 = vsel %vm472, %v1990, %v1991
      %v1999 = vsel %vm1992, %v1998, %v1987
      %v2005 = vmul.bf16 %v1215, %v1993
      %v2006 = vmul.bf16 %v1216, %v1995
      %v2007 = vmul.bf16 %v1217, %v1997
      %v2008 = vmul.bf16 %v1218, %v1999
      %v2009 = vmul.bf16 %v1219, %v1991
      %v2010 = vld [vmem:[%s2 + $0x40] sm:$0x11]
      %v2011 = vld [vmem:[%s2 + $0x48] sm:$0x11]
      %v2012 = vld [vmem:[%s2 + $0x50] sm:$0x11]
      %v2013 = vld [vmem:[%s2 + $0x58] sm:$0x11]
      %v2014 = vld [vmem:[%s2 + $0x60] sm:$0x11]
      %v2015 = vld [vmem:[%s2 + $0x68] sm:$0x11]
      %v2016 = vld [vmem:[%s2 + $0x70] sm:$0x11]
      %v2017 = vld [vmem:[%s2 + $0x78] sm:$0x11]
      %v2026 = vunpack.c.l.b16 %v2010
      %v2027 = vunpack.c.h.b16 %v2010
      %v2028 = vunpack.c.l.b16 %v2011
      %v2029 = vunpack.c.h.b16 %v2011
      %v2030 = vunpack.c.l.b16 %v2012
      %v2031 = vunpack.c.h.b16 %v2012
      %v2032 = vunpack.c.l.b16 %v2013
      %v2033 = vunpack.c.h.b16 %v2013
      %v2034 = vunpack.c.l.b16 %v2014
      %v2035 = vunpack.c.h.b16 %v2014
      %v2036 = vunpack.c.l.b16 %v2015
      %v2037 = vunpack.c.h.b16 %v2015
      %v2038 = vunpack.c.l.b16 %v2016
      %v2039 = vunpack.c.h.b16 %v2016
      %v2040 = vunpack.c.l.b16 %v2017
      %v2041 = vunpack.c.h.b16 %v2017
      %v2042 = vpack.c.b16 %v2026, %v2026
      %v2043 = vpack.c.b16 %v2027, %v2027
      %v2044 = vpack.c.b16 %v2028, %v2028
      %v2045 = vpack.c.b16 %v2029, %v2029
      %v2046 = vpack.c.b16 %v2030, %v2030
      %v2047 = vpack.c.b16 %v2031, %v2031
      %v2048 = vpack.c.b16 %v2032, %v2032
      %v2049 = vpack.c.b16 %v2033, %v2033
      %v2050 = vpack.c.b16 %v2034, %v2034
      %v2051 = vpack.c.b16 %v2035, %v2035
      %v2052 = vpack.c.b16 %v2036, %v2036
      %v2053 = vpack.c.b16 %v2037, %v2037
      %v2054 = vpack.c.b16 %v2038, %v2038
      %v2055 = vpack.c.b16 %v2039, %v2039
      %v2056 = vpack.c.b16 %v2040, %v2040
      %v2057 = vpack.c.b16 %v2041, %v2041
      %v2059 = vpack.i.b16 %v2042, %v2042
      %v2061 = vlaneseq
      %v2062 = vshrl.u32 %v2061, 7
      %v2063 = vsub.s32 0, %v2062
      %v2064 = vrot.slane %v2059, %v2063
      %v2066 = vpack.i.b16 %v2043, %v2043
      %v2068 = vlaneseq
      %v2069 = vshrl.u32 %v2068, 7
      %v2070 = vsub.s32 0, %v2069
      %v2071 = vrot.slane %v2066, %v2070
      %v2073 = vpack.i.b16 %v2044, %v2044
      %v2075 = vlaneseq
      %v2076 = vshrl.u32 %v2075, 7
      %v2077 = vsub.s32 0, %v2076
      %v2078 = vrot.slane %v2073, %v2077
      %v2080 = vpack.i.b16 %v2045, %v2045
      %v2082 = vlaneseq
      %v2083 = vshrl.u32 %v2082, 7
      %v2084 = vsub.s32 0, %v2083
      %v2085 = vrot.slane %v2080, %v2084
      %v2087 = vpack.i.b16 %v2046, %v2046
      %v2089 = vlaneseq
      %v2090 = vshrl.u32 %v2089, 7
      %v2091 = vsub.s32 0, %v2090
      %v2092 = vrot.slane %v2087, %v2091
      %v2094 = vpack.i.b16 %v2047, %v2047
      %v2096 = vlaneseq
      %v2097 = vshrl.u32 %v2096, 7
      %v2098 = vsub.s32 0, %v2097
      %v2099 = vrot.slane %v2094, %v2098
      %v2101 = vpack.i.b16 %v2048, %v2048
      %v2103 = vlaneseq
      %v2104 = vshrl.u32 %v2103, 7
      %v2105 = vsub.s32 0, %v2104
      %v2106 = vrot.slane %v2101, %v2105
      %v2108 = vpack.i.b16 %v2049, %v2049
      %v2110 = vlaneseq
      %v2111 = vshrl.u32 %v2110, 7
      %v2112 = vsub.s32 0, %v2111
      %v2113 = vrot.slane %v2108, %v2112
      %v2115 = vpack.i.b16 %v2050, %v2050
      %v2117 = vlaneseq
      %v2118 = vshrl.u32 %v2117, 7
      %v2119 = vsub.s32 0, %v2118
      %v2120 = vrot.slane %v2115, %v2119
      %v2122 = vpack.i.b16 %v2051, %v2051
      %v2124 = vlaneseq
      %v2125 = vshrl.u32 %v2124, 7
      %v2126 = vsub.s32 0, %v2125
      %v2127 = vrot.slane %v2122, %v2126
      %v2129 = vpack.i.b16 %v2052, %v2052
      %v2131 = vlaneseq
      %v2132 = vshrl.u32 %v2131, 7
      %v2133 = vsub.s32 0, %v2132
      %v2134 = vrot.slane %v2129, %v2133
      %v2136 = vpack.i.b16 %v2053, %v2053
      %v2138 = vlaneseq
      %v2139 = vshrl.u32 %v2138, 7
      %v2140 = vsub.s32 0, %v2139
      %v2141 = vrot.slane %v2136, %v2140
      %v2143 = vpack.i.b16 %v2054, %v2054
      %v2145 = vlaneseq
      %v2146 = vshrl.u32 %v2145, 7
      %v2147 = vsub.s32 0, %v2146
      %v2148 = vrot.slane %v2143, %v2147
      %v2150 = vpack.i.b16 %v2055, %v2055
      %v2152 = vlaneseq
      %v2153 = vshrl.u32 %v2152, 7
      %v2154 = vsub.s32 0, %v2153
      %v2155 = vrot.slane %v2150, %v2154
      %v2157 = vpack.i.b16 %v2056, %v2056
      %v2159 = vlaneseq
      %v2160 = vshrl.u32 %v2159, 7
      %v2161 = vsub.s32 0, %v2160
      %v2162 = vrot.slane %v2157, %v2161
      %v2164 = vpack.i.b16 %v2057, %v2057
      %v2166 = vlaneseq
      %v2167 = vshrl.u32 %v2166, 7
      %v2168 = vsub.s32 0, %v2167
      %v2169 = vrot.slane %v2164, %v2168
      %v2186 = vcombine.low %v2064, %v2071
      %v2187 = vcombine.low %v2078, %v2085
      %v2189 = vunpack.c.l.s4 1983009808
      %v2190 = vunpack.c.0.s8 %v2189
      %v2191 = vlaneseq
      %v2192 = vshrl.u32 %v2191, 7
      %v2193 = vsub.s32 %v2190, %v2192
      %v2194 = vrot.slane %v2186, %v2193
      %v2196 = vunpack.c.l.s4 1983009808
      %v2197 = vunpack.c.0.s8 %v2196
      %v2198 = vlaneseq
      %v2199 = vshrl.u32 %v2198, 7
      %v2200 = vsub.s32 %v2197, %v2199
      %v2201 = vrot.slane %v2187, %v2200
      %v2202 = vcombine.low %v2194, %v2201
      %v2203 = vcombine.low %v2092, %v2099
      %v2204 = vcombine.low %v2106, %v2113
      %v2206 = vunpack.c.l.s4 1983009808
      %v2207 = vunpack.c.0.s8 %v2206
      %v2208 = vlaneseq
      %v2209 = vshrl.u32 %v2208, 7
      %v2210 = vsub.s32 %v2207, %v2209
      %v2211 = vrot.slane %v2203, %v2210
      %v2213 = vunpack.c.l.s4 1983009808
      %v2214 = vunpack.c.0.s8 %v2213
      %v2215 = vlaneseq
      %v2216 = vshrl.u32 %v2215, 7
      %v2217 = vsub.s32 %v2214, %v2216
      %v2218 = vrot.slane %v2204, %v2217
      %v2219 = vcombine.low %v2211, %v2218
      %v2220 = vcombine.low %v2120, %v2127
      %v2221 = vcombine.low %v2134, %v2141
      %v2223 = vunpack.c.l.s4 1983009808
      %v2224 = vunpack.c.0.s8 %v2223
      %v2225 = vlaneseq
      %v2226 = vshrl.u32 %v2225, 7
      %v2227 = vsub.s32 %v2224, %v2226
      %v2228 = vrot.slane %v2220, %v2227
      %v2230 = vunpack.c.l.s4 1983009808
      %v2231 = vunpack.c.0.s8 %v2230
      %v2232 = vlaneseq
      %v2233 = vshrl.u32 %v2232, 7
      %v2234 = vsub.s32 %v2231, %v2233
      %v2235 = vrot.slane %v2221, %v2234
      %v2236 = vcombine.low %v2228, %v2235
      %v2237 = vcombine.low %v2148, %v2155
      %v2238 = vcombine.low %v2162, %v2169
      %v2240 = vunpack.c.l.s4 1983009808
      %v2241 = vunpack.c.0.s8 %v2240
      %v2242 = vlaneseq
      %v2243 = vshrl.u32 %v2242, 7
      %v2244 = vsub.s32 %v2241, %v2243
      %v2245 = vrot.slane %v2237, %v2244
      %v2247 = vunpack.c.l.s4 1983009808
      %v2248 = vunpack.c.0.s8 %v2247
      %v2249 = vlaneseq
      %v2250 = vshrl.u32 %v2249, 7
      %v2251 = vsub.s32 %v2248, %v2250
      %v2252 = vrot.slane %v2238, %v2251
      %v2253 = vcombine.low %v2245, %v2252
      %2254 = vrot.lane.b32.xlu0 %v2202, 17
      %v2255 = vpop.permute.xlu0 %2254
      %2256 = vrot.lane.b32.xlu0 %v2219, 17
      %v2257 = vpop.permute.xlu0 %2256
      %2258 = vrot.lane.b32.xlu0 %v2236, 17
      %v2259 = vpop.permute.xlu0 %2258
      %2260 = vrot.lane.b32.xlu0 %v2253, 17
      %v2261 = vpop.permute.xlu0 %2260
      %v2262 = vrot.slane %v2255, 6
      %v2263 = vrot.slane %v2257, 6
      %v2264 = vrot.slane %v2259, 6
      %v2265 = vrot.slane %v2261, 6
      %vm2266 = vcmask 138240
      %v2267 = vsel %vm2266, %v2262, %v2255
      %v2268 = vsel %vm472, %v2262, %v2263
      %v2269 = vsel %vm2266, %v2268, %v2257
      %v2270 = vsel %vm472, %v2263, %v2264
      %v2271 = vsel %vm2266, %v2270, %v2259
      %v2272 = vsel %vm472, %v2264, %v2265
      %v2273 = vsel %vm2266, %v2272, %v2261
      %v2279 = vmul.bf16 %v1215, %v2267
      %v2280 = vmul.bf16 %v1216, %v2269
      %v2281 = vmul.bf16 %v1217, %v2271
      %v2282 = vmul.bf16 %v1218, %v2273
      %v2283 = vmul.bf16 %v1219, %v2265
      %v2284 = vld [vmem:[#allocation2 + $0x4] sm:$0xff]
      %v2285 = vld [vmem:[#allocation2 + $0xc] sm:$0xff]
      %v2286 = vld [vmem:[#allocation2 + $0x14] sm:$0xff]
      %v2287 = vld [vmem:[#allocation2 + $0x1c] sm:$0xff]
      %v2288 = vld [vmem:[#allocation2 + $0x24] sm:$0x3]
      %v2289 = vmul.bf16 %v2284, %v471
      %v2290 = vmul.bf16 %v2285, %v474
      %v2291 = vmul.bf16 %v2286, %v476
      %v2292 = vmul.bf16 %v2287, %v478
      %v2293 = vmul.bf16 %v2288, %v469
      %v2294 = vmul.bf16 %v2284, %v698
      %v2295 = vmul.bf16 %v2285, %v700
      %v2296 = vmul.bf16 %v2286, %v702
      %v2297 = vmul.bf16 %v2287, %v704
      %v2298 = vmul.bf16 %v2288, %v696
      %v2299 = vmul.bf16 %v2284, %v972
      %v2300 = vmul.bf16 %v2285, %v974
      %v2301 = vmul.bf16 %v2286, %v976
      %v2302 = vmul.bf16 %v2287, %v978
      %v2303 = vmul.bf16 %v2288, %v970
      %v2304 = vmul.bf16 %v2284, %v1198
      %v2305 = vmul.bf16 %v2285, %v1200
      %v2306 = vmul.bf16 %v2286, %v1202
      %v2307 = vmul.bf16 %v2287, %v1204
      %v2308 = vmul.bf16 %v2288, %v1196
      %v2309 = vld [vmem:[#allocation2 + $0x6] sm:$0xff]
      %v2310 = vld [vmem:[#allocation2 + $0xe] sm:$0xff]
      %v2311 = vld [vmem:[#allocation2 + $0x16] sm:$0xff]
      %v2312 = vld [vmem:[#allocation2 + $0x1e] sm:$0xff]
      %v2313 = vld [vmem:[#allocation2 + $0x26] sm:$0x3]
      %v2314 = vmul.bf16 %v2309, %v1493
      %v2315 = vmul.bf16 %v2310, %v1495
      %v2316 = vmul.bf16 %v2311, %v1497
      %v2317 = vmul.bf16 %v2312, %v1499
      %v2318 = vmul.bf16 %v2313, %v1491
      %v2319 = vmul.bf16 %v2309, %v1767
      %v2320 = vmul.bf16 %v2310, %v1769
      %v2321 = vmul.bf16 %v2311, %v1771
      %v2322 = vmul.bf16 %v2312, %v1773
      %v2323 = vmul.bf16 %v2313, %v1765
      %v2324 = vmul.bf16 %v2309, %v1993
      %v2325 = vmul.bf16 %v2310, %v1995
      %v2326 = vmul.bf16 %v2311, %v1997
      %v2327 = vmul.bf16 %v2312, %v1999
      %v2328 = vmul.bf16 %v2313, %v1991
      %v2329 = vmul.bf16 %v2309, %v2267
      %v2330 = vmul.bf16 %v2310, %v2269
      %v2331 = vmul.bf16 %v2311, %v2271
      %v2332 = vmul.bf16 %v2312, %v2273
      %v2333 = vmul.bf16 %v2313, %v2265
      %v2334 = vld [vmem:[#allocation2 + $0x20] sm:$0xff]
      %v2335 = vld [vmem:[#allocation2 + $0x28] sm:$0x3]
      %v2336 = vmul.bf16 %v210, %v471
      %v2337 = vmul.bf16 %v211, %v474
      %v2338 = vmul.bf16 %v212, %v476
      %v2339 = vmul.bf16 %v2334, %v478
      %v2340 = vmul.bf16 %v2335, %v469
      %v2341 = vmul.bf16 %v210, %v698
      %v2342 = vmul.bf16 %v211, %v700
      %v2343 = vmul.bf16 %v212, %v702
      %v2344 = vmul.bf16 %v2334, %v704
      %v2345 = vmul.bf16 %v2335, %v696
      %v2346 = vmul.bf16 %v210, %v972
      %v2347 = vmul.bf16 %v211, %v974
      %v2348 = vmul.bf16 %v212, %v976
      %v2349 = vmul.bf16 %v2334, %v978
      %v2350 = vmul.bf16 %v2335, %v970
      %v2351 = vmul.bf16 %v210, %v1198
      %v2352 = vmul.bf16 %v211, %v1200
      %v2353 = vmul.bf16 %v212, %v1202
      %v2354 = vmul.bf16 %v2334, %v1204
      %v2355 = vmul.bf16 %v2335, %v1196
      %v2356 = vld [vmem:[#allocation2 + $0x22] sm:$0xff]
      %v2357 = vld [vmem:[#allocation2 + $0xa] sm:$0xff]
      %v2358 = vld [vmem:[#allocation2 + $0x12] sm:$0xff]
      %v2359 = vld [vmem:[#allocation2 + $0x1a] sm:$0xff]
      %v2360 = vld [vmem:[#allocation2 + $0x22] sm:$0xff]
      %v2361 = vld [vmem:[#allocation2 + $0x2a] sm:$0x3]
      %v2362 = vmul.bf16 %v2357, %v1493
      %v2363 = vmul.bf16 %v2358, %v1495
      %v2364 = vmul.bf16 %v2359, %v1497
      %v2365 = vmul.bf16 %v2360, %v1499
      %v2366 = vmul.bf16 %v2361, %v1491
      %v2367 = vmul.bf16 %v2357, %v1767
      %v2368 = vmul.bf16 %v2358, %v1769
      %v2369 = vmul.bf16 %v2359, %v1771
      %v2370 = vmul.bf16 %v2360, %v1773
      %v2371 = vmul.bf16 %v2361, %v1765
      %v2372 = vmul.bf16 %v2357, %v1993
      %v2373 = vmul.bf16 %v2358, %v1995
      %v2374 = vmul.bf16 %v2359, %v1997
      %v2375 = vmul.bf16 %v2360, %v1999
      %v2376 = vmul.bf16 %v2361, %v1991
      %v2377 = vmul.bf16 %v2357, %v2267
      %v2378 = vmul.bf16 %v2358, %v2269
      %v2379 = vmul.bf16 %v2359, %v2271
      %v2380 = vmul.bf16 %v2360, %v2273
      %v2381 = vmul.bf16 %v2361, %v2265
      %v2387 = vcombine.high %v484, %v484
      %v2389 = vunpack.c.l.s4 1983009808
      %v2390 = vunpack.c.0.s8 %v2389
      %v2391 = vlaneseq
      %v2392 = vshrl.u32 %v2391, 7
      %v2393 = vsub.s32 %v2390, %v2392
      %v2394 = vrot.slane %v484, %v2393
      %v2396 = vunpack.c.l.s4 1983009808
      %v2397 = vunpack.c.0.s8 %v2396
      %v2398 = vlaneseq
      %v2399 = vshrl.u32 %v2398, 7
      %v2400 = vsub.s32 %v2397, %v2399
      %v2401 = vrot.slane %v2387, %v2400
      %v2402 = vcombine.high %v2394, %v2394
      %v2403 = vcombine.high %v2401, %v2401
      %v2404 = vcombine.high %v485, %v485
      %v2406 = vunpack.c.l.s4 1983009808
      %v2407 = vunpack.c.0.s8 %v2406
      %v2408 = vlaneseq
      %v2409 = vshrl.u32 %v2408, 7
      %v2410 = vsub.s32 %v2407, %v2409
      %v2411 = vrot.slane %v485, %v2410
      %v2413 = vunpack.c.l.s4 1983009808
      %v2414 = vunpack.c.0.s8 %v2413
      %v2415 = vlaneseq
      %v2416 = vshrl.u32 %v2415, 7
      %v2417 = vsub.s32 %v2414, %v2416
      %v2418 = vrot.slane %v2404, %v2417
      %v2419 = vcombine.high %v2411, %v2411
      %v2420 = vcombine.high %v2418, %v2418
      %v2421 = vcombine.high %v486, %v486
      %v2423 = vunpack.c.l.s4 1983009808
      %v2424 = vunpack.c.0.s8 %v2423
      %v2425 = vlaneseq
      %v2426 = vshrl.u32 %v2425, 7
      %v2427 = vsub.s32 %v2424, %v2426
      %v2428 = vrot.slane %v486, %v2427
      %v2430 = vunpack.c.l.s4 1983009808
      %v2431 = vunpack.c.0.s8 %v2430
      %v2432 = vlaneseq
      %v2433 = vshrl.u32 %v2432, 7
      %v2434 = vsub.s32 %v2431, %v2433
      %v2435 = vrot.slane %v2421, %v2434
      %v2436 = vcombine.high %v2428, %v2428
      %v2437 = vcombine.high %v2435, %v2435
      %v2438 = vcombine.high %v487, %v487
      %v2440 = vunpack.c.l.s4 1983009808
      %v2441 = vunpack.c.0.s8 %v2440
      %v2442 = vlaneseq
      %v2443 = vshrl.u32 %v2442, 7
      %v2444 = vsub.s32 %v2441, %v2443
      %v2445 = vrot.slane %v487, %v2444
      %v2447 = vunpack.c.l.s4 1983009808
      %v2448 = vunpack.c.0.s8 %v2447
      %v2449 = vlaneseq
      %v2450 = vshrl.u32 %v2449, 7
      %v2451 = vsub.s32 %v2448, %v2450
      %v2452 = vrot.slane %v2438, %v2451
      %v2453 = vcombine.high %v2445, %v2445
      %v2454 = vcombine.high %v2452, %v2452
      %v2456 = vunpack.c.l.s4 1983009808
      %v2457 = vunpack.c.0.s8 %v2456
      %v2458 = vlaneseq
      %v2459 = vshrl.u32 %v2458, 7
      %v2460 = vsub.s32 %v2457, %v2459
      %v2461 = vrot.slane %v488, %v2460
      %v2467 = vcombine.low %v710, %v710
      %v2469 = vunpack.c.l.s4 1983009808
      %v2470 = vunpack.c.0.s8 %v2469
      %v2471 = vlaneseq
      %v2472 = vshrl.u32 %v2471, 7
      %v2473 = vsub.s32 %v2470, %v2472
      %v2474 = vrot.slane %v2467, %v2473
      %v2476 = vunpack.c.l.s4 1983009808
      %v2477 = vunpack.c.0.s8 %v2476
      %v2478 = vlaneseq
      %v2479 = vshrl.u32 %v2478, 7
      %v2480 = vsub.s32 %v2477, %v2479
      %v2481 = vrot.slane %v710, %v2480
      %v2482 = vcombine.high %v2474, %v2474
      %v2483 = vcombine.high %v2481, %v2481
      %v2484 = vcombine.low %v711, %v711
      %v2486 = vunpack.c.l.s4 1983009808
      %v2487 = vunpack.c.0.s8 %v2486
      %v2488 = vlaneseq
      %v2489 = vshrl.u32 %v2488, 7
      %v2490 = vsub.s32 %v2487, %v2489
      %v2491 = vrot.slane %v2484, %v2490
      %v2493 = vunpack.c.l.s4 1983009808
      %v2494 = vunpack.c.0.s8 %v2493
      %v2495 = vlaneseq
      %v2496 = vshrl.u32 %v2495, 7
      %v2497 = vsub.s32 %v2494, %v2496
      %v2498 = vrot.slane %v711, %v2497
      %v2499 = vcombine.high %v2491, %v2491
      %v2500 = vcombine.high %v2498, %v2498
      %v2501 = vcombine.low %v712, %v712
      %v2503 = vunpack.c.l.s4 1983009808
      %v2504 = vunpack.c.0.s8 %v2503
      %v2505 = vlaneseq
      %v2506 = vshrl.u32 %v2505, 7
      %v2507 = vsub.s32 %v2504, %v2506
      %v2508 = vrot.slane %v2501, %v2507
      %v2510 = vunpack.c.l.s4 1983009808
      %v2511 = vunpack.c.0.s8 %v2510
      %v2512 = vlaneseq
      %v2513 = vshrl.u32 %v2512, 7
      %v2514 = vsub.s32 %v2511, %v2513
      %v2515 = vrot.slane %v712, %v2514
      %v2516 = vcombine.high %v2508, %v2508
      %v2517 = vcombine.high %v2515, %v2515
      %v2518 = vcombine.low %v713, %v713
      %v2520 = vunpack.c.l.s4 1983009808
      %v2521 = vunpack.c.0.s8 %v2520
      %v2522 = vlaneseq
      %v2523 = vshrl.u32 %v2522, 7
      %v2524 = vsub.s32 %v2521, %v2523
      %v2525 = vrot.slane %v2518, %v2524
      %v2527 = vunpack.c.l.s4 1983009808
      %v2528 = vunpack.c.0.s8 %v2527
      %v2529 = vlaneseq
      %v2530 = vshrl.u32 %v2529, 7
      %v2531 = vsub.s32 %v2528, %v2530
      %v2532 = vrot.slane %v713, %v2531
      %v2533 = vcombine.high %v2525, %v2525
      %v2534 = vcombine.high %v2532, %v2532
      %v2535 = vcombine.low %v714, %v714
      %v2537 = vunpack.c.l.s4 1983009808
      %v2538 = vunpack.c.0.s8 %v2537
      %v2539 = vlaneseq
      %v2540 = vshrl.u32 %v2539, 7
      %v2541 = vsub.s32 %v2538, %v2540
      %v2542 = vrot.slane %v2535, %v2541
      %2543 = vrot.lane.b32.xlu0 %v2474, 127
      %v2544 = vpop.permute.xlu0 %2543
      %2545 = vrot.lane.b32.xlu0 %v2482, 127
      %v2546 = vpop.permute.xlu0 %2545
      %2547 = vrot.lane.b32.xlu0 %v2481, 127
      %v2548 = vpop.permute.xlu0 %2547
      %2549 = vrot.lane.b32.xlu0 %v2483, 127
      %v2550 = vpop.permute.xlu0 %2549
      %2551 = vrot.lane.b32.xlu0 %v2491, 127
      %v2552 = vpop.permute.xlu0 %2551
      %2553 = vrot.lane.b32.xlu0 %v2499, 127
      %v2554 = vpop.permute.xlu0 %2553
      %2555 = vrot.lane.b32.xlu0 %v2498, 127
      %v2556 = vpop.permute.xlu0 %2555
      %2557 = vrot.lane.b32.xlu0 %v2500, 127
      %v2558 = vpop.permute.xlu0 %2557
      %2559 = vrot.lane.b32.xlu0 %v2508, 127
      %v2560 = vpop.permute.xlu0 %2559
      %2561 = vrot.lane.b32.xlu0 %v2516, 127
      %v2562 = vpop.permute.xlu0 %2561
      %2563 = vrot.lane.b32.xlu0 %v2515, 127
      %v2564 = vpop.permute.xlu0 %2563
      %2565 = vrot.lane.b32.xlu0 %v2517, 127
      %v2566 = vpop.permute.xlu0 %2565
      %2567 = vrot.lane.b32.xlu0 %v2525, 127
      %v2568 = vpop.permute.xlu0 %2567
      %2569 = vrot.lane.b32.xlu0 %v2533, 127
      %v2570 = vpop.permute.xlu0 %2569
      %2571 = vrot.lane.b32.xlu0 %v2532, 127
      %v2572 = vpop.permute.xlu0 %2571
      %2573 = vrot.lane.b32.xlu0 %v2534, 127
      %v2574 = vpop.permute.xlu0 %2573
      %2575 = vrot.lane.b32.xlu0 %v2542, 127
      %v2576 = vpop.permute.xlu0 %2575
      %v2577 = vsel %vm1197, %v2544, %v2546
      %v2578 = vsel %vm1197, %v2546, %v2548
      %v2579 = vsel %vm1197, %v2548, %v2550
      %v2580 = vsel %vm1197, %v2550, %v2552
      %v2581 = vsel %vm1197, %v2552, %v2554
      %v2582 = vsel %vm1197, %v2554, %v2556
      %v2583 = vsel %vm1197, %v2556, %v2558
      %v2584 = vsel %vm1197, %v2558, %v2560
      %v2585 = vsel %vm1197, %v2560, %v2562
      %v2586 = vsel %vm1197, %v2562, %v2564
      %v2587 = vsel %vm1197, %v2564, %v2566
      %v2588 = vsel %vm1197, %v2566, %v2568
      %v2589 = vsel %vm1197, %v2568, %v2570
      %v2590 = vsel %vm1197, %v2570, %v2572
      %v2591 = vsel %vm1197, %v2572, %v2574
      %v2592 = vsel %vm1197, %v2574, %v2576
      %v2598 = vcombine.high %v984, %v984
      %v2600 = vunpack.c.l.s4 1983009808
      %v2601 = vunpack.c.0.s8 %v2600
      %v2602 = vlaneseq
      %v2603 = vshrl.u32 %v2602, 7
      %v2604 = vsub.s32 %v2601, %v2603
      %v2605 = vrot.slane %v984, %v2604
      %v2607 = vunpack.c.l.s4 1983009808
      %v2608 = vunpack.c.0.s8 %v2607
      %v2609 = vlaneseq
      %v2610 = vshrl.u32 %v2609, 7
      %v2611 = vsub.s32 %v2608, %v2610
      %v2612 = vrot.slane %v2598, %v2611
      %v2613 = vcombine.low %v2605, %v2605
      %v2614 = vcombine.low %v2612, %v2612
      %v2615 = vcombine.high %v985, %v985
      %v2617 = vunpack.c.l.s4 1983009808
      %v2618 = vunpack.c.0.s8 %v2617
      %v2619 = vlaneseq
      %v2620 = vshrl.u32 %v2619, 7
      %v2621 = vsub.s32 %v2618, %v2620
      %v2622 = vrot.slane %v985, %v2621
      %v2624 = vunpack.c.l.s4 1983009808
      %v2625 = vunpack.c.0.s8 %v2624
      %v2626 = vlaneseq
      %v2627 = vshrl.u32 %v2626, 7
      %v2628 = vsub.s32 %v2625, %v2627
      %v2629 = vrot.slane %v2615, %v2628
      %v2630 = vcombine.low %v2622, %v2622
      %v2631 = vcombine.low %v2629, %v2629
      %v2632 = vcombine.high %v986, %v986
      %v2634 = vunpack.c.l.s4 1983009808
      %v2635 = vunpack.c.0.s8 %v2634
      %v2636 = vlaneseq
      %v2637 = vshrl.u32 %v2636, 7
      %v2638 = vsub.s32 %v2635, %v2637
      %v2639 = vrot.slane %v986, %v2638
      %v2641 = vunpack.c.l.s4 1983009808
      %v2642 = vunpack.c.0.s8 %v2641
      %v2643 = vlaneseq
      %v2644 = vshrl.u32 %v2643, 7
      %v2645 = vsub.s32 %v2642, %v2644
      %v2646 = vrot.slane %v2632, %v2645
      %v2647 = vcombine.low %v2639, %v2639
      %v2648 = vcombine.low %v2646, %v2646
      %v2649 = vcombine.high %v987, %v987
      %v2651 = vunpack.c.l.s4 1983009808
      %v2652 = vunpack.c.0.s8 %v2651
      %v2653 = vlaneseq
      %v2654 = vshrl.u32 %v2653, 7
      %v2655 = vsub.s32 %v2652, %v2654
      %v2656 = vrot.slane %v987, %v2655
      %v2658 = vunpack.c.l.s4 1983009808
      %v2659 = vunpack.c.0.s8 %v2658
      %v2660 = vlaneseq
      %v2661 = vshrl.u32 %v2660, 7
      %v2662 = vsub.s32 %v2659, %v2661
      %v2663 = vrot.slane %v2649, %v2662
      %v2664 = vcombine.low %v2656, %v2656
      %v2665 = vcombine.low %v2663, %v2663
      %v2667 = vunpack.c.l.s4 1983009808
      %v2668 = vunpack.c.0.s8 %v2667
      %v2669 = vlaneseq
      %v2670 = vshrl.u32 %v2669, 7
      %v2671 = vsub.s32 %v2668, %v2670
      %v2672 = vrot.slane %v988, %v2671
      %v2673 = vcombine.low %v2672, %v2672
      %2674 = vrot.lane.b32.xlu0 %v2613, 126
      %v2675 = vpop.permute.xlu0 %2674
      %2676 = vrot.lane.b32.xlu0 %v2605, 126
      %v2677 = vpop.permute.xlu0 %2676
      %2678 = vrot.lane.b32.xlu0 %v2614, 126
      %v2679 = vpop.permute.xlu0 %2678
      %2680 = vrot.lane.b32.xlu0 %v2612, 126
      %v2681 = vpop.permute.xlu0 %2680
      %2682 = vrot.lane.b32.xlu0 %v2630, 126
      %v2683 = vpop.permute.xlu0 %2682
      %2684 = vrot.lane.b32.xlu0 %v2622, 126
      %v2685 = vpop.permute.xlu0 %2684
      %2686 = vrot.lane.b32.xlu0 %v2631, 126
      %v2687 = vpop.permute.xlu0 %2686
      %2688 = vrot.lane.b32.xlu0 %v2629, 126
      %v2689 = vpop.permute.xlu0 %2688
      %2690 = vrot.lane.b32.xlu0 %v2647, 126
      %v2691 = vpop.permute.xlu0 %2690
      %2692 = vrot.lane.b32.xlu0 %v2639, 126
      %v2693 = vpop.permute.xlu0 %2692
      %2694 = vrot.lane.b32.xlu0 %v2648, 126
      %v2695 = vpop.permute.xlu0 %2694
      %2696 = vrot.lane.b32.xlu0 %v2646, 126
      %v2697 = vpop.permute.xlu0 %2696
      %2698 = vrot.lane.b32.xlu0 %v2664, 126
      %v2699 = vpop.permute.xlu0 %2698
      %2700 = vrot.lane.b32.xlu0 %v2656, 126
      %v2701 = vpop.permute.xlu0 %2700
      %2702 = vrot.lane.b32.xlu0 %v2665, 126
      %v2703 = vpop.permute.xlu0 %2702
      %2704 = vrot.lane.b32.xlu0 %v2663, 126
      %v2705 = vpop.permute.xlu0 %2704
      %2706 = vrot.lane.b32.xlu0 %v2673, 126
      %v2707 = vpop.permute.xlu0 %2706
      %vm2708 = vcmask 1031168
      %v2709 = vsel %vm2708, %v2675, %v2677
      %v2710 = vsel %vm2708, %v2677, %v2679
      %v2711 = vsel %vm2708, %v2679, %v2681
      %v2712 = vsel %vm2708, %v2681, %v2683
      %v2713 = vsel %vm2708, %v2683, %v2685
      %v2714 = vsel %vm2708, %v2685, %v2687
      %v2715 = vsel %vm2708, %v2687, %v2689
      %v2716 = vsel %vm2708, %v2689, %v2691
      %v2717 = vsel %vm2708, %v2691, %v2693
      %v2718 = vsel %vm2708, %v2693, %v2695
      %v2719 = vsel %vm2708, %v2695, %v2697
      %v2720 = vsel %vm2708, %v2697, %v2699
      %v2721 = vsel %vm2708, %v2699, %v2701
      %v2722 = vsel %vm2708, %v2701, %v2703
      %v2723 = vsel %vm2708, %v2703, %v2705
      %v2724 = vsel %vm2708, %v2705, %v2707
      %v2730 = vcombine.low %v1210, %v1210
      %v2732 = vunpack.c.l.s4 1983009808
      %v2733 = vunpack.c.0.s8 %v2732
      %v2734 = vlaneseq
      %v2735 = vshrl.u32 %v2734, 7
      %v2736 = vsub.s32 %v2733, %v2735
      %v2737 = vrot.slane %v2730, %v2736
      %v2739 = vunpack.c.l.s4 1983009808
      %v2740 = vunpack.c.0.s8 %v2739
      %v2741 = vlaneseq
      %v2742 = vshrl.u32 %v2741, 7
      %v2743 = vsub.s32 %v2740, %v2742
      %v2744 = vrot.slane %v1210, %v2743
      %v2745 = vcombine.low %v2737, %v2737
      %v2746 = vcombine.low %v2744, %v2744
      %v2747 = vcombine.low %v1211, %v1211
      %v2749 = vunpack.c.l.s4 1983009808
      %v2750 = vunpack.c.0.s8 %v2749
      %v2751 = vlaneseq
      %v2752 = vshrl.u32 %v2751, 7
      %v2753 = vsub.s32 %v2750, %v2752
      %v2754 = vrot.slane %v2747, %v2753
      %v2756 = vunpack.c.l.s4 1983009808
      %v2757 = vunpack.c.0.s8 %v2756
      %v2758 = vlaneseq
      %v2759 = vshrl.u32 %v2758, 7
      %v2760 = vsub.s32 %v2757, %v2759
      %v2761 = vrot.slane %v1211, %v2760
      %v2762 = vcombine.low %v2754, %v2754
      %v2763 = vcombine.low %v2761, %v2761
      %v2764 = vcombine.low %v1212, %v1212
      %v2766 = vunpack.c.l.s4 1983009808
      %v2767 = vunpack.c.0.s8 %v2766
      %v2768 = vlaneseq
      %v2769 = vshrl.u32 %v2768, 7
      %v2770 = vsub.s32 %v2767, %v2769
      %v2771 = vrot.slane %v2764, %v2770
      %v2773 = vunpack.c.l.s4 1983009808
      %v2774 = vunpack.c.0.s8 %v2773
      %v2775 = vlaneseq
      %v2776 = vshrl.u32 %v2775, 7
      %v2777 = vsub.s32 %v2774, %v2776
      %v2778 = vrot.slane %v1212, %v2777
      %v2779 = vcombine.low %v2771, %v2771
      %v2780 = vcombine.low %v2778, %v2778
      %v2781 = vcombine.low %v1213, %v1213
      %v2783 = vunpack.c.l.s4 1983009808
      %v2784 = vunpack.c.0.s8 %v2783
      %v2785 = vlaneseq
      %v2786 = vshrl.u32 %v2785, 7
      %v2787 = vsub.s32 %v2784, %v2786
      %v2788 = vrot.slane %v2781, %v2787
      %v2790 = vunpack.c.l.s4 1983009808
      %v2791 = vunpack.c.0.s8 %v2790
      %v2792 = vlaneseq
      %v2793 = vshrl.u32 %v2792, 7
      %v2794 = vsub.s32 %v2791, %v2793
      %v2795 = vrot.slane %v1213, %v2794
      %v2796 = vcombine.low %v2788, %v2788
      %v2797 = vcombine.low %v2795, %v2795
      %v2798 = vcombine.low %v1214, %v1214
      %v2800 = vunpack.c.l.s4 1983009808
      %v2801 = vunpack.c.0.s8 %v2800
      %v2802 = vlaneseq
      %v2803 = vshrl.u32 %v2802, 7
      %v2804 = vsub.s32 %v2801, %v2803
      %v2805 = vrot.slane %v2798, %v2804
      %v2806 = vcombine.low %v2805, %v2805
      %2807 = vrot.lane.b32.xlu0 %v2745, 112
      %v2808 = vpop.permute.xlu0 %2807
      %2809 = vrot.lane.b32.xlu0 %v2737, 112
      %v2810 = vpop.permute.xlu0 %2809
      %2811 = vrot.lane.b32.xlu0 %v2746, 112
      %v2812 = vpop.permute.xlu0 %2811
      %2813 = vrot.lane.b32.xlu0 %v2744, 112
      %v2814 = vpop.permute.xlu0 %2813
      %2815 = vrot.lane.b32.xlu0 %v2762, 112
      %v2816 = vpop.permute.xlu0 %2815
      %2817 = vrot.lane.b32.xlu0 %v2754, 112
      %v2818 = vpop.permute.xlu0 %2817
      %2819 = vrot.lane.b32.xlu0 %v2763, 112
      %v2820 = vpop.permute.xlu0 %2819
      %2821 = vrot.lane.b32.xlu0 %v2761, 112
      %v2822 = vpop.permute.xlu0 %2821
      %2823 = vrot.lane.b32.xlu0 %v2779, 112
      %v2824 = vpop.permute.xlu0 %2823
      %2825 = vrot.lane.b32.xlu0 %v2771, 112
      %v2826 = vpop.permute.xlu0 %2825
      %2827 = vrot.lane.b32.xlu0 %v2780, 112
      %v2828 = vpop.permute.xlu0 %2827
      %2829 = vrot.lane.b32.xlu0 %v2778, 112
      %v2830 = vpop.permute.xlu0 %2829
      %2831 = vrot.lane.b32.xlu0 %v2796, 112
      %v2832 = vpop.permute.xlu0 %2831
      %2833 = vrot.lane.b32.xlu0 %v2788, 112
      %v2834 = vpop.permute.xlu0 %2833
      %2835 = vrot.lane.b32.xlu0 %v2797, 112
      %v2836 = vpop.permute.xlu0 %2835
      %2837 = vrot.lane.b32.xlu0 %v2795, 112
      %v2838 = vpop.permute.xlu0 %2837
      %2839 = vrot.lane.b32.xlu0 %v2806, 112
      %v2840 = vpop.permute.xlu0 %2839
      %v2841 = vsel %vm697, %v2808, %v2810
      %v2842 = vsel %vm697, %v2810, %v2812
      %v2843 = vsel %vm697, %v2812, %v2814
      %v2844 = vsel %vm697, %v2814, %v2816
      %v2845 = vsel %vm697, %v2816, %v2818
      %v2846 = vsel %vm697, %v2818, %v2820
      %v2847 = vsel %vm697, %v2820, %v2822
      %v2848 = vsel %vm697, %v2822, %v2824
      %v2849 = vsel %vm697, %v2824, %v2826
      %v2850 = vsel %vm697, %v2826, %v2828
      %v2851 = vsel %vm697, %v2828, %v2830
      %v2852 = vsel %vm697, %v2830, %v2832
      %v2853 = vsel %vm697, %v2832, %v2834
      %v2854 = vsel %vm697, %v2834, %v2836
      %v2855 = vsel %vm697, %v2836, %v2838
      %v2856 = vsel %vm697, %v2838, %v2840
      %v2861 = vcombine.high %v1215, %v1215
      %v2863 = vunpack.c.l.s4 1983009808
      %v2864 = vunpack.c.0.s8 %v2863
      %v2865 = vlaneseq
      %v2866 = vshrl.u32 %v2865, 7
      %v2867 = vsub.s32 %v2864, %v2866
      %v2868 = vrot.slane %v1215, %v2867
      %v2870 = vunpack.c.l.s4 1983009808
      %v2871 = vunpack.c.0.s8 %v2870
      %v2872 = vlaneseq
      %v2873 = vshrl.u32 %v2872, 7
      %v2874 = vsub.s32 %v2871, %v2873
      %v2875 = vrot.slane %v2861, %v2874
      %v2876 = vcombine.high %v2868, %v2868
      %v2877 = vcombine.high %v2875, %v2875
      %v2878 = vcombine.high %v1216, %v1216
      %v2880 = vunpack.c.l.s4 1983009808
      %v2881 = vunpack.c.0.s8 %v2880
      %v2882 = vlaneseq
      %v2883 = vshrl.u32 %v2882, 7
      %v2884 = vsub.s32 %v2881, %v2883
      %v2885 = vrot.slane %v1216, %v2884
      %v2887 = vunpack.c.l.s4 1983009808
      %v2888 = vunpack.c.0.s8 %v2887
      %v2889 = vlaneseq
      %v2890 = vshrl.u32 %v2889, 7
      %v2891 = vsub.s32 %v2888, %v2890
      %v2892 = vrot.slane %v2878, %v2891
      %v2893 = vcombine.high %v2885, %v2885
      %v2894 = vcombine.high %v2892, %v2892
      %v2895 = vcombine.high %v1217, %v1217
      %v2897 = vunpack.c.l.s4 1983009808
      %v2898 = vunpack.c.0.s8 %v2897
      %v2899 = vlaneseq
      %v2900 = vshrl.u32 %v2899, 7
      %v2901 = vsub.s32 %v2898, %v2900
      %v2902 = vrot.slane %v1217, %v2901
      %v2904 = vunpack.c.l.s4 1983009808
      %v2905 = vunpack.c.0.s8 %v2904
      %v2906 = vlaneseq
      %v2907 = vshrl.u32 %v2906, 7
      %v2908 = vsub.s32 %v2905, %v2907
      %v2909 = vrot.slane %v2895, %v2908
      %v2910 = vcombine.high %v2902, %v2902
      %v2911 = vcombine.high %v2909, %v2909
      %v2912 = vcombine.high %v1218, %v1218
      %v2914 = vunpack.c.l.s4 1983009808
      %v2915 = vunpack.c.0.s8 %v2914
      %v2916 = vlaneseq
      %v2917 = vshrl.u32 %v2916, 7
      %v2918 = vsub.s32 %v2915, %v2917
      %v2919 = vrot.slane %v1218, %v2918
      %v2921 = vunpack.c.l.s4 1983009808
      %v2922 = vunpack.c.0.s8 %v2921
      %v2923 = vlaneseq
      %v2924 = vshrl.u32 %v2923, 7
      %v2925 = vsub.s32 %v2922, %v2924
      %v2926 = vrot.slane %v2912, %v2925
      %v2927 = vcombine.high %v2919, %v2919
      %v2928 = vcombine.high %v2926, %v2926
      %2929 = vrot.lane.b32.xlu0 %v2868, 111
      %v2930 = vpop.permute.xlu0 %2929
      %2931 = vrot.lane.b32.xlu0 %v2876, 111
      %v2932 = vpop.permute.xlu0 %2931
      %2933 = vrot.lane.b32.xlu0 %v2875, 111
      %v2934 = vpop.permute.xlu0 %2933
      %2935 = vrot.lane.b32.xlu0 %v2877, 111
      %v2936 = vpop.permute.xlu0 %2935
      %2937 = vrot.lane.b32.xlu0 %v2885, 111
      %v2938 = vpop.permute.xlu0 %2937
      %2939 = vrot.lane.b32.xlu0 %v2893, 111
      %v2940 = vpop.permute.xlu0 %2939
      %2941 = vrot.lane.b32.xlu0 %v2892, 111
      %v2942 = vpop.permute.xlu0 %2941
      %2943 = vrot.lane.b32.xlu0 %v2894, 111
      %v2944 = vpop.permute.xlu0 %2943
      %2945 = vrot.lane.b32.xlu0 %v2902, 111
      %v2946 = vpop.permute.xlu0 %2945
      %2947 = vrot.lane.b32.xlu0 %v2910, 111
      %v2948 = vpop.permute.xlu0 %2947
      %2949 = vrot.lane.b32.xlu0 %v2909, 111
      %v2950 = vpop.permute.xlu0 %2949
      %2951 = vrot.lane.b32.xlu0 %v2911, 111
      %v2952 = vpop.permute.xlu0 %2951
      %2953 = vrot.lane.b32.xlu0 %v2919, 111
      %v2954 = vpop.permute.xlu0 %2953
      %2955 = vrot.lane.b32.xlu0 %v2927, 111
      %v2956 = vpop.permute.xlu0 %2955
      %2957 = vrot.lane.b32.xlu0 %v2926, 111
      %v2958 = vpop.permute.xlu0 %2957
      %2959 = vrot.lane.b32.xlu0 %v2928, 111
      %v2960 = vpop.permute.xlu0 %2959
      %v2961 = vsel %vm470, %v2930, %v2932
      %v2962 = vsel %vm470, %v2932, %v2934
      %v2963 = vsel %vm470, %v2934, %v2936
      %v2964 = vsel %vm470, %v2936, %v2938
      %v2965 = vsel %vm470, %v2938, %v2940
      %v2966 = vsel %vm470, %v2940, %v2942
      %v2967 = vsel %vm470, %v2942, %v2944
      %v2968 = vsel %vm470, %v2944, %v2946
      %v2969 = vsel %vm470, %v2946, %v2948
      %v2970 = vsel %vm470, %v2948, %v2950
      %v2971 = vsel %vm470, %v2950, %v2952
      %v2972 = vsel %vm470, %v2952, %v2954
      %v2973 = vsel %vm470, %v2954, %v2956
      %v2974 = vsel %vm470, %v2956, %v2958
      %v2975 = vsel %vm470, %v2958, %v2960
      %v2981 = vcombine.low %v1505, %v1505
      %v2983 = vunpack.c.l.s4 1983009808
      %v2984 = vunpack.c.0.s8 %v2983
      %v2985 = vlaneseq
      %v2986 = vshrl.u32 %v2985, 7
      %v2987 = vsub.s32 %v2984, %v2986
      %v2988 = vrot.slane %v2981, %v2987
      %v2990 = vunpack.c.l.s4 1983009808
      %v2991 = vunpack.c.0.s8 %v2990
      %v2992 = vlaneseq
      %v2993 = vshrl.u32 %v2992, 7
      %v2994 = vsub.s32 %v2991, %v2993
      %v2995 = vrot.slane %v1505, %v2994
      %v2996 = vcombine.high %v2988, %v2988
      %v2997 = vcombine.high %v2995, %v2995
      %v2998 = vcombine.low %v1506, %v1506
      %v3000 = vunpack.c.l.s4 1983009808
      %v3001 = vunpack.c.0.s8 %v3000
      %v3002 = vlaneseq
      %v3003 = vshrl.u32 %v3002, 7
      %v3004 = vsub.s32 %v3001, %v3003
      %v3005 = vrot.slane %v2998, %v3004
      %v3007 = vunpack.c.l.s4 1983009808
      %v3008 = vunpack.c.0.s8 %v3007
      %v3009 = vlaneseq
      %v3010 = vshrl.u32 %v3009, 7
      %v3011 = vsub.s32 %v3008, %v3010
      %v3012 = vrot.slane %v1506, %v3011
      %v3013 = vcombine.high %v3005, %v3005
      %v3014 = vcombine.high %v3012, %v3012
      %v3015 = vcombine.low %v1507, %v1507
      %v3017 = vunpack.c.l.s4 1983009808
      %v3018 = vunpack.c.0.s8 %v3017
      %v3019 = vlaneseq
      %v3020 = vshrl.u32 %v3019, 7
      %v3021 = vsub.s32 %v3018, %v3020
      %v3022 = vrot.slane %v3015, %v3021
      %v3024 = vunpack.c.l.s4 1983009808
      %v3025 = vunpack.c.0.s8 %v3024
      %v3026 = vlaneseq
      %v3027 = vshrl.u32 %v3026, 7
      %v3028 = vsub.s32 %v3025, %v3027
      %v3029 = vrot.slane %v1507, %v3028
      %v3030 = vcombine.high %v3022, %v3022
      %v3031 = vcombine.high %v3029, %v3029
      %v3032 = vcombine.low %v1508, %v1508
      %v3034 = vunpack.c.l.s4 1983009808
      %v3035 = vunpack.c.0.s8 %v3034
      %v3036 = vlaneseq
      %v3037 = vshrl.u32 %v3036, 7
      %v3038 = vsub.s32 %v3035, %v3037
      %v3039 = vrot.slane %v3032, %v3038
      %v3041 = vunpack.c.l.s4 1983009808
      %v3042 = vunpack.c.0.s8 %v3041
      %v3043 = vlaneseq
      %v3044 = vshrl.u32 %v3043, 7
      %v3045 = vsub.s32 %v3042, %v3044
      %v3046 = vrot.slane %v1508, %v3045
      %v3047 = vcombine.high %v3039, %v3039
      %v3048 = vcombine.high %v3046, %v3046
      %v3049 = vcombine.low %v1509, %v1509
      %v3051 = vunpack.c.l.s4 1983009808
      %v3052 = vunpack.c.0.s8 %v3051
      %v3053 = vlaneseq
      %v3054 = vshrl.u32 %v3053, 7
      %v3055 = vsub.s32 %v3052, %v3054
      %v3056 = vrot.slane %v3049, %v3055
      %3057 = vrot.lane.b32.xlu0 %v2988, 110
      %v3058 = vpop.permute.xlu0 %3057
      %3059 = vrot.lane.b32.xlu0 %v2996, 110
      %v3060 = vpop.permute.xlu0 %3059
      %3061 = vrot.lane.b32.xlu0 %v2995, 110
      %v3062 = vpop.permute.xlu0 %3061
      %3063 = vrot.lane.b32.xlu0 %v2997, 110
      %v3064 = vpop.permute.xlu0 %3063
      %3065 = vrot.lane.b32.xlu0 %v3005, 110
      %v3066 = vpop.permute.xlu0 %3065
      %3067 = vrot.lane.b32.xlu0 %v3013, 110
      %v3068 = vpop.permute.xlu0 %3067
      %3069 = vrot.lane.b32.xlu0 %v3012, 110
      %v3070 = vpop.permute.xlu0 %3069
      %3071 = vrot.lane.b32.xlu0 %v3014, 110
      %v3072 = vpop.permute.xlu0 %3071
      %3073 = vrot.lane.b32.xlu0 %v3022, 110
      %v3074 = vpop.permute.xlu0 %3073
      %3075 = vrot.lane.b32.xlu0 %v3030, 110
      %v3076 = vpop.permute.xlu0 %3075
      %3077 = vrot.lane.b32.xlu0 %v3029, 110
      %v3078 = vpop.permute.xlu0 %3077
      %3079 = vrot.lane.b32.xlu0 %v3031, 110
      %v3080 = vpop.permute.xlu0 %3079
      %3081 = vrot.lane.b32.xlu0 %v3039, 110
      %v3082 = vpop.permute.xlu0 %3081
      %3083 = vrot.lane.b32.xlu0 %v3047, 110
      %v3084 = vpop.permute.xlu0 %3083
      %3085 = vrot.lane.b32.xlu0 %v3046, 110
      %v3086 = vpop.permute.xlu0 %3085
      %3087 = vrot.lane.b32.xlu0 %v3048, 110
      %v3088 = vpop.permute.xlu0 %3087
      %3089 = vrot.lane.b32.xlu0 %v3056, 110
      %v3090 = vpop.permute.xlu0 %3089
      %vm3091 = vcmask 900096
      %v3092 = vsel %vm3091, %v3058, %v3060
      %v3093 = vsel %vm3091, %v3060, %v3062
      %v3094 = vsel %vm3091, %v3062, %v3064
      %v3095 = vsel %vm3091, %v3064, %v3066
      %v3096 = vsel %vm3091, %v3066, %v3068
      %v3097 = vsel %vm3091, %v3068, %v3070
      %v3098 = vsel %vm3091, %v3070, %v3072
      %v3099 = vsel %vm3091, %v3072, %v3074
      %v3100 = vsel %vm3091, %v3074, %v3076
      %v3101 = vsel %vm3091, %v3076, %v3078
      %v3102 = vsel %vm3091, %v3078, %v3080
      %v3103 = vsel %vm3091, %v3080, %v3082
      %v3104 = vsel %vm3091, %v3082, %v3084
      %v3105 = vsel %vm3091, %v3084, %v3086
      %v3106 = vsel %vm3091, %v3086, %v3088
      %v3107 = vsel %vm3091, %v3088, %v3090
      %v3113 = vcombine.high %v1779, %v1779
      %v3115 = vunpack.c.l.s4 1983009808
      %v3116 = vunpack.c.0.s8 %v3115
      %v3117 = vlaneseq
      %v3118 = vshrl.u32 %v3117, 7
      %v3119 = vsub.s32 %v3116, %v3118
      %v3120 = vrot.slane %v1779, %v3119
      %v3122 = vunpack.c.l.s4 1983009808
      %v3123 = vunpack.c.0.s8 %v3122
      %v3124 = vlaneseq
      %v3125 = vshrl.u32 %v3124, 7
      %v3126 = vsub.s32 %v3123, %v3125
      %v3127 = vrot.slane %v3113, %v3126
      %v3128 = vcombine.low %v3120, %v3120
      %v3129 = vcombine.low %v3127, %v3127
      %v3130 = vcombine.high %v1780, %v1780
      %v3132 = vunpack.c.l.s4 1983009808
      %v3133 = vunpack.c.0.s8 %v3132
      %v3134 = vlaneseq
      %v3135 = vshrl.u32 %v3134, 7
      %v3136 = vsub.s32 %v3133, %v3135
      %v3137 = vrot.slane %v1780, %v3136
      %v3139 = vunpack.c.l.s4 1983009808
      %v3140 = vunpack.c.0.s8 %v3139
      %v3141 = vlaneseq
      %v3142 = vshrl.u32 %v3141, 7
      %v3143 = vsub.s32 %v3140, %v3142
      %v3144 = vrot.slane %v3130, %v3143
      %v3145 = vcombine.low %v3137, %v3137
      %v3146 = vcombine.low %v3144, %v3144
      %v3147 = vcombine.high %v1781, %v1781
      %v3149 = vunpack.c.l.s4 1983009808
      %v3150 = vunpack.c.0.s8 %v3149
      %v3151 = vlaneseq
      %v3152 = vshrl.u32 %v3151, 7
      %v3153 = vsub.s32 %v3150, %v3152
      %v3154 = vrot.slane %v1781, %v3153
      %v3156 = vunpack.c.l.s4 1983009808
      %v3157 = vunpack.c.0.s8 %v3156
      %v3158 = vlaneseq
      %v3159 = vshrl.u32 %v3158, 7
      %v3160 = vsub.s32 %v3157, %v3159
      %v3161 = vrot.slane %v3147, %v3160
      %v3162 = vcombine.low %v3154, %v3154
      %v3163 = vcombine.low %v3161, %v3161
      %v3164 = vcombine.high %v1782, %v1782
      %v3166 = vunpack.c.l.s4 1983009808
      %v3167 = vunpack.c.0.s8 %v3166
      %v3168 = vlaneseq
      %v3169 = vshrl.u32 %v3168, 7
      %v3170 = vsub.s32 %v3167, %v3169
      %v3171 = vrot.slane %v1782, %v3170
      %v3173 = vunpack.c.l.s4 1983009808
      %v3174 = vunpack.c.0.s8 %v3173
      %v3175 = vlaneseq
      %v3176 = vshrl.u32 %v3175, 7
      %v3177 = vsub.s32 %v3174, %v3176
      %v3178 = vrot.slane %v3164, %v3177
      %v3179 = vcombine.low %v3171, %v3171
      %v3180 = vcombine.low %v3178, %v3178
      %v3182 = vunpack.c.l.s4 1983009808
      %v3183 = vunpack.c.0.s8 %v3182
      %v3184 = vlaneseq
      %v3185 = vshrl.u32 %v3184, 7
      %v3186 = vsub.s32 %v3183, %v3185
      %v3187 = vrot.slane %v1783, %v3186
      %v3188 = vcombine.low %v3187, %v3187
      %3189 = vrot.lane.b32.xlu0 %v3128, 96
      %v3190 = vpop.permute.xlu0 %3189
      %3191 = vrot.lane.b32.xlu0 %v3120, 96
      %v3192 = vpop.permute.xlu0 %3191
      %3193 = vrot.lane.b32.xlu0 %v3129, 96
      %v3194 = vpop.permute.xlu0 %3193
      %3195 = vrot.lane.b32.xlu0 %v3127, 96
      %v3196 = vpop.permute.xlu0 %3195
      %3197 = vrot.lane.b32.xlu0 %v3145, 96
      %v3198 = vpop.permute.xlu0 %3197
      %3199 = vrot.lane.b32.xlu0 %v3137, 96
      %v3200 = vpop.permute.xlu0 %3199
      %3201 = vrot.lane.b32.xlu0 %v3146, 96
      %v3202 = vpop.permute.xlu0 %3201
      %3203 = vrot.lane.b32.xlu0 %v3144, 96
      %v3204 = vpop.permute.xlu0 %3203
      %3205 = vrot.lane.b32.xlu0 %v3162, 96
      %v3206 = vpop.permute.xlu0 %3205
      %3207 = vrot.lane.b32.xlu0 %v3154, 96
      %v3208 = vpop.permute.xlu0 %3207
      %3209 = vrot.lane.b32.xlu0 %v3163, 96
      %v3210 = vpop.permute.xlu0 %3209
      %3211 = vrot.lane.b32.xlu0 %v3161, 96
      %v3212 = vpop.permute.xlu0 %3211
      %3213 = vrot.lane.b32.xlu0 %v3179, 96
      %v3214 = vpop.permute.xlu0 %3213
      %3215 = vrot.lane.b32.xlu0 %v3171, 96
      %v3216 = vpop.permute.xlu0 %3215
      %3217 = vrot.lane.b32.xlu0 %v3180, 96
      %v3218 = vpop.permute.xlu0 %3217
      %3219 = vrot.lane.b32.xlu0 %v3178, 96
      %v3220 = vpop.permute.xlu0 %3219
      %3221 = vrot.lane.b32.xlu0 %v3188, 96
      %v3222 = vpop.permute.xlu0 %3221
      %vm3223 = vcmask 785408
      %v3224 = vsel %vm3223, %v3190, %v3192
      %v3225 = vsel %vm3223, %v3192, %v3194
      %v3226 = vsel %vm3223, %v3194, %v3196
      %v3227 = vsel %vm3223, %v3196, %v3198
      %v3228 = vsel %vm3223, %v3198, %v3200
      %v3229 = vsel %vm3223, %v3200, %v3202
      %v3230 = vsel %vm3223, %v3202, %v3204
      %v3231 = vsel %vm3223, %v3204, %v3206
      %v3232 = vsel %vm3223, %v3206, %v3208
      %v3233 = vsel %vm3223, %v3208, %v3210
      %v3234 = vsel %vm3223, %v3210, %v3212
      %v3235 = vsel %vm3223, %v3212, %v3214
      %v3236 = vsel %vm3223, %v3214, %v3216
      %v3237 = vsel %vm3223, %v3216, %v3218
      %v3238 = vsel %vm3223, %v3218, %v3220
      %v3239 = vsel %vm3223, %v3220, %v3222
      %v3245 = vcombine.low %v2005, %v2005
      %v3247 = vunpack.c.l.s4 1983009808
      %v3248 = vunpack.c.0.s8 %v3247
      %v3249 = vlaneseq
      %v3250 = vshrl.u32 %v3249, 7
      %v3251 = vsub.s32 %v3248, %v3250
      %v3252 = vrot.slane %v3245, %v3251
      %v3254 = vunpack.c.l.s4 1983009808
      %v3255 = vunpack.c.0.s8 %v3254
      %v3256 = vlaneseq
      %v3257 = vshrl.u32 %v3256, 7
      %v3258 = vsub.s32 %v3255, %v3257
      %v3259 = vrot.slane %v2005, %v3258
      %v3260 = vcombine.low %v3252, %v3252
      %v3261 = vcombine.low %v3259, %v3259
      %v3262 = vcombine.low %v2006, %v2006
      %v3264 = vunpack.c.l.s4 1983009808
      %v3265 = vunpack.c.0.s8 %v3264
      %v3266 = vlaneseq
      %v3267 = vshrl.u32 %v3266, 7
      %v3268 = vsub.s32 %v3265, %v3267
      %v3269 = vrot.slane %v3262, %v3268
      %v3271 = vunpack.c.l.s4 1983009808
      %v3272 = vunpack.c.0.s8 %v3271
      %v3273 = vlaneseq
      %v3274 = vshrl.u32 %v3273, 7
      %v3275 = vsub.s32 %v3272, %v3274
      %v3276 = vrot.slane %v2006, %v3275
      %v3277 = vcombine.low %v3269, %v3269
      %v3278 = vcombine.low %v3276, %v3276
      %v3279 = vcombine.low %v2007, %v2007
      %v3281 = vunpack.c.l.s4 1983009808
      %v3282 = vunpack.c.0.s8 %v3281
      %v3283 = vlaneseq
      %v3284 = vshrl.u32 %v3283, 7
      %v3285 = vsub.s32 %v3282, %v3284
      %v3286 = vrot.slane %v3279, %v3285
      %v3288 = vunpack.c.l.s4 1983009808
      %v3289 = vunpack.c.0.s8 %v3288
      %v3290 = vlaneseq
      %v3291 = vshrl.u32 %v3290, 7
      %v3292 = vsub.s32 %v3289, %v3291
      %v3293 = vrot.slane %v2007, %v3292
      %v3294 = vcombine.low %v3286, %v3286
      %v3295 = vcombine.low %v3293, %v3293
      %v3296 = vcombine.low %v2008, %v2008
      %v3298 = vunpack.c.l.s4 1983009808
      %v3299 = vunpack.c.0.s8 %v3298
      %v3300 = vlaneseq
      %v3301 = vshrl.u32 %v3300, 7
      %v3302 = vsub.s32 %v3299, %v3301
      %v3303 = vrot.slane %v3296, %v3302
      %v3305 = vunpack.c.l.s4 1983009808
      %v3306 = vunpack.c.0.s8 %v3305
      %v3307 = vlaneseq
      %v3308 = vshrl.u32 %v3307, 7
      %v3309 = vsub.s32 %v3306, %v3308
      %v3310 = vrot.slane %v2008, %v3309
      %v3311 = vcombine.low %v3303, %v3303
      %v3312 = vcombine.low %v3310, %v3310
      %v3313 = vcombine.low %v2009, %v2009
      %v3315 = vunpack.c.l.s4 1983009808
      %v3316 = vunpack.c.0.s8 %v3315
      %v3317 = vlaneseq
      %v3318 = vshrl.u32 %v3317, 7
      %v3319 = vsub.s32 %v3316, %v3318
      %v3320 = vrot.slane %v3313, %v3319
      %v3321 = vcombine.low %v3320, %v3320
      %3322 = vrot.lane.b32.xlu0 %v3260, 95
      %v3323 = vpop.permute.xlu0 %3322
      %3324 = vrot.lane.b32.xlu0 %v3252, 95
      %v3325 = vpop.permute.xlu0 %3324
      %3326 = vrot.lane.b32.xlu0 %v3261, 95
      %v3327 = vpop.permute.xlu0 %3326
      %3328 = vrot.lane.b32.xlu0 %v3259, 95
      %v3329 = vpop.permute.xlu0 %3328
      %3330 = vrot.lane.b32.xlu0 %v3277, 95
      %v3331 = vpop.permute.xlu0 %3330
      %3332 = vrot.lane.b32.xlu0 %v3269, 95
      %v3333 = vpop.permute.xlu0 %3332
      %3334 = vrot.lane.b32.xlu0 %v3278, 95
      %v3335 = vpop.permute.xlu0 %3334
      %3336 = vrot.lane.b32.xlu0 %v3276, 95
      %v3337 = vpop.permute.xlu0 %3336
      %3338 = vrot.lane.b32.xlu0 %v3294, 95
      %v3339 = vpop.permute.xlu0 %3338
      %3340 = vrot.lane.b32.xlu0 %v3286, 95
      %v3341 = vpop.permute.xlu0 %3340
      %3342 = vrot.lane.b32.xlu0 %v3295, 95
      %v3343 = vpop.permute.xlu0 %3342
      %3344 = vrot.lane.b32.xlu0 %v3293, 95
      %v3345 = vpop.permute.xlu0 %3344
      %3346 = vrot.lane.b32.xlu0 %v3311, 95
      %v3347 = vpop.permute.xlu0 %3346
      %3348 = vrot.lane.b32.xlu0 %v3303, 95
      %v3349 = vpop.permute.xlu0 %3348
      %3350 = vrot.lane.b32.xlu0 %v3312, 95
      %v3351 = vpop.permute.xlu0 %3350
      %3352 = vrot.lane.b32.xlu0 %v3310, 95
      %v3353 = vpop.permute.xlu0 %3352
      %3354 = vrot.lane.b32.xlu0 %v3321, 95
      %v3355 = vpop.permute.xlu0 %3354
      %vm3356 = vcmask 777216
      %v3357 = vsel %vm3356, %v3323, %v3325
      %v3358 = vsel %vm3356, %v3325, %v3327
      %v3359 = vsel %vm3356, %v3327, %v3329
      %v3360 = vsel %vm3356, %v3329, %v3331
      %v3361 = vsel %vm3356, %v3331, %v3333
      %v3362 = vsel %vm3356, %v3333, %v3335
      %v3363 = vsel %vm3356, %v3335, %v3337
      %v3364 = vsel %vm3356, %v3337, %v3339
      %v3365 = vsel %vm3356, %v3339, %v3341
      %v3366 = vsel %vm3356, %v3341, %v3343
      %v3367 = vsel %vm3356, %v3343, %v3345
      %v3368 = vsel %vm3356, %v3345, %v3347
      %v3369 = vsel %vm3356, %v3347, %v3349
      %v3370 = vsel %vm3356, %v3349, %v3351
      %v3371 = vsel %vm3356, %v3351, %v3353
      %v3372 = vsel %vm3356, %v3353, %v3355
      %v3378 = vcombine.high %v2279, %v2279
      %v3380 = vunpack.c.l.s4 1983009808
      %v3381 = vunpack.c.0.s8 %v3380
      %v3382 = vlaneseq
      %v3383 = vshrl.u32 %v3382, 7
      %v3384 = vsub.s32 %v3381, %v3383
      %v3385 = vrot.slane %v2279, %v3384
      %v3387 = vunpack.c.l.s4 1983009808
      %v3388 = vunpack.c.0.s8 %v3387
      %v3389 = vlaneseq
      %v3390 = vshrl.u32 %v3389, 7
      %v3391 = vsub.s32 %v3388, %v3390
      %v3392 = vrot.slane %v3378, %v3391
      %v3393 = vcombine.high %v3385, %v3385
      %v3394 = vcombine.high %v3392, %v3392
      %v3395 = vcombine.high %v2280, %v2280
      %v3397 = vunpack.c.l.s4 1983009808
      %v3398 = vunpack.c.0.s8 %v3397
      %v3399 = vlaneseq
      %v3400 = vshrl.u32 %v3399, 7
      %v3401 = vsub.s32 %v3398, %v3400
      %v3402 = vrot.slane %v2280, %v3401
      %v3404 = vunpack.c.l.s4 1983009808
      %v3405 = vunpack.c.0.s8 %v3404
      %v3406 = vlaneseq
      %v3407 = vshrl.u32 %v3406, 7
      %v3408 = vsub.s32 %v3405, %v3407
      %v3409 = vrot.slane %v3395, %v3408
      %v3410 = vcombine.high %v3402, %v3402
      %v3411 = vcombine.high %v3409, %v3409
      %v3412 = vcombine.high %v2281, %v2281
      %v3414 = vunpack.c.l.s4 1983009808
      %v3415 = vunpack.c.0.s8 %v3414
      %v3416 = vlaneseq
      %v3417 = vshrl.u32 %v3416, 7
      %v3418 = vsub.s32 %v3415, %v3417
      %v3419 = vrot.slane %v2281, %v3418
      %v3421 = vunpack.c.l.s4 1983009808
      %v3422 = vunpack.c.0.s8 %v3421
      %v3423 = vlaneseq
      %v3424 = vshrl.u32 %v3423, 7
      %v3425 = vsub.s32 %v3422, %v3424
      %v3426 = vrot.slane %v3412, %v3425
      %v3427 = vcombine.high %v3419, %v3419
      %v3428 = vcombine.high %v3426, %v3426
      %v3429 = vcombine.high %v2282, %v2282
      %v3431 = vunpack.c.l.s4 1983009808
      %v3432 = vunpack.c.0.s8 %v3431
      %v3433 = vlaneseq
      %v3434 = vshrl.u32 %v3433, 7
      %v3435 = vsub.s32 %v3432, %v3434
      %v3436 = vrot.slane %v2282, %v3435
      %v3438 = vunpack.c.l.s4 1983009808
      %v3439 = vunpack.c.0.s8 %v3438
      %v3440 = vlaneseq
      %v3441 = vshrl.u32 %v3440, 7
      %v3442 = vsub.s32 %v3439, %v3441
      %v3443 = vrot.slane %v3429, %v3442
      %v3444 = vcombine.high %v3436, %v3436
      %v3445 = vcombine.high %v3443, %v3443
      %v3447 = vunpack.c.l.s4 1983009808
      %v3448 = vunpack.c.0.s8 %v3447
      %v3449 = vlaneseq
      %v3450 = vshrl.u32 %v3449, 7
      %v3451 = vsub.s32 %v3448, %v3450
      %v3452 = vrot.slane %v2283, %v3451
      %3453 = vrot.lane.b32.xlu0 %v3385, 94
      %v3454 = vpop.permute.xlu0 %3453
      %3455 = vrot.lane.b32.xlu0 %v3393, 94
      %v3456 = vpop.permute.xlu0 %3455
      %3457 = vrot.lane.b32.xlu0 %v3392, 94
      %v3458 = vpop.permute.xlu0 %3457
      %3459 = vrot.lane.b32.xlu0 %v3394, 94
      %v3460 = vpop.permute.xlu0 %3459
      %3461 = vrot.lane.b32.xlu0 %v3402, 94
      %v3462 = vpop.permute.xlu0 %3461
      %3463 = vrot.lane.b32.xlu0 %v3410, 94
      %v3464 = vpop.permute.xlu0 %3463
      %3465 = vrot.lane.b32.xlu0 %v3409, 94
      %v3466 = vpop.permute.xlu0 %3465
      %3467 = vrot.lane.b32.xlu0 %v3411, 94
      %v3468 = vpop.permute.xlu0 %3467
      %3469 = vrot.lane.b32.xlu0 %v3419, 94
      %v3470 = vpop.permute.xlu0 %3469
      %3471 = vrot.lane.b32.xlu0 %v3427, 94
      %v3472 = vpop.permute.xlu0 %3471
      %3473 = vrot.lane.b32.xlu0 %v3426, 94
      %v3474 = vpop.permute.xlu0 %3473
      %3475 = vrot.lane.b32.xlu0 %v3428, 94
      %v3476 = vpop.permute.xlu0 %3475
      %3477 = vrot.lane.b32.xlu0 %v3436, 94
      %v3478 = vpop.permute.xlu0 %3477
      %3479 = vrot.lane.b32.xlu0 %v3444, 94
      %v3480 = vpop.permute.xlu0 %3479
      %3481 = vrot.lane.b32.xlu0 %v3443, 94
      %v3482 = vpop.permute.xlu0 %3481
      %3483 = vrot.lane.b32.xlu0 %v3445, 94
      %v3484 = vpop.permute.xlu0 %3483
      %3485 = vrot.lane.b32.xlu0 %v3452, 94
      %v3486 = vpop.permute.xlu0 %3485
      %vm3487 = vcmask 769024
      %v3488 = vsel %vm3487, %v3454, %v3456
      %v3489 = vsel %vm3487, %v3456, %v3458
      %v3490 = vsel %vm3487, %v3458, %v3460
      %v3491 = vsel %vm3487, %v3460, %v3462
      %v3492 = vsel %vm3487, %v3462, %v3464
      %v3493 = vsel %vm3487, %v3464, %v3466
      %v3494 = vsel %vm3487, %v3466, %v3468
      %v3495 = vsel %vm3487, %v3468, %v3470
      %v3496 = vsel %vm3487, %v3470, %v3472
      %v3497 = vsel %vm3487, %v3472, %v3474
      %v3498 = vsel %vm3487, %v3474, %v3476
      %v3499 = vsel %vm3487, %v3476, %v3478
      %v3500 = vsel %vm3487, %v3478, %v3480
      %v3501 = vsel %vm3487, %v3480, %v3482
      %v3502 = vsel %vm3487, %v3482, %v3484
      %v3503 = vsel %vm3487, %v3484, %v3486
      %v3509 = vcombine.low %v2289, %v2289
      %v3511 = vunpack.c.l.s4 1983009808
      %v3512 = vunpack.c.0.s8 %v3511
      %v3513 = vlaneseq
      %v3514 = vshrl.u32 %v3513, 7
      %v3515 = vsub.s32 %v3512, %v3514
      %v3516 = vrot.slane %v3509, %v3515
      %v3518 = vunpack.c.l.s4 1983009808
      %v3519 = vunpack.c.0.s8 %v3518
      %v3520 = vlaneseq
      %v3521 = vshrl.u32 %v3520, 7
      %v3522 = vsub.s32 %v3519, %v3521
      %v3523 = vrot.slane %v2289, %v3522
      %v3524 = vcombine.high %v3516, %v3516
      %v3525 = vcombine.high %v3523, %v3523
      %v3526 = vcombine.low %v2290, %v2290
      %v3528 = vunpack.c.l.s4 1983009808
      %v3529 = vunpack.c.0.s8 %v3528
      %v3530 = vlaneseq
      %v3531 = vshrl.u32 %v3530, 7
      %v3532 = vsub.s32 %v3529, %v3531
      %v3533 = vrot.slane %v3526, %v3532
      %v3535 = vunpack.c.l.s4 1983009808
      %v3536 = vunpack.c.0.s8 %v3535
      %v3537 = vlaneseq
      %v3538 = vshrl.u32 %v3537, 7
      %v3539 = vsub.s32 %v3536, %v3538
      %v3540 = vrot.slane %v2290, %v3539
      %v3541 = vcombine.high %v3533, %v3533
      %v3542 = vcombine.high %v3540, %v3540
      %v3543 = vcombine.low %v2291, %v2291
      %v3545 = vunpack.c.l.s4 1983009808
      %v3546 = vunpack.c.0.s8 %v3545
      %v3547 = vlaneseq
      %v3548 = vshrl.u32 %v3547, 7
      %v3549 = vsub.s32 %v3546, %v3548
      %v3550 = vrot.slane %v3543, %v3549
      %v3552 = vunpack.c.l.s4 1983009808
      %v3553 = vunpack.c.0.s8 %v3552
      %v3554 = vlaneseq
      %v3555 = vshrl.u32 %v3554, 7
      %v3556 = vsub.s32 %v3553, %v3555
      %v3557 = vrot.slane %v2291, %v3556
      %v3558 = vcombine.high %v3550, %v3550
      %v3559 = vcombine.high %v3557, %v3557
      %v3560 = vcombine.low %v2292, %v2292
      %v3562 = vunpack.c.l.s4 1983009808
      %v3563 = vunpack.c.0.s8 %v3562
      %v3564 = vlaneseq
      %v3565 = vshrl.u32 %v3564, 7
      %v3566 = vsub.s32 %v3563, %v3565
      %v3567 = vrot.slane %v3560, %v3566
      %v3569 = vunpack.c.l.s4 1983009808
      %v3570 = vunpack.c.0.s8 %v3569
      %v3571 = vlaneseq
      %v3572 = vshrl.u32 %v3571, 7
      %v3573 = vsub.s32 %v3570, %v3572
      %v3574 = vrot.slane %v2292, %v3573
      %v3575 = vcombine.high %v3567, %v3567
      %v3576 = vcombine.high %v3574, %v3574
      %v3577 = vcombine.low %v2293, %v2293
      %v3579 = vunpack.c.l.s4 1983009808
      %v3580 = vunpack.c.0.s8 %v3579
      %v3581 = vlaneseq
      %v3582 = vshrl.u32 %v3581, 7
      %v3583 = vsub.s32 %v3580, %v3582
      %v3584 = vrot.slane %v3577, %v3583
      %v3590 = vcombine.high %v2294, %v2294
      %v3592 = vunpack.c.l.s4 1983009808
      %v3593 = vunpack.c.0.s8 %v3592
      %v3594 = vlaneseq
      %v3595 = vshrl.u32 %v3594, 7
      %v3596 = vsub.s32 %v3593, %v3595
      %v3597 = vrot.slane %v2294, %v3596
      %v3599 = vunpack.c.l.s4 1983009808
      %v3600 = vunpack.c.0.s8 %v3599
      %v3601 = vlaneseq
      %v3602 = vshrl.u32 %v3601, 7
      %v3603 = vsub.s32 %v3600, %v3602
      %v3604 = vrot.slane %v3590, %v3603
      %v3605 = vcombine.low %v3597, %v3597
      %v3606 = vcombine.low %v3604, %v3604
      %v3607 = vcombine.high %v2295, %v2295
      %v3609 = vunpack.c.l.s4 1983009808
      %v3610 = vunpack.c.0.s8 %v3609
      %v3611 = vlaneseq
      %v3612 = vshrl.u32 %v3611, 7
      %v3613 = vsub.s32 %v3610, %v3612
      %v3614 = vrot.slane %v2295, %v3613
      %v3616 = vunpack.c.l.s4 1983009808
      %v3617 = vunpack.c.0.s8 %v3616
      %v3618 = vlaneseq
      %v3619 = vshrl.u32 %v3618, 7
      %v3620 = vsub.s32 %v3617, %v3619
      %v3621 = vrot.slane %v3607, %v3620
      %v3622 = vcombine.low %v3614, %v3614
      %v3623 = vcombine.low %v3621, %v3621
      %v3624 = vcombine.high %v2296, %v2296
      %v3626 = vunpack.c.l.s4 1983009808
      %v3627 = vunpack.c.0.s8 %v3626
      %v3628 = vlaneseq
      %v3629 = vshrl.u32 %v3628, 7
      %v3630 = vsub.s32 %v3627, %v3629
      %v3631 = vrot.slane %v2296, %v3630
      %v3633 = vunpack.c.l.s4 1983009808
      %v3634 = vunpack.c.0.s8 %v3633
      %v3635 = vlaneseq
      %v3636 = vshrl.u32 %v3635, 7
      %v3637 = vsub.s32 %v3634, %v3636
      %v3638 = vrot.slane %v3624, %v3637
      %v3639 = vcombine.low %v3631, %v3631
      %v3640 = vcombine.low %v3638, %v3638
      %v3641 = vcombine.high %v2297, %v2297
      %v3643 = vunpack.c.l.s4 1983009808
      %v3644 = vunpack.c.0.s8 %v3643
      %v3645 = vlaneseq
      %v3646 = vshrl.u32 %v3645, 7
      %v3647 = vsub.s32 %v3644, %v3646
      %v3648 = vrot.slane %v2297, %v3647
      %v3650 = vunpack.c.l.s4 1983009808
      %v3651 = vunpack.c.0.s8 %v3650
      %v3652 = vlaneseq
      %v3653 = vshrl.u32 %v3652, 7
      %v3654 = vsub.s32 %v3651, %v3653
      %v3655 = vrot.slane %v3641, %v3654
      %v3656 = vcombine.low %v3648, %v3648
      %v3657 = vcombine.low %v3655, %v3655
      %v3659 = vunpack.c.l.s4 1983009808
      %v3660 = vunpack.c.0.s8 %v3659
      %v3661 = vlaneseq
      %v3662 = vshrl.u32 %v3661, 7
      %v3663 = vsub.s32 %v3660, %v3662
      %v3664 = vrot.slane %v2298, %v3663
      %v3665 = vcombine.low %v3664, %v3664
      %3666 = vrot.lane.b32.xlu0 %v3605, 127
      %v3667 = vpop.permute.xlu0 %3666
      %3668 = vrot.lane.b32.xlu0 %v3597, 127
      %v3669 = vpop.permute.xlu0 %3668
      %3670 = vrot.lane.b32.xlu0 %v3606, 127
      %v3671 = vpop.permute.xlu0 %3670
      %3672 = vrot.lane.b32.xlu0 %v3604, 127
      %v3673 = vpop.permute.xlu0 %3672
      %3674 = vrot.lane.b32.xlu0 %v3622, 127
      %v3675 = vpop.permute.xlu0 %3674
      %3676 = vrot.lane.b32.xlu0 %v3614, 127
      %v3677 = vpop.permute.xlu0 %3676
      %3678 = vrot.lane.b32.xlu0 %v3623, 127
      %v3679 = vpop.permute.xlu0 %3678
      %3680 = vrot.lane.b32.xlu0 %v3621, 127
      %v3681 = vpop.permute.xlu0 %3680
      %3682 = vrot.lane.b32.xlu0 %v3639, 127
      %v3683 = vpop.permute.xlu0 %3682
      %3684 = vrot.lane.b32.xlu0 %v3631, 127
      %v3685 = vpop.permute.xlu0 %3684
      %3686 = vrot.lane.b32.xlu0 %v3640, 127
      %v3687 = vpop.permute.xlu0 %3686
      %3688 = vrot.lane.b32.xlu0 %v3638, 127
      %v3689 = vpop.permute.xlu0 %3688
      %3690 = vrot.lane.b32.xlu0 %v3656, 127
      %v3691 = vpop.permute.xlu0 %3690
      %3692 = vrot.lane.b32.xlu0 %v3648, 127
      %v3693 = vpop.permute.xlu0 %3692
      %3694 = vrot.lane.b32.xlu0 %v3657, 127
      %v3695 = vpop.permute.xlu0 %3694
      %3696 = vrot.lane.b32.xlu0 %v3655, 127
      %v3697 = vpop.permute.xlu0 %3696
      %3698 = vrot.lane.b32.xlu0 %v3665, 127
      %v3699 = vpop.permute.xlu0 %3698
      %v3700 = vsel %vm1197, %v3667, %v3669
      %v3701 = vsel %vm1197, %v3669, %v3671
      %v3702 = vsel %vm1197, %v3671, %v3673
      %v3703 = vsel %vm1197, %v3673, %v3675
      %v3704 = vsel %vm1197, %v3675, %v3677
      %v3705 = vsel %vm1197, %v3677, %v3679
      %v3706 = vsel %vm1197, %v3679, %v3681
      %v3707 = vsel %vm1197, %v3681, %v3683
      %v3708 = vsel %vm1197, %v3683, %v3685
      %v3709 = vsel %vm1197, %v3685, %v3687
      %v3710 = vsel %vm1197, %v3687, %v3689
      %v3711 = vsel %vm1197, %v3689, %v3691
      %v3712 = vsel %vm1197, %v3691, %v3693
      %v3713 = vsel %vm1197, %v3693, %v3695
      %v3714 = vsel %vm1197, %v3695, %v3697
      %v3715 = vsel %vm1197, %v3697, %v3699
      %v3721 = vcombine.low %v2299, %v2299
      %v3723 = vunpack.c.l.s4 1983009808
      %v3724 = vunpack.c.0.s8 %v3723
      %v3725 = vlaneseq
      %v3726 = vshrl.u32 %v3725, 7
      %v3727 = vsub.s32 %v3724, %v3726
      %v3728 = vrot.slane %v3721, %v3727
      %v3730 = vunpack.c.l.s4 1983009808
      %v3731 = vunpack.c.0.s8 %v3730
      %v3732 = vlaneseq
      %v3733 = vshrl.u32 %v3732, 7
      %v3734 = vsub.s32 %v3731, %v3733
      %v3735 = vrot.slane %v2299, %v3734
      %v3736 = vcombine.low %v3728, %v3728
      %v3737 = vcombine.low %v3735, %v3735
      %v3738 = vcombine.low %v2300, %v2300
      %v3740 = vunpack.c.l.s4 1983009808
      %v3741 = vunpack.c.0.s8 %v3740
      %v3742 = vlaneseq
      %v3743 = vshrl.u32 %v3742, 7
      %v3744 = vsub.s32 %v3741, %v3743
      %v3745 = vrot.slane %v3738, %v3744
      %v3747 = vunpack.c.l.s4 1983009808
      %v3748 = vunpack.c.0.s8 %v3747
      %v3749 = vlaneseq
      %v3750 = vshrl.u32 %v3749, 7
      %v3751 = vsub.s32 %v3748, %v3750
      %v3752 = vrot.slane %v2300, %v3751
      %v3753 = vcombine.low %v3745, %v3745
      %v3754 = vcombine.low %v3752, %v3752
      %v3755 = vcombine.low %v2301, %v2301
      %v3757 = vunpack.c.l.s4 1983009808
      %v3758 = vunpack.c.0.s8 %v3757
      %v3759 = vlaneseq
      %v3760 = vshrl.u32 %v3759, 7
      %v3761 = vsub.s32 %v3758, %v3760
      %v3762 = vrot.slane %v3755, %v3761
      %v3764 = vunpack.c.l.s4 1983009808
      %v3765 = vunpack.c.0.s8 %v3764
      %v3766 = vlaneseq
      %v3767 = vshrl.u32 %v3766, 7
      %v3768 = vsub.s32 %v3765, %v3767
      %v3769 = vrot.slane %v2301, %v3768
      %v3770 = vcombine.low %v3762, %v3762
      %v3771 = vcombine.low %v3769, %v3769
      %v3772 = vcombine.low %v2302, %v2302
      %v3774 = vunpack.c.l.s4 1983009808
      %v3775 = vunpack.c.0.s8 %v3774
      %v3776 = vlaneseq
      %v3777 = vshrl.u32 %v3776, 7
      %v3778 = vsub.s32 %v3775, %v3777
      %v3779 = vrot.slane %v3772, %v3778
      %v3781 = vunpack.c.l.s4 1983009808
      %v3782 = vunpack.c.0.s8 %v3781
      %v3783 = vlaneseq
      %v3784 = vshrl.u32 %v3783, 7
      %v3785 = vsub.s32 %v3782, %v3784
      %v3786 = vrot.slane %v2302, %v3785
      %v3787 = vcombine.low %v3779, %v3779
      %v3788 = vcombine.low %v3786, %v3786
      %v3789 = vcombine.low %v2303, %v2303
      %v3791 = vunpack.c.l.s4 1983009808
      %v3792 = vunpack.c.0.s8 %v3791
      %v3793 = vlaneseq
      %v3794 = vshrl.u32 %v3793, 7
      %v3795 = vsub.s32 %v3792, %v3794
      %v3796 = vrot.slane %v3789, %v3795
      %v3797 = vcombine.low %v3796, %v3796
      %3798 = vrot.lane.b32.xlu0 %v3736, 126
      %v3799 = vpop.permute.xlu0 %3798
      %3800 = vrot.lane.b32.xlu0 %v3728, 126
      %v3801 = vpop.permute.xlu0 %3800
      %3802 = vrot.lane.b32.xlu0 %v3737, 126
      %v3803 = vpop.permute.xlu0 %3802
      %3804 = vrot.lane.b32.xlu0 %v3735, 126
      %v3805 = vpop.permute.xlu0 %3804
      %3806 = vrot.lane.b32.xlu0 %v3753, 126
      %v3807 = vpop.permute.xlu0 %3806
      %3808 = vrot.lane.b32.xlu0 %v3745, 126
      %v3809 = vpop.permute.xlu0 %3808
      %3810 = vrot.lane.b32.xlu0 %v3754, 126
      %v3811 = vpop.permute.xlu0 %3810
      %3812 = vrot.lane.b32.xlu0 %v3752, 126
      %v3813 = vpop.permute.xlu0 %3812
      %3814 = vrot.lane.b32.xlu0 %v3770, 126
      %v3815 = vpop.permute.xlu0 %3814
      %3816 = vrot.lane.b32.xlu0 %v3762, 126
      %v3817 = vpop.permute.xlu0 %3816
      %3818 = vrot.lane.b32.xlu0 %v3771, 126
      %v3819 = vpop.permute.xlu0 %3818
      %3820 = vrot.lane.b32.xlu0 %v3769, 126
      %v3821 = vpop.permute.xlu0 %3820
      %3822 = vrot.lane.b32.xlu0 %v3787, 126
      %v3823 = vpop.permute.xlu0 %3822
      %3824 = vrot.lane.b32.xlu0 %v3779, 126
      %v3825 = vpop.permute.xlu0 %3824
      %3826 = vrot.lane.b32.xlu0 %v3788, 126
      %v3827 = vpop.permute.xlu0 %3826
      %3828 = vrot.lane.b32.xlu0 %v3786, 126
      %v3829 = vpop.permute.xlu0 %3828
      %3830 = vrot.lane.b32.xlu0 %v3797, 126
      %v3831 = vpop.permute.xlu0 %3830
      %v3832 = vsel %vm2708, %v3799, %v3801
      %v3833 = vsel %vm2708, %v3801, %v3803
      %v3834 = vsel %vm2708, %v3803, %v3805
      %v3835 = vsel %vm2708, %v3805, %v3807
      %v3836 = vsel %vm2708, %v3807, %v3809
      %v3837 = vsel %vm2708, %v3809, %v3811
      %v3838 = vsel %vm2708, %v3811, %v3813
      %v3839 = vsel %vm2708, %v3813, %v3815
      %v3840 = vsel %vm2708, %v3815, %v3817
      %v3841 = vsel %vm2708, %v3817, %v3819
      %v3842 = vsel %vm2708, %v3819, %v3821
      %v3843 = vsel %vm2708, %v3821, %v3823
      %v3844 = vsel %vm2708, %v3823, %v3825
      %v3845 = vsel %vm2708, %v3825, %v3827
      %v3846 = vsel %vm2708, %v3827, %v3829
      %v3847 = vsel %vm2708, %v3829, %v3831
      %v3853 = vcombine.high %v2304, %v2304
      %v3855 = vunpack.c.l.s4 1983009808
      %v3856 = vunpack.c.0.s8 %v3855
      %v3857 = vlaneseq
      %v3858 = vshrl.u32 %v3857, 7
      %v3859 = vsub.s32 %v3856, %v3858
      %v3860 = vrot.slane %v2304, %v3859
      %v3862 = vunpack.c.l.s4 1983009808
      %v3863 = vunpack.c.0.s8 %v3862
      %v3864 = vlaneseq
      %v3865 = vshrl.u32 %v3864, 7
      %v3866 = vsub.s32 %v3863, %v3865
      %v3867 = vrot.slane %v3853, %v3866
      %v3868 = vcombine.high %v3860, %v3860
      %v3869 = vcombine.high %v3867, %v3867
      %v3870 = vcombine.high %v2305, %v2305
      %v3872 = vunpack.c.l.s4 1983009808
      %v3873 = vunpack.c.0.s8 %v3872
      %v3874 = vlaneseq
      %v3875 = vshrl.u32 %v3874, 7
      %v3876 = vsub.s32 %v3873, %v3875
      %v3877 = vrot.slane %v2305, %v3876
      %v3879 = vunpack.c.l.s4 1983009808
      %v3880 = vunpack.c.0.s8 %v3879
      %v3881 = vlaneseq
      %v3882 = vshrl.u32 %v3881, 7
      %v3883 = vsub.s32 %v3880, %v3882
      %v3884 = vrot.slane %v3870, %v3883
      %v3885 = vcombine.high %v3877, %v3877
      %v3886 = vcombine.high %v3884, %v3884
      %v3887 = vcombine.high %v2306, %v2306
      %v3889 = vunpack.c.l.s4 1983009808
      %v3890 = vunpack.c.0.s8 %v3889
      %v3891 = vlaneseq
      %v3892 = vshrl.u32 %v3891, 7
      %v3893 = vsub.s32 %v3890, %v3892
      %v3894 = vrot.slane %v2306, %v3893
      %v3896 = vunpack.c.l.s4 1983009808
      %v3897 = vunpack.c.0.s8 %v3896
      %v3898 = vlaneseq
      %v3899 = vshrl.u32 %v3898, 7
      %v3900 = vsub.s32 %v3897, %v3899
      %v3901 = vrot.slane %v3887, %v3900
      %v3902 = vcombine.high %v3894, %v3894
      %v3903 = vcombine.high %v3901, %v3901
      %v3904 = vcombine.high %v2307, %v2307
      %v3906 = vunpack.c.l.s4 1983009808
      %v3907 = vunpack.c.0.s8 %v3906
      %v3908 = vlaneseq
      %v3909 = vshrl.u32 %v3908, 7
      %v3910 = vsub.s32 %v3907, %v3909
      %v3911 = vrot.slane %v2307, %v3910
      %v3913 = vunpack.c.l.s4 1983009808
      %v3914 = vunpack.c.0.s8 %v3913
      %v3915 = vlaneseq
      %v3916 = vshrl.u32 %v3915, 7
      %v3917 = vsub.s32 %v3914, %v3916
      %v3918 = vrot.slane %v3904, %v3917
      %v3919 = vcombine.high %v3911, %v3911
      %v3920 = vcombine.high %v3918, %v3918
      %v3922 = vunpack.c.l.s4 1983009808
      %v3923 = vunpack.c.0.s8 %v3922
      %v3924 = vlaneseq
      %v3925 = vshrl.u32 %v3924, 7
      %v3926 = vsub.s32 %v3923, %v3925
      %v3927 = vrot.slane %v2308, %v3926
      %3928 = vrot.lane.b32.xlu0 %v3860, 112
      %v3929 = vpop.permute.xlu0 %3928
      %3930 = vrot.lane.b32.xlu0 %v3868, 112
      %v3931 = vpop.permute.xlu0 %3930
      %3932 = vrot.lane.b32.xlu0 %v3867, 112
      %v3933 = vpop.permute.xlu0 %3932
      %3934 = vrot.lane.b32.xlu0 %v3869, 112
      %v3935 = vpop.permute.xlu0 %3934
      %3936 = vrot.lane.b32.xlu0 %v3877, 112
      %v3937 = vpop.permute.xlu0 %3936
      %3938 = vrot.lane.b32.xlu0 %v3885, 112
      %v3939 = vpop.permute.xlu0 %3938
      %3940 = vrot.lane.b32.xlu0 %v3884, 112
      %v3941 = vpop.permute.xlu0 %3940
      %3942 = vrot.lane.b32.xlu0 %v3886, 112
      %v3943 = vpop.permute.xlu0 %3942
      %3944 = vrot.lane.b32.xlu0 %v3894, 112
      %v3945 = vpop.permute.xlu0 %3944
      %3946 = vrot.lane.b32.xlu0 %v3902, 112
      %v3947 = vpop.permute.xlu0 %3946
      %3948 = vrot.lane.b32.xlu0 %v3901, 112
      %v3949 = vpop.permute.xlu0 %3948
      %3950 = vrot.lane.b32.xlu0 %v3903, 112
      %v3951 = vpop.permute.xlu0 %3950
      %3952 = vrot.lane.b32.xlu0 %v3911, 112
      %v3953 = vpop.permute.xlu0 %3952
      %3954 = vrot.lane.b32.xlu0 %v3919, 112
      %v3955 = vpop.permute.xlu0 %3954
      %3956 = vrot.lane.b32.xlu0 %v3918, 112
      %v3957 = vpop.permute.xlu0 %3956
      %3958 = vrot.lane.b32.xlu0 %v3920, 112
      %v3959 = vpop.permute.xlu0 %3958
      %3960 = vrot.lane.b32.xlu0 %v3927, 112
      %v3961 = vpop.permute.xlu0 %3960
      %v3962 = vsel %vm697, %v3929, %v3931
      %v3963 = vsel %vm697, %v3931, %v3933
      %v3964 = vsel %vm697, %v3933, %v3935
      %v3965 = vsel %vm697, %v3935, %v3937
      %v3966 = vsel %vm697, %v3937, %v3939
      %v3967 = vsel %vm697, %v3939, %v3941
      %v3968 = vsel %vm697, %v3941, %v3943
      %v3969 = vsel %vm697, %v3943, %v3945
      %v3970 = vsel %vm697, %v3945, %v3947
      %v3971 = vsel %vm697, %v3947, %v3949
      %v3972 = vsel %vm697, %v3949, %v3951
      %v3973 = vsel %vm697, %v3951, %v3953
      %v3974 = vsel %vm697, %v3953, %v3955
      %v3975 = vsel %vm697, %v3955, %v3957
      %v3976 = vsel %vm697, %v3957, %v3959
      %v3977 = vsel %vm697, %v3959, %v3961
      %v3982 = vcombine.low %v2309, %v2309
      %v3984 = vunpack.c.l.s4 1983009808
      %v3985 = vunpack.c.0.s8 %v3984
      %v3986 = vlaneseq
      %v3987 = vshrl.u32 %v3986, 7
      %v3988 = vsub.s32 %v3985, %v3987
      %v3989 = vrot.slane %v3982, %v3988
      %v3991 = vunpack.c.l.s4 1983009808
      %v3992 = vunpack.c.0.s8 %v3991
      %v3993 = vlaneseq
      %v3994 = vshrl.u32 %v3993, 7
      %v3995 = vsub.s32 %v3992, %v3994
      %v3996 = vrot.slane %v2309, %v3995
      %v3997 = vcombine.high %v3989, %v3989
      %v3998 = vcombine.high %v3996, %v3996
      %v3999 = vcombine.low %v2310, %v2310
      %v4001 = vunpack.c.l.s4 1983009808
      %v4002 = vunpack.c.0.s8 %v4001
      %v4003 = vlaneseq
      %v4004 = vshrl.u32 %v4003, 7
      %v4005 = vsub.s32 %v4002, %v4004
      %v4006 = vrot.slane %v3999, %v4005
      %v4008 = vunpack.c.l.s4 1983009808
      %v4009 = vunpack.c.0.s8 %v4008
      %v4010 = vlaneseq
      %v4011 = vshrl.u32 %v4010, 7
      %v4012 = vsub.s32 %v4009, %v4011
      %v4013 = vrot.slane %v2310, %v4012
      %v4014 = vcombine.high %v4006, %v4006
      %v4015 = vcombine.high %v4013, %v4013
      %v4016 = vcombine.low %v2311, %v2311
      %v4018 = vunpack.c.l.s4 1983009808
      %v4019 = vunpack.c.0.s8 %v4018
      %v4020 = vlaneseq
      %v4021 = vshrl.u32 %v4020, 7
      %v4022 = vsub.s32 %v4019, %v4021
      %v4023 = vrot.slane %v4016, %v4022
      %v4025 = vunpack.c.l.s4 1983009808
      %v4026 = vunpack.c.0.s8 %v4025
      %v4027 = vlaneseq
      %v4028 = vshrl.u32 %v4027, 7
      %v4029 = vsub.s32 %v4026, %v4028
      %v4030 = vrot.slane %v2311, %v4029
      %v4031 = vcombine.high %v4023, %v4023
      %v4032 = vcombine.high %v4030, %v4030
      %v4033 = vcombine.low %v2312, %v2312
      %v4035 = vunpack.c.l.s4 1983009808
      %v4036 = vunpack.c.0.s8 %v4035
      %v4037 = vlaneseq
      %v4038 = vshrl.u32 %v4037, 7
      %v4039 = vsub.s32 %v4036, %v4038
      %v4040 = vrot.slane %v4033, %v4039
      %v4042 = vunpack.c.l.s4 1983009808
      %v4043 = vunpack.c.0.s8 %v4042
      %v4044 = vlaneseq
      %v4045 = vshrl.u32 %v4044, 7
      %v4046 = vsub.s32 %v4043, %v4045
      %v4047 = vrot.slane %v2312, %v4046
      %v4048 = vcombine.high %v4040, %v4040
      %v4049 = vcombine.high %v4047, %v4047
      %4050 = vrot.lane.b32.xlu0 %v3989, 111
      %v4051 = vpop.permute.xlu0 %4050
      %4052 = vrot.lane.b32.xlu0 %v3997, 111
      %v4053 = vpop.permute.xlu0 %4052
      %4054 = vrot.lane.b32.xlu0 %v3996, 111
      %v4055 = vpop.permute.xlu0 %4054
      %4056 = vrot.lane.b32.xlu0 %v3998, 111
      %v4057 = vpop.permute.xlu0 %4056
      %4058 = vrot.lane.b32.xlu0 %v4006, 111
      %v4059 = vpop.permute.xlu0 %4058
      %4060 = vrot.lane.b32.xlu0 %v4014, 111
      %v4061 = vpop.permute.xlu0 %4060
      %4062 = vrot.lane.b32.xlu0 %v4013, 111
      %v4063 = vpop.permute.xlu0 %4062
      %4064 = vrot.lane.b32.xlu0 %v4015, 111
      %v4065 = vpop.permute.xlu0 %4064
      %4066 = vrot.lane.b32.xlu0 %v4023, 111
      %v4067 = vpop.permute.xlu0 %4066
      %4068 = vrot.lane.b32.xlu0 %v4031, 111
      %v4069 = vpop.permute.xlu0 %4068
      %4070 = vrot.lane.b32.xlu0 %v4030, 111
      %v4071 = vpop.permute.xlu0 %4070
      %4072 = vrot.lane.b32.xlu0 %v4032, 111
      %v4073 = vpop.permute.xlu0 %4072
      %4074 = vrot.lane.b32.xlu0 %v4040, 111
      %v4075 = vpop.permute.xlu0 %4074
      %4076 = vrot.lane.b32.xlu0 %v4048, 111
      %v4077 = vpop.permute.xlu0 %4076
      %4078 = vrot.lane.b32.xlu0 %v4047, 111
      %v4079 = vpop.permute.xlu0 %4078
      %4080 = vrot.lane.b32.xlu0 %v4049, 111
      %v4081 = vpop.permute.xlu0 %4080
      %v4082 = vsel %vm470, %v4051, %v4053
      %v4083 = vsel %vm470, %v4053, %v4055
      %v4084 = vsel %vm470, %v4055, %v4057
      %v4085 = vsel %vm470, %v4057, %v4059
      %v4086 = vsel %vm470, %v4059, %v4061
      %v4087 = vsel %vm470, %v4061, %v4063
      %v4088 = vsel %vm470, %v4063, %v4065
      %v4089 = vsel %vm470, %v4065, %v4067
      %v4090 = vsel %vm470, %v4067, %v4069
      %v4091 = vsel %vm470, %v4069, %v4071
      %v4092 = vsel %vm470, %v4071, %v4073
      %v4093 = vsel %vm470, %v4073, %v4075
      %v4094 = vsel %vm470, %v4075, %v4077
      %v4095 = vsel %vm470, %v4077, %v4079
      %v4096 = vsel %vm470, %v4079, %v4081
      %v4102 = vcombine.high %v2314, %v2314
      %v4104 = vunpack.c.l.s4 1983009808
      %v4105 = vunpack.c.0.s8 %v4104
      %v4106 = vlaneseq
      %v4107 = vshrl.u32 %v4106, 7
      %v4108 = vsub.s32 %v4105, %v4107
      %v4109 = vrot.slane %v2314, %v4108
      %v4111 = vunpack.c.l.s4 1983009808
      %v4112 = vunpack.c.0.s8 %v4111
      %v4113 = vlaneseq
      %v4114 = vshrl.u32 %v4113, 7
      %v4115 = vsub.s32 %v4112, %v4114
      %v4116 = vrot.slane %v4102, %v4115
      %v4117 = vcombine.low %v4109, %v4109
      %v4118 = vcombine.low %v4116, %v4116
      %v4119 = vcombine.high %v2315, %v2315
      %v4121 = vunpack.c.l.s4 1983009808
      %v4122 = vunpack.c.0.s8 %v4121
      %v4123 = vlaneseq
      %v4124 = vshrl.u32 %v4123, 7
      %v4125 = vsub.s32 %v4122, %v4124
      %v4126 = vrot.slane %v2315, %v4125
      %v4128 = vunpack.c.l.s4 1983009808
      %v4129 = vunpack.c.0.s8 %v4128
      %v4130 = vlaneseq
      %v4131 = vshrl.u32 %v4130, 7
      %v4132 = vsub.s32 %v4129, %v4131
      %v4133 = vrot.slane %v4119, %v4132
      %v4134 = vcombine.low %v4126, %v4126
      %v4135 = vcombine.low %v4133, %v4133
      %v4136 = vcombine.high %v2316, %v2316
      %v4138 = vunpack.c.l.s4 1983009808
      %v4139 = vunpack.c.0.s8 %v4138
      %v4140 = vlaneseq
      %v4141 = vshrl.u32 %v4140, 7
      %v4142 = vsub.s32 %v4139, %v4141
      %v4143 = vrot.slane %v2316, %v4142
      %v4145 = vunpack.c.l.s4 1983009808
      %v4146 = vunpack.c.0.s8 %v4145
      %v4147 = vlaneseq
      %v4148 = vshrl.u32 %v4147, 7
      %v4149 = vsub.s32 %v4146, %v4148
      %v4150 = vrot.slane %v4136, %v4149
      %v4151 = vcombine.low %v4143, %v4143
      %v4152 = vcombine.low %v4150, %v4150
      %v4153 = vcombine.high %v2317, %v2317
      %v4155 = vunpack.c.l.s4 1983009808
      %v4156 = vunpack.c.0.s8 %v4155
      %v4157 = vlaneseq
      %v4158 = vshrl.u32 %v4157, 7
      %v4159 = vsub.s32 %v4156, %v4158
      %v4160 = vrot.slane %v2317, %v4159
      %v4162 = vunpack.c.l.s4 1983009808
      %v4163 = vunpack.c.0.s8 %v4162
      %v4164 = vlaneseq
      %v4165 = vshrl.u32 %v4164, 7
      %v4166 = vsub.s32 %v4163, %v4165
      %v4167 = vrot.slane %v4153, %v4166
      %v4168 = vcombine.low %v4160, %v4160
      %v4169 = vcombine.low %v4167, %v4167
      %v4171 = vunpack.c.l.s4 1983009808
      %v4172 = vunpack.c.0.s8 %v4171
      %v4173 = vlaneseq
      %v4174 = vshrl.u32 %v4173, 7
      %v4175 = vsub.s32 %v4172, %v4174
      %v4176 = vrot.slane %v2318, %v4175
      %v4177 = vcombine.low %v4176, %v4176
      %4178 = vrot.lane.b32.xlu0 %v4117, 110
      %v4179 = vpop.permute.xlu0 %4178
      %4180 = vrot.lane.b32.xlu0 %v4109, 110
      %v4181 = vpop.permute.xlu0 %4180
      %4182 = vrot.lane.b32.xlu0 %v4118, 110
      %v4183 = vpop.permute.xlu0 %4182
      %4184 = vrot.lane.b32.xlu0 %v4116, 110
      %v4185 = vpop.permute.xlu0 %4184
      %4186 = vrot.lane.b32.xlu0 %v4134, 110
      %v4187 = vpop.permute.xlu0 %4186
      %4188 = vrot.lane.b32.xlu0 %v4126, 110
      %v4189 = vpop.permute.xlu0 %4188
      %4190 = vrot.lane.b32.xlu0 %v4135, 110
      %v4191 = vpop.permute.xlu0 %4190
      %4192 = vrot.lane.b32.xlu0 %v4133, 110
      %v4193 = vpop.permute.xlu0 %4192
      %4194 = vrot.lane.b32.xlu0 %v4151, 110
      %v4195 = vpop.permute.xlu0 %4194
      %4196 = vrot.lane.b32.xlu0 %v4143, 110
      %v4197 = vpop.permute.xlu0 %4196
      %4198 = vrot.lane.b32.xlu0 %v4152, 110
      %v4199 = vpop.permute.xlu0 %4198
      %4200 = vrot.lane.b32.xlu0 %v4150, 110
      %v4201 = vpop.permute.xlu0 %4200
      %4202 = vrot.lane.b32.xlu0 %v4168, 110
      %v4203 = vpop.permute.xlu0 %4202
      %4204 = vrot.lane.b32.xlu0 %v4160, 110
      %v4205 = vpop.permute.xlu0 %4204
      %4206 = vrot.lane.b32.xlu0 %v4169, 110
      %v4207 = vpop.permute.xlu0 %4206
      %4208 = vrot.lane.b32.xlu0 %v4167, 110
      %v4209 = vpop.permute.xlu0 %4208
      %4210 = vrot.lane.b32.xlu0 %v4177, 110
      %v4211 = vpop.permute.xlu0 %4210
      %v4212 = vsel %vm3091, %v4179, %v4181
      %v4213 = vsel %vm3091, %v4181, %v4183
      %v4214 = vsel %vm3091, %v4183, %v4185
      %v4215 = vsel %vm3091, %v4185, %v4187
      %v4216 = vsel %vm3091, %v4187, %v4189
      %v4217 = vsel %vm3091, %v4189, %v4191
      %v4218 = vsel %vm3091, %v4191, %v4193
      %v4219 = vsel %vm3091, %v4193, %v4195
      %v4220 = vsel %vm3091, %v4195, %v4197
      %v4221 = vsel %vm3091, %v4197, %v4199
      %v4222 = vsel %vm3091, %v4199, %v4201
      %v4223 = vsel %vm3091, %v4201, %v4203
      %v4224 = vsel %vm3091, %v4203, %v4205
      %v4225 = vsel %vm3091, %v4205, %v4207
      %v4226 = vsel %vm3091, %v4207, %v4209
      %v4227 = vsel %vm3091, %v4209, %v4211
      %v4233 = vcombine.low %v2319, %v2319
      %v4235 = vunpack.c.l.s4 1983009808
      %v4236 = vunpack.c.0.s8 %v4235
      %v4237 = vlaneseq
      %v4238 = vshrl.u32 %v4237, 7
      %v4239 = vsub.s32 %v4236, %v4238
      %v4240 = vrot.slane %v4233, %v4239
      %v4242 = vunpack.c.l.s4 1983009808
      %v4243 = vunpack.c.0.s8 %v4242
      %v4244 = vlaneseq
      %v4245 = vshrl.u32 %v4244, 7
      %v4246 = vsub.s32 %v4243, %v4245
      %v4247 = vrot.slane %v2319, %v4246
      %v4248 = vcombine.low %v4240, %v4240
      %v4249 = vcombine.low %v4247, %v4247
      %v4250 = vcombine.low %v2320, %v2320
      %v4252 = vunpack.c.l.s4 1983009808
      %v4253 = vunpack.c.0.s8 %v4252
      %v4254 = vlaneseq
      %v4255 = vshrl.u32 %v4254, 7
      %v4256 = vsub.s32 %v4253, %v4255
      %v4257 = vrot.slane %v4250, %v4256
      %v4259 = vunpack.c.l.s4 1983009808
      %v4260 = vunpack.c.0.s8 %v4259
      %v4261 = vlaneseq
      %v4262 = vshrl.u32 %v4261, 7
      %v4263 = vsub.s32 %v4260, %v4262
      %v4264 = vrot.slane %v2320, %v4263
      %v4265 = vcombine.low %v4257, %v4257
      %v4266 = vcombine.low %v4264, %v4264
      %v4267 = vcombine.low %v2321, %v2321
      %v4269 = vunpack.c.l.s4 1983009808
      %v4270 = vunpack.c.0.s8 %v4269
      %v4271 = vlaneseq
      %v4272 = vshrl.u32 %v4271, 7
      %v4273 = vsub.s32 %v4270, %v4272
      %v4274 = vrot.slane %v4267, %v4273
      %v4276 = vunpack.c.l.s4 1983009808
      %v4277 = vunpack.c.0.s8 %v4276
      %v4278 = vlaneseq
      %v4279 = vshrl.u32 %v4278, 7
      %v4280 = vsub.s32 %v4277, %v4279
      %v4281 = vrot.slane %v2321, %v4280
      %v4282 = vcombine.low %v4274, %v4274
      %v4283 = vcombine.low %v4281, %v4281
      %v4284 = vcombine.low %v2322, %v2322
      %v4286 = vunpack.c.l.s4 1983009808
      %v4287 = vunpack.c.0.s8 %v4286
      %v4288 = vlaneseq
      %v4289 = vshrl.u32 %v4288, 7
      %v4290 = vsub.s32 %v4287, %v4289
      %v4291 = vrot.slane %v4284, %v4290
      %v4293 = vunpack.c.l.s4 1983009808
      %v4294 = vunpack.c.0.s8 %v4293
      %v4295 = vlaneseq
      %v4296 = vshrl.u32 %v4295, 7
      %v4297 = vsub.s32 %v4294, %v4296
      %v4298 = vrot.slane %v2322, %v4297
      %v4299 = vcombine.low %v4291, %v4291
      %v4300 = vcombine.low %v4298, %v4298
      %v4301 = vcombine.low %v2323, %v2323
      %v4303 = vunpack.c.l.s4 1983009808
      %v4304 = vunpack.c.0.s8 %v4303
      %v4305 = vlaneseq
      %v4306 = vshrl.u32 %v4305, 7
      %v4307 = vsub.s32 %v4304, %v4306
      %v4308 = vrot.slane %v4301, %v4307
      %v4309 = vcombine.low %v4308, %v4308
      %4310 = vrot.lane.b32.xlu0 %v4248, 96
      %v4311 = vpop.permute.xlu0 %4310
      %4312 = vrot.lane.b32.xlu0 %v4240, 96
      %v4313 = vpop.permute.xlu0 %4312
      %4314 = vrot.lane.b32.xlu0 %v4249, 96
      %v4315 = vpop.permute.xlu0 %4314
      %4316 = vrot.lane.b32.xlu0 %v4247, 96
      %v4317 = vpop.permute.xlu0 %4316
      %4318 = vrot.lane.b32.xlu0 %v4265, 96
      %v4319 = vpop.permute.xlu0 %4318
      %4320 = vrot.lane.b32.xlu0 %v4257, 96
      %v4321 = vpop.permute.xlu0 %4320
      %4322 = vrot.lane.b32.xlu0 %v4266, 96
      %v4323 = vpop.permute.xlu0 %4322
      %4324 = vrot.lane.b32.xlu0 %v4264, 96
      %v4325 = vpop.permute.xlu0 %4324
      %4326 = vrot.lane.b32.xlu0 %v4282, 96
      %v4327 = vpop.permute.xlu0 %4326
      %4328 = vrot.lane.b32.xlu0 %v4274, 96
      %v4329 = vpop.permute.xlu0 %4328
      %4330 = vrot.lane.b32.xlu0 %v4283, 96
      %v4331 = vpop.permute.xlu0 %4330
      %4332 = vrot.lane.b32.xlu0 %v4281, 96
      %v4333 = vpop.permute.xlu0 %4332
      %4334 = vrot.lane.b32.xlu0 %v4299, 96
      %v4335 = vpop.permute.xlu0 %4334
      %4336 = vrot.lane.b32.xlu0 %v4291, 96
      %v4337 = vpop.permute.xlu0 %4336
      %4338 = vrot.lane.b32.xlu0 %v4300, 96
      %v4339 = vpop.permute.xlu0 %4338
      %4340 = vrot.lane.b32.xlu0 %v4298, 96
      %v4341 = vpop.permute.xlu0 %4340
      %4342 = vrot.lane.b32.xlu0 %v4309, 96
      %v4343 = vpop.permute.xlu0 %4342
      %v4344 = vsel %vm3223, %v4311, %v4313
      %v4345 = vsel %vm3223, %v4313, %v4315
      %v4346 = vsel %vm3223, %v4315, %v4317
      %v4347 = vsel %vm3223, %v4317, %v4319
      %v4348 = vsel %vm3223, %v4319, %v4321
      %v4349 = vsel %vm3223, %v4321, %v4323
      %v4350 = vsel %vm3223, %v4323, %v4325
      %v4351 = vsel %vm3223, %v4325, %v4327
      %v4352 = vsel %vm3223, %v4327, %v4329
      %v4353 = vsel %vm3223, %v4329, %v4331
      %v4354 = vsel %vm3223, %v4331, %v4333
      %v4355 = vsel %vm3223, %v4333, %v4335
      %v4356 = vsel %vm3223, %v4335, %v4337
      %v4357 = vsel %vm3223, %v4337, %v4339
      %v4358 = vsel %vm3223, %v4339, %v4341
      %v4359 = vsel %vm3223, %v4341, %v4343
      %vm4360 = vcmask 1041408
      %v4363 = vsel %vm4360, %v2394, %v2577
      %v4366 = vsel %vm4360, %v2402, %v2578
      %v4369 = vsel %vm4360, %v2401, %v2579
      %v4372 = vsel %vm4360, %v2403, %v2580
      %v4375 = vsel %vm4360, %v2411, %v2581
      %v4378 = vsel %vm4360, %v2419, %v2582
      %v4381 = vsel %vm4360, %v2418, %v2583
      %v4384 = vsel %vm4360, %v2420, %v2584
      %v4387 = vsel %vm4360, %v2428, %v2585
      %v4390 = vsel %vm4360, %v2436, %v2586
      %v4393 = vsel %vm4360, %v2435, %v2587
      %v4396 = vsel %vm4360, %v2437, %v2588
      %v4399 = vsel %vm4360, %v2445, %v2589
      %v4402 = vsel %vm4360, %v2453, %v2590
      %v4405 = vsel %vm4360, %v2452, %v2591
      %v4408 = vsel %vm4360, %v2454, %v2592
      %v4411 = vsel %vm4360, %v2461, %v2576
      %vm4412 = vcmask 1043456
      %v4414 = vsel %vm4412, %v4363, %v2709
      %v4416 = vsel %vm4412, %v4366, %v2710
      %v4418 = vsel %vm4412, %v4369, %v2711
      %v4420 = vsel %vm4412, %v4372, %v2712
      %v4422 = vsel %vm4412, %v4375, %v2713
      %v4424 = vsel %vm4412, %v4378, %v2714
      %v4426 = vsel %vm4412, %v4381, %v2715
      %v4428 = vsel %vm4412, %v4384, %v2716
      %v4430 = vsel %vm4412, %v4387, %v2717
      %v4432 = vsel %vm4412, %v4390, %v2718
      %v4434 = vsel %vm4412, %v4393, %v2719
      %v4436 = vsel %vm4412, %v4396, %v2720
      %v4438 = vsel %vm4412, %v4399, %v2721
      %v4440 = vsel %vm4412, %v4402, %v2722
      %v4442 = vsel %vm4412, %v4405, %v2723
      %v4444 = vsel %vm4412, %v4408, %v2724
      %v4446 = vsel %vm4412, %v4411, %v2707
      %vm4447 = vcmask 1045504
      %v4449 = vsel %vm4447, %v4414, %v2841
      %v4451 = vsel %vm4447, %v4416, %v2842
      %v4453 = vsel %vm4447, %v4418, %v2843
      %v4455 = vsel %vm4447, %v4420, %v2844
      %v4457 = vsel %vm4447, %v4422, %v2845
      %v4459 = vsel %vm4447, %v4424, %v2846
      %v4461 = vsel %vm4447, %v4426, %v2847
      %v4463 = vsel %vm4447, %v4428, %v2848
      %v4465 = vsel %vm4447, %v4430, %v2849
      %v4467 = vsel %vm4447, %v4432, %v2850
      %v4469 = vsel %vm4447, %v4434, %v2851
      %v4471 = vsel %vm4447, %v4436, %v2852
      %v4473 = vsel %vm4447, %v4438, %v2853
      %v4475 = vsel %vm4447, %v4440, %v2854
      %v4477 = vsel %vm4447, %v4442, %v2855
      %v4479 = vsel %vm4447, %v4444, %v2856
      %v4481 = vsel %vm4447, %v4446, %v2840
      %v4484 = vsel %vm4360, %v2930, %v3058
      %v4487 = vsel %vm4360, %v2961, %v3092
      %v4490 = vsel %vm4360, %v2962, %v3093
      %v4493 = vsel %vm4360, %v2963, %v3094
      %v4496 = vsel %vm4360, %v2964, %v3095
      %v4499 = vsel %vm4360, %v2965, %v3096
      %v4502 = vsel %vm4360, %v2966, %v3097
      %v4505 = vsel %vm4360, %v2967, %v3098
      %v4508 = vsel %vm4360, %v2968, %v3099
      %v4511 = vsel %vm4360, %v2969, %v3100
      %v4514 = vsel %vm4360, %v2970, %v3101
      %v4517 = vsel %vm4360, %v2971, %v3102
      %v4520 = vsel %vm4360, %v2972, %v3103
      %v4523 = vsel %vm4360, %v2973, %v3104
      %v4526 = vsel %vm4360, %v2974, %v3105
      %v4529 = vsel %vm4360, %v2975, %v3106
      %v4532 = vsel %vm4360, %v2960, %v3107
      %v4534 = vsel %vm4412, %v4484, %v3190
      %v4536 = vsel %vm4412, %v4487, %v3224
      %v4538 = vsel %vm4412, %v4490, %v3225
      %v4540 = vsel %vm4412, %v4493, %v3226
      %v4542 = vsel %vm4412, %v4496, %v3227
      %v4544 = vsel %vm4412, %v4499, %v3228
      %v4546 = vsel %vm4412, %v4502, %v3229
      %v4548 = vsel %vm4412, %v4505, %v3230
      %v4550 = vsel %vm4412, %v4508, %v3231
      %v4552 = vsel %vm4412, %v4511, %v3232
      %v4554 = vsel %vm4412, %v4514, %v3233
      %v4556 = vsel %vm4412, %v4517, %v3234
      %v4558 = vsel %vm4412, %v4520, %v3235
      %v4560 = vsel %vm4412, %v4523, %v3236
      %v4562 = vsel %vm4412, %v4526, %v3237
      %v4564 = vsel %vm4412, %v4529, %v3238
      %v4566 = vsel %vm4412, %v4532, %v3239
      %v4568 = vsel %vm4447, %v4534, %v3323
      %v4570 = vsel %vm4447, %v4536, %v3357
      %v4572 = vsel %vm4447, %v4538, %v3358
      %v4574 = vsel %vm4447, %v4540, %v3359
      %v4576 = vsel %vm4447, %v4542, %v3360
      %v4578 = vsel %vm4447, %v4544, %v3361
      %v4580 = vsel %vm4447, %v4546, %v3362
      %v4582 = vsel %vm4447, %v4548, %v3363
      %v4584 = vsel %vm4447, %v4550, %v3364
      %v4586 = vsel %vm4447, %v4552, %v3365
      %v4588 = vsel %vm4447, %v4554, %v3366
      %v4590 = vsel %vm4447, %v4556, %v3367
      %v4592 = vsel %vm4447, %v4558, %v3368
      %v4594 = vsel %vm4447, %v4560, %v3369
      %v4596 = vsel %vm4447, %v4562, %v3370
      %v4598 = vsel %vm4447, %v4564, %v3371
      %v4600 = vsel %vm4447, %v4566, %v3372
      %v4603 = vsel %vm4360, %v3454, %v3516
      %v4606 = vsel %vm4360, %v3488, %v3524
      %v4609 = vsel %vm4360, %v3489, %v3523
      %v4612 = vsel %vm4360, %v3490, %v3525
      %v4615 = vsel %vm4360, %v3491, %v3533
      %v4618 = vsel %vm4360, %v3492, %v3541
      %v4621 = vsel %vm4360, %v3493, %v3540
      %v4624 = vsel %vm4360, %v3494, %v3542
      %v4627 = vsel %vm4360, %v3495, %v3550
      %v4630 = vsel %vm4360, %v3496, %v3558
      %v4633 = vsel %vm4360, %v3497, %v3557
      %v4636 = vsel %vm4360, %v3498, %v3559
      %v4639 = vsel %vm4360, %v3499, %v3567
      %v4642 = vsel %vm4360, %v3500, %v3575
      %v4645 = vsel %vm4360, %v3501, %v3574
      %v4648 = vsel %vm4360, %v3502, %v3576
      %v4651 = vsel %vm4360, %v3503, %v3584
      %v4653 = vsel %vm4412, %v4603, %v3700
      %v4655 = vsel %vm4412, %v4606, %v3701
      %v4657 = vsel %vm4412, %v4609, %v3702
      %v4659 = vsel %vm4412, %v4612, %v3703
      %v4661 = vsel %vm4412, %v4615, %v3704
      %v4663 = vsel %vm4412, %v4618, %v3705
      %v4665 = vsel %vm4412, %v4621, %v3706
      %v4667 = vsel %vm4412, %v4624, %v3707
      %v4669 = vsel %vm4412, %v4627, %v3708
      %v4671 = vsel %vm4412, %v4630, %v3709
      %v4673 = vsel %vm4412, %v4633, %v3710
      %v4675 = vsel %vm4412, %v4636, %v3711
      %v4677 = vsel %vm4412, %v4639, %v3712
      %v4679 = vsel %vm4412, %v4642, %v3713
      %v4681 = vsel %vm4412, %v4645, %v3714
      %v4683 = vsel %vm4412, %v4648, %v3715
      %v4685 = vsel %vm4412, %v4651, %v3699
      %v4687 = vsel %vm4447, %v4653, %v3832
      %v4689 = vsel %vm4447, %v4655, %v3833
      %v4691 = vsel %vm4447, %v4657, %v3834
      %v4693 = vsel %vm4447, %v4659, %v3835
      %v4695 = vsel %vm4447, %v4661, %v3836
      %v4697 = vsel %vm4447, %v4663, %v3837
      %v4699 = vsel %vm4447, %v4665, %v3838
      %v4701 = vsel %vm4447, %v4667, %v3839
      %v4703 = vsel %vm4447, %v4669, %v3840
      %v4705 = vsel %vm4447, %v4671, %v3841
      %v4707 = vsel %vm4447, %v4673, %v3842
      %v4709 = vsel %vm4447, %v4675, %v3843
      %v4711 = vsel %vm4447, %v4677, %v3844
      %v4713 = vsel %vm4447, %v4679, %v3845
      %v4715 = vsel %vm4447, %v4681, %v3846
      %v4717 = vsel %vm4447, %v4683, %v3847
      %v4719 = vsel %vm4447, %v4685, %v3831
      %v4722 = vsel %vm4360, %v3962, %v4051
      %v4725 = vsel %vm4360, %v3963, %v4082
      %v4728 = vsel %vm4360, %v3964, %v4083
      %v4731 = vsel %vm4360, %v3965, %v4084
      %v4734 = vsel %vm4360, %v3966, %v4085
      %v4737 = vsel %vm4360, %v3967, %v4086
      %v4740 = vsel %vm4360, %v3968, %v4087
      %v4743 = vsel %vm4360, %v3969, %v4088
      %v4746 = vsel %vm4360, %v3970, %v4089
      %v4749 = vsel %vm4360, %v3971, %v4090
      %v4752 = vsel %vm4360, %v3972, %v4091
      %v4755 = vsel %vm4360, %v3973, %v4092
      %v4758 = vsel %vm4360, %v3974, %v4093
      %v4761 = vsel %vm4360, %v3975, %v4094
      %v4764 = vsel %vm4360, %v3976, %v4095
      %v4767 = vsel %vm4360, %v3977, %v4096
      %v4770 = vsel %vm4360, %v3961, %v4081
      %v4772 = vsel %vm4412, %v4722, %v4179
      %v4774 = vsel %vm4412, %v4725, %v4212
      %v4776 = vsel %vm4412, %v4728, %v4213
      %v4778 = vsel %vm4412, %v4731, %v4214
      %v4780 = vsel %vm4412, %v4734, %v4215
      %v4782 = vsel %vm4412, %v4737, %v4216
      %v4784 = vsel %vm4412, %v4740, %v4217
      %v4786 = vsel %vm4412, %v4743, %v4218
      %v4788 = vsel %vm4412, %v4746, %v4219
      %v4790 = vsel %vm4412, %v4749, %v4220
      %v4792 = vsel %vm4412, %v4752, %v4221
      %v4794 = vsel %vm4412, %v4755, %v4222
      %v4796 = vsel %vm4412, %v4758, %v4223
      %v4798 = vsel %vm4412, %v4761, %v4224
      %v4800 = vsel %vm4412, %v4764, %v4225
      %v4802 = vsel %vm4412, %v4767, %v4226
      %v4804 = vsel %vm4412, %v4770, %v4227
      %v4806 = vsel %vm4447, %v4772, %v4311
      %v4808 = vsel %vm4447, %v4774, %v4344
      %v4810 = vsel %vm4447, %v4776, %v4345
      %v4812 = vsel %vm4447, %v4778, %v4346
      %v4814 = vsel %vm4447, %v4780, %v4347
      %v4816 = vsel %vm4447, %v4782, %v4348
      %v4818 = vsel %vm4447, %v4784, %v4349
      %v4820 = vsel %vm4447, %v4786, %v4350
      %v4822 = vsel %vm4447, %v4788, %v4351
      %v4824 = vsel %vm4447, %v4790, %v4352
      %v4826 = vsel %vm4447, %v4792, %v4353
      %v4828 = vsel %vm4447, %v4794, %v4354
      %v4830 = vsel %vm4447, %v4796, %v4355
      %v4832 = vsel %vm4447, %v4798, %v4356
      %v4834 = vsel %vm4447, %v4800, %v4357
      %v4836 = vsel %vm4447, %v4802, %v4358
      %v4838 = vsel %vm4447, %v4804, %v4359
      %v4844 = vcombine.high %v2324, %v2324
      %v4846 = vunpack.c.l.s4 1983009808
      %v4847 = vunpack.c.0.s8 %v4846
      %v4848 = vlaneseq
      %v4849 = vshrl.u32 %v4848, 7
      %v4850 = vsub.s32 %v4847, %v4849
      %v4851 = vrot.slane %v2324, %v4850
      %v4853 = vunpack.c.l.s4 1983009808
      %v4854 = vunpack.c.0.s8 %v4853
      %v4855 = vlaneseq
      %v4856 = vshrl.u32 %v4855, 7
      %v4857 = vsub.s32 %v4854, %v4856
      %v4858 = vrot.slane %v4844, %v4857
      %v4859 = vcombine.high %v4851, %v4851
      %v4860 = vcombine.high %v4858, %v4858
      %v4861 = vcombine.high %v2325, %v2325
      %v4863 = vunpack.c.l.s4 1983009808
      %v4864 = vunpack.c.0.s8 %v4863
      %v4865 = vlaneseq
      %v4866 = vshrl.u32 %v4865, 7
      %v4867 = vsub.s32 %v4864, %v4866
      %v4868 = vrot.slane %v2325, %v4867
      %v4870 = vunpack.c.l.s4 1983009808
      %v4871 = vunpack.c.0.s8 %v4870
      %v4872 = vlaneseq
      %v4873 = vshrl.u32 %v4872, 7
      %v4874 = vsub.s32 %v4871, %v4873
      %v4875 = vrot.slane %v4861, %v4874
      %v4876 = vcombine.high %v4868, %v4868
      %v4877 = vcombine.high %v4875, %v4875
      %v4878 = vcombine.high %v2326, %v2326
      %v4880 = vunpack.c.l.s4 1983009808
      %v4881 = vunpack.c.0.s8 %v4880
      %v4882 = vlaneseq
      %v4883 = vshrl.u32 %v4882, 7
      %v4884 = vsub.s32 %v4881, %v4883
      %v4885 = vrot.slane %v2326, %v4884
      %v4887 = vunpack.c.l.s4 1983009808
      %v4888 = vunpack.c.0.s8 %v4887
      %v4889 = vlaneseq
      %v4890 = vshrl.u32 %v4889, 7
      %v4891 = vsub.s32 %v4888, %v4890
      %v4892 = vrot.slane %v4878, %v4891
      %v4893 = vcombine.high %v4885, %v4885
      %v4894 = vcombine.high %v4892, %v4892
      %v4895 = vcombine.high %v2327, %v2327
      %v4897 = vunpack.c.l.s4 1983009808
      %v4898 = vunpack.c.0.s8 %v4897
      %v4899 = vlaneseq
      %v4900 = vshrl.u32 %v4899, 7
      %v4901 = vsub.s32 %v4898, %v4900
      %v4902 = vrot.slane %v2327, %v4901
      %v4904 = vunpack.c.l.s4 1983009808
      %v4905 = vunpack.c.0.s8 %v4904
      %v4906 = vlaneseq
      %v4907 = vshrl.u32 %v4906, 7
      %v4908 = vsub.s32 %v4905, %v4907
      %v4909 = vrot.slane %v4895, %v4908
      %v4910 = vcombine.high %v4902, %v4902
      %v4911 = vcombine.high %v4909, %v4909
      %v4913 = vunpack.c.l.s4 1983009808
      %v4914 = vunpack.c.0.s8 %v4913
      %v4915 = vlaneseq
      %v4916 = vshrl.u32 %v4915, 7
      %v4917 = vsub.s32 %v4914, %v4916
      %v4918 = vrot.slane %v2328, %v4917
      %v4924 = vcombine.low %v2329, %v2329
      %v4926 = vunpack.c.l.s4 1983009808
      %v4927 = vunpack.c.0.s8 %v4926
      %v4928 = vlaneseq
      %v4929 = vshrl.u32 %v4928, 7
      %v4930 = vsub.s32 %v4927, %v4929
      %v4931 = vrot.slane %v4924, %v4930
      %v4933 = vunpack.c.l.s4 1983009808
      %v4934 = vunpack.c.0.s8 %v4933
      %v4935 = vlaneseq
      %v4936 = vshrl.u32 %v4935, 7
      %v4937 = vsub.s32 %v4934, %v4936
      %v4938 = vrot.slane %v2329, %v4937
      %v4939 = vcombine.high %v4931, %v4931
      %v4940 = vcombine.high %v4938, %v4938
      %v4941 = vcombine.low %v2330, %v2330
      %v4943 = vunpack.c.l.s4 1983009808
      %v4944 = vunpack.c.0.s8 %v4943
      %v4945 = vlaneseq
      %v4946 = vshrl.u32 %v4945, 7
      %v4947 = vsub.s32 %v4944, %v4946
      %v4948 = vrot.slane %v4941, %v4947
      %v4950 = vunpack.c.l.s4 1983009808
      %v4951 = vunpack.c.0.s8 %v4950
      %v4952 = vlaneseq
      %v4953 = vshrl.u32 %v4952, 7
      %v4954 = vsub.s32 %v4951, %v4953
      %v4955 = vrot.slane %v2330, %v4954
      %v4956 = vcombine.high %v4948, %v4948
      %v4957 = vcombine.high %v4955, %v4955
      %v4958 = vcombine.low %v2331, %v2331
      %v4960 = vunpack.c.l.s4 1983009808
      %v4961 = vunpack.c.0.s8 %v4960
      %v4962 = vlaneseq
      %v4963 = vshrl.u32 %v4962, 7
      %v4964 = vsub.s32 %v4961, %v4963
      %v4965 = vrot.slane %v4958, %v4964
      %v4967 = vunpack.c.l.s4 1983009808
      %v4968 = vunpack.c.0.s8 %v4967
      %v4969 = vlaneseq
      %v4970 = vshrl.u32 %v4969, 7
      %v4971 = vsub.s32 %v4968, %v4970
      %v4972 = vrot.slane %v2331, %v4971
      %v4973 = vcombine.high %v4965, %v4965
      %v4974 = vcombine.high %v4972, %v4972
      %v4975 = vcombine.low %v2332, %v2332
      %v4977 = vunpack.c.l.s4 1983009808
      %v4978 = vunpack.c.0.s8 %v4977
      %v4979 = vlaneseq
      %v4980 = vshrl.u32 %v4979, 7
      %v4981 = vsub.s32 %v4978, %v4980
      %v4982 = vrot.slane %v4975, %v4981
      %v4984 = vunpack.c.l.s4 1983009808
      %v4985 = vunpack.c.0.s8 %v4984
      %v4986 = vlaneseq
      %v4987 = vshrl.u32 %v4986, 7
      %v4988 = vsub.s32 %v4985, %v4987
      %v4989 = vrot.slane %v2332, %v4988
      %v4990 = vcombine.high %v4982, %v4982
      %v4991 = vcombine.high %v4989, %v4989
      %v4992 = vcombine.low %v2333, %v2333
      %v4994 = vunpack.c.l.s4 1983009808
      %v4995 = vunpack.c.0.s8 %v4994
      %v4996 = vlaneseq
      %v4997 = vshrl.u32 %v4996, 7
      %v4998 = vsub.s32 %v4995, %v4997
      %v4999 = vrot.slane %v4992, %v4998
      %5000 = vrot.lane.b32.xlu0 %v4931, 127
      %v5001 = vpop.permute.xlu0 %5000
      %5002 = vrot.lane.b32.xlu0 %v4939, 127
      %v5003 = vpop.permute.xlu0 %5002
      %5004 = vrot.lane.b32.xlu0 %v4938, 127
      %v5005 = vpop.permute.xlu0 %5004
      %5006 = vrot.lane.b32.xlu0 %v4940, 127
      %v5007 = vpop.permute.xlu0 %5006
      %5008 = vrot.lane.b32.xlu0 %v4948, 127
      %v5009 = vpop.permute.xlu0 %5008
      %5010 = vrot.lane.b32.xlu0 %v4956, 127
      %v5011 = vpop.permute.xlu0 %5010
      %5012 = vrot.lane.b32.xlu0 %v4955, 127
      %v5013 = vpop.permute.xlu0 %5012
      %5014 = vrot.lane.b32.xlu0 %v4957, 127
      %v5015 = vpop.permute.xlu0 %5014
      %5016 = vrot.lane.b32.xlu0 %v4965, 127
      %v5017 = vpop.permute.xlu0 %5016
      %5018 = vrot.lane.b32.xlu0 %v4973, 127
      %v5019 = vpop.permute.xlu0 %5018
      %5020 = vrot.lane.b32.xlu0 %v4972, 127
      %v5021 = vpop.permute.xlu0 %5020
      %5022 = vrot.lane.b32.xlu0 %v4974, 127
      %v5023 = vpop.permute.xlu0 %5022
      %5024 = vrot.lane.b32.xlu0 %v4982, 127
      %v5025 = vpop.permute.xlu0 %5024
      %5026 = vrot.lane.b32.xlu0 %v4990, 127
      %v5027 = vpop.permute.xlu0 %5026
      %5028 = vrot.lane.b32.xlu0 %v4989, 127
      %v5029 = vpop.permute.xlu0 %5028
      %5030 = vrot.lane.b32.xlu0 %v4991, 127
      %v5031 = vpop.permute.xlu0 %5030
      %5032 = vrot.lane.b32.xlu0 %v4999, 127
      %v5033 = vpop.permute.xlu0 %5032
      %v5034 = vsel %vm1197, %v5001, %v5003
      %v5035 = vsel %vm1197, %v5003, %v5005
      %v5036 = vsel %vm1197, %v5005, %v5007
      %v5037 = vsel %vm1197, %v5007, %v5009
      %v5038 = vsel %vm1197, %v5009, %v5011
      %v5039 = vsel %vm1197, %v5011, %v5013
      %v5040 = vsel %vm1197, %v5013, %v5015
      %v5041 = vsel %vm1197, %v5015, %v5017
      %v5042 = vsel %vm1197, %v5017, %v5019
      %v5043 = vsel %vm1197, %v5019, %v5021
      %v5044 = vsel %vm1197, %v5021, %v5023
      %v5045 = vsel %vm1197, %v5023, %v5025
      %v5046 = vsel %vm1197, %v5025, %v5027
      %v5047 = vsel %vm1197, %v5027, %v5029
      %v5048 = vsel %vm1197, %v5029, %v5031
      %v5049 = vsel %vm1197, %v5031, %v5033
      %v5055 = vcombine.high %v2336, %v2336
      %v5057 = vunpack.c.l.s4 1983009808
      %v5058 = vunpack.c.0.s8 %v5057
      %v5059 = vlaneseq
      %v5060 = vshrl.u32 %v5059, 7
      %v5061 = vsub.s32 %v5058, %v5060
      %v5062 = vrot.slane %v2336, %v5061
      %v5064 = vunpack.c.l.s4 1983009808
      %v5065 = vunpack.c.0.s8 %v5064
      %v5066 = vlaneseq
      %v5067 = vshrl.u32 %v5066, 7
      %v5068 = vsub.s32 %v5065, %v5067
      %v5069 = vrot.slane %v5055, %v5068
      %v5070 = vcombine.low %v5062, %v5062
      %v5071 = vcombine.low %v5069, %v5069
      %v5072 = vcombine.high %v2337, %v2337
      %v5074 = vunpack.c.l.s4 1983009808
      %v5075 = vunpack.c.0.s8 %v5074
      %v5076 = vlaneseq
      %v5077 = vshrl.u32 %v5076, 7
      %v5078 = vsub.s32 %v5075, %v5077
      %v5079 = vrot.slane %v2337, %v5078
      %v5081 = vunpack.c.l.s4 1983009808
      %v5082 = vunpack.c.0.s8 %v5081
      %v5083 = vlaneseq
      %v5084 = vshrl.u32 %v5083, 7
      %v5085 = vsub.s32 %v5082, %v5084
      %v5086 = vrot.slane %v5072, %v5085
      %v5087 = vcombine.low %v5079, %v5079
      %v5088 = vcombine.low %v5086, %v5086
      %v5089 = vcombine.high %v2338, %v2338
      %v5091 = vunpack.c.l.s4 1983009808
      %v5092 = vunpack.c.0.s8 %v5091
      %v5093 = vlaneseq
      %v5094 = vshrl.u32 %v5093, 7
      %v5095 = vsub.s32 %v5092, %v5094
      %v5096 = vrot.slane %v2338, %v5095
      %v5098 = vunpack.c.l.s4 1983009808
      %v5099 = vunpack.c.0.s8 %v5098
      %v5100 = vlaneseq
      %v5101 = vshrl.u32 %v5100, 7
      %v5102 = vsub.s32 %v5099, %v5101
      %v5103 = vrot.slane %v5089, %v5102
      %v5104 = vcombine.low %v5096, %v5096
      %v5105 = vcombine.low %v5103, %v5103
      %v5106 = vcombine.high %v2339, %v2339
      %v5108 = vunpack.c.l.s4 1983009808
      %v5109 = vunpack.c.0.s8 %v5108
      %v5110 = vlaneseq
      %v5111 = vshrl.u32 %v5110, 7
      %v5112 = vsub.s32 %v5109, %v5111
      %v5113 = vrot.slane %v2339, %v5112
      %v5115 = vunpack.c.l.s4 1983009808
      %v5116 = vunpack.c.0.s8 %v5115
      %v5117 = vlaneseq
      %v5118 = vshrl.u32 %v5117, 7
      %v5119 = vsub.s32 %v5116, %v5118
      %v5120 = vrot.slane %v5106, %v5119
      %v5121 = vcombine.low %v5113, %v5113
      %v5122 = vcombine.low %v5120, %v5120
      %v5124 = vunpack.c.l.s4 1983009808
      %v5125 = vunpack.c.0.s8 %v5124
      %v5126 = vlaneseq
      %v5127 = vshrl.u32 %v5126, 7
      %v5128 = vsub.s32 %v5125, %v5127
      %v5129 = vrot.slane %v2340, %v5128
      %v5130 = vcombine.low %v5129, %v5129
      %5131 = vrot.lane.b32.xlu0 %v5070, 33
      %v5132 = vpop.permute.xlu0 %5131
      %5133 = vrot.lane.b32.xlu0 %v5062, 33
      %v5134 = vpop.permute.xlu0 %5133
      %5135 = vrot.lane.b32.xlu0 %v5071, 33
      %v5136 = vpop.permute.xlu0 %5135
      %5137 = vrot.lane.b32.xlu0 %v5069, 33
      %v5138 = vpop.permute.xlu0 %5137
      %5139 = vrot.lane.b32.xlu0 %v5087, 33
      %v5140 = vpop.permute.xlu0 %5139
      %5141 = vrot.lane.b32.xlu0 %v5079, 33
      %v5142 = vpop.permute.xlu0 %5141
      %5143 = vrot.lane.b32.xlu0 %v5088, 33
      %v5144 = vpop.permute.xlu0 %5143
      %5145 = vrot.lane.b32.xlu0 %v5086, 33
      %v5146 = vpop.permute.xlu0 %5145
      %5147 = vrot.lane.b32.xlu0 %v5104, 33
      %v5148 = vpop.permute.xlu0 %5147
      %5149 = vrot.lane.b32.xlu0 %v5096, 33
      %v5150 = vpop.permute.xlu0 %5149
      %5151 = vrot.lane.b32.xlu0 %v5105, 33
      %v5152 = vpop.permute.xlu0 %5151
      %5153 = vrot.lane.b32.xlu0 %v5103, 33
      %v5154 = vpop.permute.xlu0 %5153
      %5155 = vrot.lane.b32.xlu0 %v5121, 33
      %v5156 = vpop.permute.xlu0 %5155
      %5157 = vrot.lane.b32.xlu0 %v5113, 33
      %v5158 = vpop.permute.xlu0 %5157
      %5159 = vrot.lane.b32.xlu0 %v5122, 33
      %v5160 = vpop.permute.xlu0 %5159
      %5161 = vrot.lane.b32.xlu0 %v5120, 33
      %v5162 = vpop.permute.xlu0 %5161
      %5163 = vrot.lane.b32.xlu0 %v5130, 33
      %v5164 = vpop.permute.xlu0 %5163
      %vm5165 = vcmask 269312
      %v5166 = vsel %vm5165, %v5132, %v5134
      %v5167 = vsel %vm5165, %v5134, %v5136
      %v5168 = vsel %vm5165, %v5136, %v5138
      %v5169 = vsel %vm5165, %v5138, %v5140
      %v5170 = vsel %vm5165, %v5140, %v5142
      %v5171 = vsel %vm5165, %v5142, %v5144
      %v5172 = vsel %vm5165, %v5144, %v5146
      %v5173 = vsel %vm5165, %v5146, %v5148
      %v5174 = vsel %vm5165, %v5148, %v5150
      %v5175 = vsel %vm5165, %v5150, %v5152
      %v5176 = vsel %vm5165, %v5152, %v5154
      %v5177 = vsel %vm5165, %v5154, %v5156
      %v5178 = vsel %vm5165, %v5156, %v5158
      %v5179 = vsel %vm5165, %v5158, %v5160
      %v5180 = vsel %vm5165, %v5160, %v5162
      %v5181 = vsel %vm5165, %v5162, %v5164
      %v5187 = vcombine.low %v2341, %v2341
      %v5189 = vunpack.c.l.s4 1983009808
      %v5190 = vunpack.c.0.s8 %v5189
      %v5191 = vlaneseq
      %v5192 = vshrl.u32 %v5191, 7
      %v5193 = vsub.s32 %v5190, %v5192
      %v5194 = vrot.slane %v5187, %v5193
      %v5196 = vunpack.c.l.s4 1983009808
      %v5197 = vunpack.c.0.s8 %v5196
      %v5198 = vlaneseq
      %v5199 = vshrl.u32 %v5198, 7
      %v5200 = vsub.s32 %v5197, %v5199
      %v5201 = vrot.slane %v2341, %v5200
      %v5202 = vcombine.low %v5194, %v5194
      %v5203 = vcombine.low %v5201, %v5201
      %v5204 = vcombine.low %v2342, %v2342
      %v5206 = vunpack.c.l.s4 1983009808
      %v5207 = vunpack.c.0.s8 %v5206
      %v5208 = vlaneseq
      %v5209 = vshrl.u32 %v5208, 7
      %v5210 = vsub.s32 %v5207, %v5209
      %v5211 = vrot.slane %v5204, %v5210
      %v5213 = vunpack.c.l.s4 1983009808
      %v5214 = vunpack.c.0.s8 %v5213
      %v5215 = vlaneseq
      %v5216 = vshrl.u32 %v5215, 7
      %v5217 = vsub.s32 %v5214, %v5216
      %v5218 = vrot.slane %v2342, %v5217
      %v5219 = vcombine.low %v5211, %v5211
      %v5220 = vcombine.low %v5218, %v5218
      %v5221 = vcombine.low %v2343, %v2343
      %v5223 = vunpack.c.l.s4 1983009808
      %v5224 = vunpack.c.0.s8 %v5223
      %v5225 = vlaneseq
      %v5226 = vshrl.u32 %v5225, 7
      %v5227 = vsub.s32 %v5224, %v5226
      %v5228 = vrot.slane %v5221, %v5227
      %v5230 = vunpack.c.l.s4 1983009808
      %v5231 = vunpack.c.0.s8 %v5230
      %v5232 = vlaneseq
      %v5233 = vshrl.u32 %v5232, 7
      %v5234 = vsub.s32 %v5231, %v5233
      %v5235 = vrot.slane %v2343, %v5234
      %v5236 = vcombine.low %v5228, %v5228
      %v5237 = vcombine.low %v5235, %v5235
      %v5238 = vcombine.low %v2344, %v2344
      %v5240 = vunpack.c.l.s4 1983009808
      %v5241 = vunpack.c.0.s8 %v5240
      %v5242 = vlaneseq
      %v5243 = vshrl.u32 %v5242, 7
      %v5244 = vsub.s32 %v5241, %v5243
      %v5245 = vrot.slane %v5238, %v5244
      %v5247 = vunpack.c.l.s4 1983009808
      %v5248 = vunpack.c.0.s8 %v5247
      %v5249 = vlaneseq
      %v5250 = vshrl.u32 %v5249, 7
      %v5251 = vsub.s32 %v5248, %v5250
      %v5252 = vrot.slane %v2344, %v5251
      %v5253 = vcombine.low %v5245, %v5245
      %v5254 = vcombine.low %v5252, %v5252
      %v5255 = vcombine.low %v2345, %v2345
      %v5257 = vunpack.c.l.s4 1983009808
      %v5258 = vunpack.c.0.s8 %v5257
      %v5259 = vlaneseq
      %v5260 = vshrl.u32 %v5259, 7
      %v5261 = vsub.s32 %v5258, %v5260
      %v5262 = vrot.slane %v5255, %v5261
      %v5263 = vcombine.low %v5262, %v5262
      %5264 = vrot.lane.b32.xlu0 %v5202, 32
      %v5265 = vpop.permute.xlu0 %5264
      %5266 = vrot.lane.b32.xlu0 %v5194, 32
      %v5267 = vpop.permute.xlu0 %5266
      %5268 = vrot.lane.b32.xlu0 %v5203, 32
      %v5269 = vpop.permute.xlu0 %5268
      %5270 = vrot.lane.b32.xlu0 %v5201, 32
      %v5271 = vpop.permute.xlu0 %5270
      %5272 = vrot.lane.b32.xlu0 %v5219, 32
      %v5273 = vpop.permute.xlu0 %5272
      %5274 = vrot.lane.b32.xlu0 %v5211, 32
      %v5275 = vpop.permute.xlu0 %5274
      %5276 = vrot.lane.b32.xlu0 %v5220, 32
      %v5277 = vpop.permute.xlu0 %5276
      %5278 = vrot.lane.b32.xlu0 %v5218, 32
      %v5279 = vpop.permute.xlu0 %5278
      %5280 = vrot.lane.b32.xlu0 %v5236, 32
      %v5281 = vpop.permute.xlu0 %5280
      %5282 = vrot.lane.b32.xlu0 %v5228, 32
      %v5283 = vpop.permute.xlu0 %5282
      %5284 = vrot.lane.b32.xlu0 %v5237, 32
      %v5285 = vpop.permute.xlu0 %5284
      %5286 = vrot.lane.b32.xlu0 %v5235, 32
      %v5287 = vpop.permute.xlu0 %5286
      %5288 = vrot.lane.b32.xlu0 %v5253, 32
      %v5289 = vpop.permute.xlu0 %5288
      %5290 = vrot.lane.b32.xlu0 %v5245, 32
      %v5291 = vpop.permute.xlu0 %5290
      %5292 = vrot.lane.b32.xlu0 %v5254, 32
      %v5293 = vpop.permute.xlu0 %5292
      %5294 = vrot.lane.b32.xlu0 %v5252, 32
      %v5295 = vpop.permute.xlu0 %5294
      %5296 = vrot.lane.b32.xlu0 %v5263, 32
      %v5297 = vpop.permute.xlu0 %5296
      %vm5298 = vcmask 261120
      %v5299 = vsel %vm5298, %v5265, %v5267
      %v5300 = vsel %vm5298, %v5267, %v5269
      %v5301 = vsel %vm5298, %v5269, %v5271
      %v5302 = vsel %vm5298, %v5271, %v5273
      %v5303 = vsel %vm5298, %v5273, %v5275
      %v5304 = vsel %vm5298, %v5275, %v5277
      %v5305 = vsel %vm5298, %v5277, %v5279
      %v5306 = vsel %vm5298, %v5279, %v5281
      %v5307 = vsel %vm5298, %v5281, %v5283
      %v5308 = vsel %vm5298, %v5283, %v5285
      %v5309 = vsel %vm5298, %v5285, %v5287
      %v5310 = vsel %vm5298, %v5287, %v5289
      %v5311 = vsel %vm5298, %v5289, %v5291
      %v5312 = vsel %vm5298, %v5291, %v5293
      %v5313 = vsel %vm5298, %v5293, %v5295
      %v5314 = vsel %vm5298, %v5295, %v5297
      %v5320 = vcombine.high %v2346, %v2346
      %v5322 = vunpack.c.l.s4 1983009808
      %v5323 = vunpack.c.0.s8 %v5322
      %v5324 = vlaneseq
      %v5325 = vshrl.u32 %v5324, 7
      %v5326 = vsub.s32 %v5323, %v5325
      %v5327 = vrot.slane %v2346, %v5326
      %v5329 = vunpack.c.l.s4 1983009808
      %v5330 = vunpack.c.0.s8 %v5329
      %v5331 = vlaneseq
      %v5332 = vshrl.u32 %v5331, 7
      %v5333 = vsub.s32 %v5330, %v5332
      %v5334 = vrot.slane %v5320, %v5333
      %v5335 = vcombine.high %v5327, %v5327
      %v5336 = vcombine.high %v5334, %v5334
      %v5337 = vcombine.high %v2347, %v2347
      %v5339 = vunpack.c.l.s4 1983009808
      %v5340 = vunpack.c.0.s8 %v5339
      %v5341 = vlaneseq
      %v5342 = vshrl.u32 %v5341, 7
      %v5343 = vsub.s32 %v5340, %v5342
      %v5344 = vrot.slane %v2347, %v5343
      %v5346 = vunpack.c.l.s4 1983009808
      %v5347 = vunpack.c.0.s8 %v5346
      %v5348 = vlaneseq
      %v5349 = vshrl.u32 %v5348, 7
      %v5350 = vsub.s32 %v5347, %v5349
      %v5351 = vrot.slane %v5337, %v5350
      %v5352 = vcombine.high %v5344, %v5344
      %v5353 = vcombine.high %v5351, %v5351
      %v5354 = vcombine.high %v2348, %v2348
      %v5356 = vunpack.c.l.s4 1983009808
      %v5357 = vunpack.c.0.s8 %v5356
      %v5358 = vlaneseq
      %v5359 = vshrl.u32 %v5358, 7
      %v5360 = vsub.s32 %v5357, %v5359
      %v5361 = vrot.slane %v2348, %v5360
      %v5363 = vunpack.c.l.s4 1983009808
      %v5364 = vunpack.c.0.s8 %v5363
      %v5365 = vlaneseq
      %v5366 = vshrl.u32 %v5365, 7
      %v5367 = vsub.s32 %v5364, %v5366
      %v5368 = vrot.slane %v5354, %v5367
      %v5369 = vcombine.high %v5361, %v5361
      %v5370 = vcombine.high %v5368, %v5368
      %v5371 = vcombine.high %v2349, %v2349
      %v5373 = vunpack.c.l.s4 1983009808
      %v5374 = vunpack.c.0.s8 %v5373
      %v5375 = vlaneseq
      %v5376 = vshrl.u32 %v5375, 7
      %v5377 = vsub.s32 %v5374, %v5376
      %v5378 = vrot.slane %v2349, %v5377
      %v5380 = vunpack.c.l.s4 1983009808
      %v5381 = vunpack.c.0.s8 %v5380
      %v5382 = vlaneseq
      %v5383 = vshrl.u32 %v5382, 7
      %v5384 = vsub.s32 %v5381, %v5383
      %v5385 = vrot.slane %v5371, %v5384
      %v5386 = vcombine.high %v5378, %v5378
      %v5387 = vcombine.high %v5385, %v5385
      %v5389 = vunpack.c.l.s4 1983009808
      %v5390 = vunpack.c.0.s8 %v5389
      %v5391 = vlaneseq
      %v5392 = vshrl.u32 %v5391, 7
      %v5393 = vsub.s32 %v5390, %v5392
      %v5394 = vrot.slane %v2350, %v5393
      %5395 = vrot.lane.b32.xlu0 %v5327, 31
      %v5396 = vpop.permute.xlu0 %5395
      %5397 = vrot.lane.b32.xlu0 %v5335, 31
      %v5398 = vpop.permute.xlu0 %5397
      %5399 = vrot.lane.b32.xlu0 %v5334, 31
      %v5400 = vpop.permute.xlu0 %5399
      %5401 = vrot.lane.b32.xlu0 %v5336, 31
      %v5402 = vpop.permute.xlu0 %5401
      %5403 = vrot.lane.b32.xlu0 %v5344, 31
      %v5404 = vpop.permute.xlu0 %5403
      %5405 = vrot.lane.b32.xlu0 %v5352, 31
      %v5406 = vpop.permute.xlu0 %5405
      %5407 = vrot.lane.b32.xlu0 %v5351, 31
      %v5408 = vpop.permute.xlu0 %5407
      %5409 = vrot.lane.b32.xlu0 %v5353, 31
      %v5410 = vpop.permute.xlu0 %5409
      %5411 = vrot.lane.b32.xlu0 %v5361, 31
      %v5412 = vpop.permute.xlu0 %5411
      %5413 = vrot.lane.b32.xlu0 %v5369, 31
      %v5414 = vpop.permute.xlu0 %5413
      %5415 = vrot.lane.b32.xlu0 %v5368, 31
      %v5416 = vpop.permute.xlu0 %5415
      %5417 = vrot.lane.b32.xlu0 %v5370, 31
      %v5418 = vpop.permute.xlu0 %5417
      %5419 = vrot.lane.b32.xlu0 %v5378, 31
      %v5420 = vpop.permute.xlu0 %5419
      %5421 = vrot.lane.b32.xlu0 %v5386, 31
      %v5422 = vpop.permute.xlu0 %5421
      %5423 = vrot.lane.b32.xlu0 %v5385, 31
      %v5424 = vpop.permute.xlu0 %5423
      %5425 = vrot.lane.b32.xlu0 %v5387, 31
      %v5426 = vpop.permute.xlu0 %5425
      %5427 = vrot.lane.b32.xlu0 %v5394, 31
      %v5428 = vpop.permute.xlu0 %5427
      %vm5429 = vcmask 252928
      %v5430 = vsel %vm5429, %v5396, %v5398
      %v5431 = vsel %vm5429, %v5398, %v5400
      %v5432 = vsel %vm5429, %v5400, %v5402
      %v5433 = vsel %vm5429, %v5402, %v5404
      %v5434 = vsel %vm5429, %v5404, %v5406
      %v5435 = vsel %vm5429, %v5406, %v5408
      %v5436 = vsel %vm5429, %v5408, %v5410
      %v5437 = vsel %vm5429, %v5410, %v5412
      %v5438 = vsel %vm5429, %v5412, %v5414
      %v5439 = vsel %vm5429, %v5414, %v5416
      %v5440 = vsel %vm5429, %v5416, %v5418
      %v5441 = vsel %vm5429, %v5418, %v5420
      %v5442 = vsel %vm5429, %v5420, %v5422
      %v5443 = vsel %vm5429, %v5422, %v5424
      %v5444 = vsel %vm5429, %v5424, %v5426
      %v5445 = vsel %vm5429, %v5426, %v5428
      %v5451 = vcombine.low %v2351, %v2351
      %v5453 = vunpack.c.l.s4 1983009808
      %v5454 = vunpack.c.0.s8 %v5453
      %v5455 = vlaneseq
      %v5456 = vshrl.u32 %v5455, 7
      %v5457 = vsub.s32 %v5454, %v5456
      %v5458 = vrot.slane %v5451, %v5457
      %v5460 = vunpack.c.l.s4 1983009808
      %v5461 = vunpack.c.0.s8 %v5460
      %v5462 = vlaneseq
      %v5463 = vshrl.u32 %v5462, 7
      %v5464 = vsub.s32 %v5461, %v5463
      %v5465 = vrot.slane %v2351, %v5464
      %v5466 = vcombine.high %v5458, %v5458
      %v5467 = vcombine.high %v5465, %v5465
      %v5468 = vcombine.low %v2352, %v2352
      %v5470 = vunpack.c.l.s4 1983009808
      %v5471 = vunpack.c.0.s8 %v5470
      %v5472 = vlaneseq
      %v5473 = vshrl.u32 %v5472, 7
      %v5474 = vsub.s32 %v5471, %v5473
      %v5475 = vrot.slane %v5468, %v5474
      %v5477 = vunpack.c.l.s4 1983009808
      %v5478 = vunpack.c.0.s8 %v5477
      %v5479 = vlaneseq
      %v5480 = vshrl.u32 %v5479, 7
      %v5481 = vsub.s32 %v5478, %v5480
      %v5482 = vrot.slane %v2352, %v5481
      %v5483 = vcombine.high %v5475, %v5475
      %v5484 = vcombine.high %v5482, %v5482
      %v5485 = vcombine.low %v2353, %v2353
      %v5487 = vunpack.c.l.s4 1983009808
      %v5488 = vunpack.c.0.s8 %v5487
      %v5489 = vlaneseq
      %v5490 = vshrl.u32 %v5489, 7
      %v5491 = vsub.s32 %v5488, %v5490
      %v5492 = vrot.slane %v5485, %v5491
      %v5494 = vunpack.c.l.s4 1983009808
      %v5495 = vunpack.c.0.s8 %v5494
      %v5496 = vlaneseq
      %v5497 = vshrl.u32 %v5496, 7
      %v5498 = vsub.s32 %v5495, %v5497
      %v5499 = vrot.slane %v2353, %v5498
      %v5500 = vcombine.high %v5492, %v5492
      %v5501 = vcombine.high %v5499, %v5499
      %v5502 = vcombine.low %v2354, %v2354
      %v5504 = vunpack.c.l.s4 1983009808
      %v5505 = vunpack.c.0.s8 %v5504
      %v5506 = vlaneseq
      %v5507 = vshrl.u32 %v5506, 7
      %v5508 = vsub.s32 %v5505, %v5507
      %v5509 = vrot.slane %v5502, %v5508
      %v5511 = vunpack.c.l.s4 1983009808
      %v5512 = vunpack.c.0.s8 %v5511
      %v5513 = vlaneseq
      %v5514 = vshrl.u32 %v5513, 7
      %v5515 = vsub.s32 %v5512, %v5514
      %v5516 = vrot.slane %v2354, %v5515
      %v5517 = vcombine.high %v5509, %v5509
      %v5518 = vcombine.high %v5516, %v5516
      %v5519 = vcombine.low %v2355, %v2355
      %v5521 = vunpack.c.l.s4 1983009808
      %v5522 = vunpack.c.0.s8 %v5521
      %v5523 = vlaneseq
      %v5524 = vshrl.u32 %v5523, 7
      %v5525 = vsub.s32 %v5522, %v5524
      %v5526 = vrot.slane %v5519, %v5525
      %5527 = vrot.lane.b32.xlu0 %v5458, 17
      %v5528 = vpop.permute.xlu0 %5527
      %5529 = vrot.lane.b32.xlu0 %v5466, 17
      %v5530 = vpop.permute.xlu0 %5529
      %5531 = vrot.lane.b32.xlu0 %v5465, 17
      %v5532 = vpop.permute.xlu0 %5531
      %5533 = vrot.lane.b32.xlu0 %v5467, 17
      %v5534 = vpop.permute.xlu0 %5533
      %5535 = vrot.lane.b32.xlu0 %v5475, 17
      %v5536 = vpop.permute.xlu0 %5535
      %5537 = vrot.lane.b32.xlu0 %v5483, 17
      %v5538 = vpop.permute.xlu0 %5537
      %5539 = vrot.lane.b32.xlu0 %v5482, 17
      %v5540 = vpop.permute.xlu0 %5539
      %5541 = vrot.lane.b32.xlu0 %v5484, 17
      %v5542 = vpop.permute.xlu0 %5541
      %5543 = vrot.lane.b32.xlu0 %v5492, 17
      %v5544 = vpop.permute.xlu0 %5543
      %5545 = vrot.lane.b32.xlu0 %v5500, 17
      %v5546 = vpop.permute.xlu0 %5545
      %5547 = vrot.lane.b32.xlu0 %v5499, 17
      %v5548 = vpop.permute.xlu0 %5547
      %5549 = vrot.lane.b32.xlu0 %v5501, 17
      %v5550 = vpop.permute.xlu0 %5549
      %5551 = vrot.lane.b32.xlu0 %v5509, 17
      %v5552 = vpop.permute.xlu0 %5551
      %5553 = vrot.lane.b32.xlu0 %v5517, 17
      %v5554 = vpop.permute.xlu0 %5553
      %5555 = vrot.lane.b32.xlu0 %v5516, 17
      %v5556 = vpop.permute.xlu0 %5555
      %5557 = vrot.lane.b32.xlu0 %v5518, 17
      %v5558 = vpop.permute.xlu0 %5557
      %5559 = vrot.lane.b32.xlu0 %v5526, 17
      %v5560 = vpop.permute.xlu0 %5559
      %v5561 = vsel %vm2266, %v5528, %v5530
      %v5562 = vsel %vm2266, %v5530, %v5532
      %v5563 = vsel %vm2266, %v5532, %v5534
      %v5564 = vsel %vm2266, %v5534, %v5536
      %v5565 = vsel %vm2266, %v5536, %v5538
      %v5566 = vsel %vm2266, %v5538, %v5540
      %v5567 = vsel %vm2266, %v5540, %v5542
      %v5568 = vsel %vm2266, %v5542, %v5544
      %v5569 = vsel %vm2266, %v5544, %v5546
      %v5570 = vsel %vm2266, %v5546, %v5548
      %v5571 = vsel %vm2266, %v5548, %v5550
      %v5572 = vsel %vm2266, %v5550, %v5552
      %v5573 = vsel %vm2266, %v5552, %v5554
      %v5574 = vsel %vm2266, %v5554, %v5556
      %v5575 = vsel %vm2266, %v5556, %v5558
      %v5576 = vsel %vm2266, %v5558, %v5560
      %v5578 = vcombine.low %v2885, %v2885
      %v5579 = vcombine.low %v2892, %v2892
      %v5580 = vcombine.low %v2902, %v2902
      %v5581 = vcombine.low %v2909, %v2909
      %v5582 = vcombine.low %v2919, %v2919
      %v5583 = vcombine.low %v2926, %v2926
      %v5584 = vcombine.high %v2356, %v2356
      %v5586 = vunpack.c.l.s4 1983009808
      %v5587 = vunpack.c.0.s8 %v5586
      %v5588 = vlaneseq
      %v5589 = vshrl.u32 %v5588, 7
      %v5590 = vsub.s32 %v5587, %v5589
      %v5591 = vrot.slane %v2356, %v5590
      %v5593 = vunpack.c.l.s4 1983009808
      %v5594 = vunpack.c.0.s8 %v5593
      %v5595 = vlaneseq
      %v5596 = vshrl.u32 %v5595, 7
      %v5597 = vsub.s32 %v5594, %v5596
      %v5598 = vrot.slane %v5584, %v5597
      %v5599 = vcombine.low %v5591, %v5591
      %v5600 = vcombine.low %v5598, %v5598
      %5601 = vrot.lane.b32.xlu0 %v5578, 16
      %v5602 = vpop.permute.xlu0 %5601
      %5603 = vrot.lane.b32.xlu0 %v2885, 16
      %v5604 = vpop.permute.xlu0 %5603
      %5605 = vrot.lane.b32.xlu0 %v5579, 16
      %v5606 = vpop.permute.xlu0 %5605
      %5607 = vrot.lane.b32.xlu0 %v2892, 16
      %v5608 = vpop.permute.xlu0 %5607
      %5609 = vrot.lane.b32.xlu0 %v5580, 16
      %v5610 = vpop.permute.xlu0 %5609
      %5611 = vrot.lane.b32.xlu0 %v2902, 16
      %v5612 = vpop.permute.xlu0 %5611
      %5613 = vrot.lane.b32.xlu0 %v5581, 16
      %v5614 = vpop.permute.xlu0 %5613
      %5615 = vrot.lane.b32.xlu0 %v2909, 16
      %v5616 = vpop.permute.xlu0 %5615
      %5617 = vrot.lane.b32.xlu0 %v5582, 16
      %v5618 = vpop.permute.xlu0 %5617
      %5619 = vrot.lane.b32.xlu0 %v2919, 16
      %v5620 = vpop.permute.xlu0 %5619
      %5621 = vrot.lane.b32.xlu0 %v5583, 16
      %v5622 = vpop.permute.xlu0 %5621
      %5623 = vrot.lane.b32.xlu0 %v2926, 16
      %v5624 = vpop.permute.xlu0 %5623
      %5625 = vrot.lane.b32.xlu0 %v5599, 16
      %v5626 = vpop.permute.xlu0 %5625
      %5627 = vrot.lane.b32.xlu0 %v5591, 16
      %v5628 = vpop.permute.xlu0 %5627
      %5629 = vrot.lane.b32.xlu0 %v5600, 16
      %v5630 = vpop.permute.xlu0 %5629
      %5631 = vrot.lane.b32.xlu0 %v5598, 16
      %v5632 = vpop.permute.xlu0 %5631
      %v5633 = vsel %vm1992, %v5602, %v5604
      %v5634 = vsel %vm1992, %v5604, %v5606
      %v5635 = vsel %vm1992, %v5606, %v5608
      %v5636 = vsel %vm1992, %v5608, %v5610
      %v5637 = vsel %vm1992, %v5610, %v5612
      %v5638 = vsel %vm1992, %v5612, %v5614
      %v5639 = vsel %vm1992, %v5614, %v5616
      %v5640 = vsel %vm1992, %v5616, %v5618
      %v5641 = vsel %vm1992, %v5618, %v5620
      %v5642 = vsel %vm1992, %v5620, %v5622
      %v5643 = vsel %vm1992, %v5622, %v5624
      %v5644 = vsel %vm1992, %v5624, %v5626
      %v5645 = vsel %vm1992, %v5626, %v5628
      %v5646 = vsel %vm1992, %v5628, %v5630
      %v5647 = vsel %vm1992, %v5630, %v5632
      %v5653 = vcombine.low %v2362, %v2362
      %v5655 = vunpack.c.l.s4 1983009808
      %v5656 = vunpack.c.0.s8 %v5655
      %v5657 = vlaneseq
      %v5658 = vshrl.u32 %v5657, 7
      %v5659 = vsub.s32 %v5656, %v5658
      %v5660 = vrot.slane %v5653, %v5659
      %v5662 = vunpack.c.l.s4 1983009808
      %v5663 = vunpack.c.0.s8 %v5662
      %v5664 = vlaneseq
      %v5665 = vshrl.u32 %v5664, 7
      %v5666 = vsub.s32 %v5663, %v5665
      %v5667 = vrot.slane %v2362, %v5666
      %v5668 = vcombine.low %v5660, %v5660
      %v5669 = vcombine.low %v5667, %v5667
      %v5670 = vcombine.low %v2363, %v2363
      %v5672 = vunpack.c.l.s4 1983009808
      %v5673 = vunpack.c.0.s8 %v5672
      %v5674 = vlaneseq
      %v5675 = vshrl.u32 %v5674, 7
      %v5676 = vsub.s32 %v5673, %v5675
      %v5677 = vrot.slane %v5670, %v5676
      %v5679 = vunpack.c.l.s4 1983009808
      %v5680 = vunpack.c.0.s8 %v5679
      %v5681 = vlaneseq
      %v5682 = vshrl.u32 %v5681, 7
      %v5683 = vsub.s32 %v5680, %v5682
      %v5684 = vrot.slane %v2363, %v5683
      %v5685 = vcombine.low %v5677, %v5677
      %v5686 = vcombine.low %v5684, %v5684
      %v5687 = vcombine.low %v2364, %v2364
      %v5689 = vunpack.c.l.s4 1983009808
      %v5690 = vunpack.c.0.s8 %v5689
      %v5691 = vlaneseq
      %v5692 = vshrl.u32 %v5691, 7
      %v5693 = vsub.s32 %v5690, %v5692
      %v5694 = vrot.slane %v5687, %v5693
      %v5696 = vunpack.c.l.s4 1983009808
      %v5697 = vunpack.c.0.s8 %v5696
      %v5698 = vlaneseq
      %v5699 = vshrl.u32 %v5698, 7
      %v5700 = vsub.s32 %v5697, %v5699
      %v5701 = vrot.slane %v2364, %v5700
      %v5702 = vcombine.low %v5694, %v5694
      %v5703 = vcombine.low %v5701, %v5701
      %v5704 = vcombine.low %v2365, %v2365
      %v5706 = vunpack.c.l.s4 1983009808
      %v5707 = vunpack.c.0.s8 %v5706
      %v5708 = vlaneseq
      %v5709 = vshrl.u32 %v5708, 7
      %v5710 = vsub.s32 %v5707, %v5709
      %v5711 = vrot.slane %v5704, %v5710
      %v5713 = vunpack.c.l.s4 1983009808
      %v5714 = vunpack.c.0.s8 %v5713
      %v5715 = vlaneseq
      %v5716 = vshrl.u32 %v5715, 7
      %v5717 = vsub.s32 %v5714, %v5716
      %v5718 = vrot.slane %v2365, %v5717
      %v5719 = vcombine.low %v5711, %v5711
      %v5720 = vcombine.low %v5718, %v5718
      %v5721 = vcombine.low %v2366, %v2366
      %v5723 = vunpack.c.l.s4 1983009808
      %v5724 = vunpack.c.0.s8 %v5723
      %v5725 = vlaneseq
      %v5726 = vshrl.u32 %v5725, 7
      %v5727 = vsub.s32 %v5724, %v5726
      %v5728 = vrot.slane %v5721, %v5727
      %v5729 = vcombine.low %v5728, %v5728
      %5730 = vrot.lane.b32.xlu0 %v5668, 15
      %v5731 = vpop.permute.xlu0 %5730
      %5732 = vrot.lane.b32.xlu0 %v5660, 15
      %v5733 = vpop.permute.xlu0 %5732
      %5734 = vrot.lane.b32.xlu0 %v5669, 15
      %v5735 = vpop.permute.xlu0 %5734
      %5736 = vrot.lane.b32.xlu0 %v5667, 15
      %v5737 = vpop.permute.xlu0 %5736
      %5738 = vrot.lane.b32.xlu0 %v5685, 15
      %v5739 = vpop.permute.xlu0 %5738
      %5740 = vrot.lane.b32.xlu0 %v5677, 15
      %v5741 = vpop.permute.xlu0 %5740
      %5742 = vrot.lane.b32.xlu0 %v5686, 15
      %v5743 = vpop.permute.xlu0 %5742
      %5744 = vrot.lane.b32.xlu0 %v5684, 15
      %v5745 = vpop.permute.xlu0 %5744
      %5746 = vrot.lane.b32.xlu0 %v5702, 15
      %v5747 = vpop.permute.xlu0 %5746
      %5748 = vrot.lane.b32.xlu0 %v5694, 15
      %v5749 = vpop.permute.xlu0 %5748
      %5750 = vrot.lane.b32.xlu0 %v5703, 15
      %v5751 = vpop.permute.xlu0 %5750
      %5752 = vrot.lane.b32.xlu0 %v5701, 15
      %v5753 = vpop.permute.xlu0 %5752
      %5754 = vrot.lane.b32.xlu0 %v5719, 15
      %v5755 = vpop.permute.xlu0 %5754
      %5756 = vrot.lane.b32.xlu0 %v5711, 15
      %v5757 = vpop.permute.xlu0 %5756
      %5758 = vrot.lane.b32.xlu0 %v5720, 15
      %v5759 = vpop.permute.xlu0 %5758
      %5760 = vrot.lane.b32.xlu0 %v5718, 15
      %v5761 = vpop.permute.xlu0 %5760
      %5762 = vrot.lane.b32.xlu0 %v5729, 15
      %v5763 = vpop.permute.xlu0 %5762
      %v5764 = vsel %vm1766, %v5731, %v5733
      %v5765 = vsel %vm1766, %v5733, %v5735
      %v5766 = vsel %vm1766, %v5735, %v5737
      %v5767 = vsel %vm1766, %v5737, %v5739
      %v5768 = vsel %vm1766, %v5739, %v5741
      %v5769 = vsel %vm1766, %v5741, %v5743
      %v5770 = vsel %vm1766, %v5743, %v5745
      %v5771 = vsel %vm1766, %v5745, %v5747
      %v5772 = vsel %vm1766, %v5747, %v5749
      %v5773 = vsel %vm1766, %v5749, %v5751
      %v5774 = vsel %vm1766, %v5751, %v5753
      %v5775 = vsel %vm1766, %v5753, %v5755
      %v5776 = vsel %vm1766, %v5755, %v5757
      %v5777 = vsel %vm1766, %v5757, %v5759
      %v5778 = vsel %vm1766, %v5759, %v5761
      %v5779 = vsel %vm1766, %v5761, %v5763
      %v5785 = vcombine.high %v2367, %v2367
      %v5787 = vunpack.c.l.s4 1983009808
      %v5788 = vunpack.c.0.s8 %v5787
      %v5789 = vlaneseq
      %v5790 = vshrl.u32 %v5789, 7
      %v5791 = vsub.s32 %v5788, %v5790
      %v5792 = vrot.slane %v2367, %v5791
      %v5794 = vunpack.c.l.s4 1983009808
      %v5795 = vunpack.c.0.s8 %v5794
      %v5796 = vlaneseq
      %v5797 = vshrl.u32 %v5796, 7
      %v5798 = vsub.s32 %v5795, %v5797
      %v5799 = vrot.slane %v5785, %v5798
      %v5800 = vcombine.high %v5792, %v5792
      %v5801 = vcombine.high %v5799, %v5799
      %v5802 = vcombine.high %v2368, %v2368
      %v5804 = vunpack.c.l.s4 1983009808
      %v5805 = vunpack.c.0.s8 %v5804
      %v5806 = vlaneseq
      %v5807 = vshrl.u32 %v5806, 7
      %v5808 = vsub.s32 %v5805, %v5807
      %v5809 = vrot.slane %v2368, %v5808
      %v5811 = vunpack.c.l.s4 1983009808
      %v5812 = vunpack.c.0.s8 %v5811
      %v5813 = vlaneseq
      %v5814 = vshrl.u32 %v5813, 7
      %v5815 = vsub.s32 %v5812, %v5814
      %v5816 = vrot.slane %v5802, %v5815
      %v5817 = vcombine.high %v5809, %v5809
      %v5818 = vcombine.high %v5816, %v5816
      %v5819 = vcombine.high %v2369, %v2369
      %v5821 = vunpack.c.l.s4 1983009808
      %v5822 = vunpack.c.0.s8 %v5821
      %v5823 = vlaneseq
      %v5824 = vshrl.u32 %v5823, 7
      %v5825 = vsub.s32 %v5822, %v5824
      %v5826 = vrot.slane %v2369, %v5825
      %v5828 = vunpack.c.l.s4 1983009808
      %v5829 = vunpack.c.0.s8 %v5828
      %v5830 = vlaneseq
      %v5831 = vshrl.u32 %v5830, 7
      %v5832 = vsub.s32 %v5829, %v5831
      %v5833 = vrot.slane %v5819, %v5832
      %v5834 = vcombine.high %v5826, %v5826
      %v5835 = vcombine.high %v5833, %v5833
      %v5836 = vcombine.high %v2370, %v2370
      %v5838 = vunpack.c.l.s4 1983009808
      %v5839 = vunpack.c.0.s8 %v5838
      %v5840 = vlaneseq
      %v5841 = vshrl.u32 %v5840, 7
      %v5842 = vsub.s32 %v5839, %v5841
      %v5843 = vrot.slane %v2370, %v5842
      %v5845 = vunpack.c.l.s4 1983009808
      %v5846 = vunpack.c.0.s8 %v5845
      %v5847 = vlaneseq
      %v5848 = vshrl.u32 %v5847, 7
      %v5849 = vsub.s32 %v5846, %v5848
      %v5850 = vrot.slane %v5836, %v5849
      %v5851 = vcombine.high %v5843, %v5843
      %v5852 = vcombine.high %v5850, %v5850
      %v5854 = vunpack.c.l.s4 1983009808
      %v5855 = vunpack.c.0.s8 %v5854
      %v5856 = vlaneseq
      %v5857 = vshrl.u32 %v5856, 7
      %v5858 = vsub.s32 %v5855, %v5857
      %v5859 = vrot.slane %v2371, %v5858
      %5860 = vrot.lane.b32.xlu0 %v5792, 1
      %v5861 = vpop.permute.xlu0 %5860
      %5862 = vrot.lane.b32.xlu0 %v5800, 1
      %v5863 = vpop.permute.xlu0 %5862
      %5864 = vrot.lane.b32.xlu0 %v5799, 1
      %v5865 = vpop.permute.xlu0 %5864
      %5866 = vrot.lane.b32.xlu0 %v5801, 1
      %v5867 = vpop.permute.xlu0 %5866
      %5868 = vrot.lane.b32.xlu0 %v5809, 1
      %v5869 = vpop.permute.xlu0 %5868
      %5870 = vrot.lane.b32.xlu0 %v5817, 1
      %v5871 = vpop.permute.xlu0 %5870
      %5872 = vrot.lane.b32.xlu0 %v5816, 1
      %v5873 = vpop.permute.xlu0 %5872
      %5874 = vrot.lane.b32.xlu0 %v5818, 1
      %v5875 = vpop.permute.xlu0 %5874
      %5876 = vrot.lane.b32.xlu0 %v5826, 1
      %v5877 = vpop.permute.xlu0 %5876
      %5878 = vrot.lane.b32.xlu0 %v5834, 1
      %v5879 = vpop.permute.xlu0 %5878
      %5880 = vrot.lane.b32.xlu0 %v5833, 1
      %v5881 = vpop.permute.xlu0 %5880
      %5882 = vrot.lane.b32.xlu0 %v5835, 1
      %v5883 = vpop.permute.xlu0 %5882
      %5884 = vrot.lane.b32.xlu0 %v5843, 1
      %v5885 = vpop.permute.xlu0 %5884
      %5886 = vrot.lane.b32.xlu0 %v5851, 1
      %v5887 = vpop.permute.xlu0 %5886
      %5888 = vrot.lane.b32.xlu0 %v5850, 1
      %v5889 = vpop.permute.xlu0 %5888
      %5890 = vrot.lane.b32.xlu0 %v5852, 1
      %v5891 = vpop.permute.xlu0 %5890
      %5892 = vrot.lane.b32.xlu0 %v5859, 1
      %v5893 = vpop.permute.xlu0 %5892
      %v5894 = vsel %vm1492, %v5861, %v5863
      %v5895 = vsel %vm1492, %v5863, %v5865
      %v5896 = vsel %vm1492, %v5865, %v5867
      %v5897 = vsel %vm1492, %v5867, %v5869
      %v5898 = vsel %vm1492, %v5869, %v5871
      %v5899 = vsel %vm1492, %v5871, %v5873
      %v5900 = vsel %vm1492, %v5873, %v5875
      %v5901 = vsel %vm1492, %v5875, %v5877
      %v5902 = vsel %vm1492, %v5877, %v5879
      %v5903 = vsel %vm1492, %v5879, %v5881
      %v5904 = vsel %vm1492, %v5881, %v5883
      %v5905 = vsel %vm1492, %v5883, %v5885
      %v5906 = vsel %vm1492, %v5885, %v5887
      %v5907 = vsel %vm1492, %v5887, %v5889
      %v5908 = vsel %vm1492, %v5889, %v5891
      %v5909 = vsel %vm1492, %v5891, %v5893
      %v5915 = vcombine.low %v2372, %v2372
      %v5917 = vunpack.c.l.s4 1983009808
      %v5918 = vunpack.c.0.s8 %v5917
      %v5919 = vlaneseq
      %v5920 = vshrl.u32 %v5919, 7
      %v5921 = vsub.s32 %v5918, %v5920
      %v5922 = vrot.slane %v5915, %v5921
      %v5924 = vunpack.c.l.s4 1983009808
      %v5925 = vunpack.c.0.s8 %v5924
      %v5926 = vlaneseq
      %v5927 = vshrl.u32 %v5926, 7
      %v5928 = vsub.s32 %v5925, %v5927
      %v5929 = vrot.slane %v2372, %v5928
      %v5930 = vcombine.high %v5922, %v5922
      %v5931 = vcombine.high %v5929, %v5929
      %v5932 = vcombine.low %v2373, %v2373
      %v5934 = vunpack.c.l.s4 1983009808
      %v5935 = vunpack.c.0.s8 %v5934
      %v5936 = vlaneseq
      %v5937 = vshrl.u32 %v5936, 7
      %v5938 = vsub.s32 %v5935, %v5937
      %v5939 = vrot.slane %v5932, %v5938
      %v5941 = vunpack.c.l.s4 1983009808
      %v5942 = vunpack.c.0.s8 %v5941
      %v5943 = vlaneseq
      %v5944 = vshrl.u32 %v5943, 7
      %v5945 = vsub.s32 %v5942, %v5944
      %v5946 = vrot.slane %v2373, %v5945
      %v5947 = vcombine.high %v5939, %v5939
      %v5948 = vcombine.high %v5946, %v5946
      %v5949 = vcombine.low %v2374, %v2374
      %v5951 = vunpack.c.l.s4 1983009808
      %v5952 = vunpack.c.0.s8 %v5951
      %v5953 = vlaneseq
      %v5954 = vshrl.u32 %v5953, 7
      %v5955 = vsub.s32 %v5952, %v5954
      %v5956 = vrot.slane %v5949, %v5955
      %v5958 = vunpack.c.l.s4 1983009808
      %v5959 = vunpack.c.0.s8 %v5958
      %v5960 = vlaneseq
      %v5961 = vshrl.u32 %v5960, 7
      %v5962 = vsub.s32 %v5959, %v5961
      %v5963 = vrot.slane %v2374, %v5962
      %v5964 = vcombine.high %v5956, %v5956
      %v5965 = vcombine.high %v5963, %v5963
      %v5966 = vcombine.low %v2375, %v2375
      %v5968 = vunpack.c.l.s4 1983009808
      %v5969 = vunpack.c.0.s8 %v5968
      %v5970 = vlaneseq
      %v5971 = vshrl.u32 %v5970, 7
      %v5972 = vsub.s32 %v5969, %v5971
      %v5973 = vrot.slane %v5966, %v5972
      %v5975 = vunpack.c.l.s4 1983009808
      %v5976 = vunpack.c.0.s8 %v5975
      %v5977 = vlaneseq
      %v5978 = vshrl.u32 %v5977, 7
      %v5979 = vsub.s32 %v5976, %v5978
      %v5980 = vrot.slane %v2375, %v5979
      %v5981 = vcombine.high %v5973, %v5973
      %v5982 = vcombine.high %v5980, %v5980
      %v5983 = vcombine.low %v2376, %v2376
      %v5985 = vunpack.c.l.s4 1983009808
      %v5986 = vunpack.c.0.s8 %v5985
      %v5987 = vlaneseq
      %v5988 = vshrl.u32 %v5987, 7
      %v5989 = vsub.s32 %v5986, %v5988
      %v5990 = vrot.slane %v5983, %v5989
      %v5996 = vcombine.high %v2377, %v2377
      %v5998 = vunpack.c.l.s4 1983009808
      %v5999 = vunpack.c.0.s8 %v5998
      %v6000 = vlaneseq
      %v6001 = vshrl.u32 %v6000, 7
      %v6002 = vsub.s32 %v5999, %v6001
      %v6003 = vrot.slane %v2377, %v6002
      %v6005 = vunpack.c.l.s4 1983009808
      %v6006 = vunpack.c.0.s8 %v6005
      %v6007 = vlaneseq
      %v6008 = vshrl.u32 %v6007, 7
      %v6009 = vsub.s32 %v6006, %v6008
      %v6010 = vrot.slane %v5996, %v6009
      %v6011 = vcombine.low %v6003, %v6003
      %v6012 = vcombine.low %v6010, %v6010
      %v6013 = vcombine.high %v2378, %v2378
      %v6015 = vunpack.c.l.s4 1983009808
      %v6016 = vunpack.c.0.s8 %v6015
      %v6017 = vlaneseq
      %v6018 = vshrl.u32 %v6017, 7
      %v6019 = vsub.s32 %v6016, %v6018
      %v6020 = vrot.slane %v2378, %v6019
      %v6022 = vunpack.c.l.s4 1983009808
      %v6023 = vunpack.c.0.s8 %v6022
      %v6024 = vlaneseq
      %v6025 = vshrl.u32 %v6024, 7
      %v6026 = vsub.s32 %v6023, %v6025
      %v6027 = vrot.slane %v6013, %v6026
      %v6028 = vcombine.low %v6020, %v6020
      %v6029 = vcombine.low %v6027, %v6027
      %v6030 = vcombine.high %v2379, %v2379
      %v6032 = vunpack.c.l.s4 1983009808
      %v6033 = vunpack.c.0.s8 %v6032
      %v6034 = vlaneseq
      %v6035 = vshrl.u32 %v6034, 7
      %v6036 = vsub.s32 %v6033, %v6035
      %v6037 = vrot.slane %v2379, %v6036
      %v6039 = vunpack.c.l.s4 1983009808
      %v6040 = vunpack.c.0.s8 %v6039
      %v6041 = vlaneseq
      %v6042 = vshrl.u32 %v6041, 7
      %v6043 = vsub.s32 %v6040, %v6042
      %v6044 = vrot.slane %v6030, %v6043
      %v6045 = vcombine.low %v6037, %v6037
      %v6046 = vcombine.low %v6044, %v6044
      %v6047 = vcombine.high %v2380, %v2380
      %v6049 = vunpack.c.l.s4 1983009808
      %v6050 = vunpack.c.0.s8 %v6049
      %v6051 = vlaneseq
      %v6052 = vshrl.u32 %v6051, 7
      %v6053 = vsub.s32 %v6050, %v6052
      %v6054 = vrot.slane %v2380, %v6053
      %v6056 = vunpack.c.l.s4 1983009808
      %v6057 = vunpack.c.0.s8 %v6056
      %v6058 = vlaneseq
      %v6059 = vshrl.u32 %v6058, 7
      %v6060 = vsub.s32 %v6057, %v6059
      %v6061 = vrot.slane %v6047, %v6060
      %v6062 = vcombine.low %v6054, %v6054
      %v6063 = vcombine.low %v6061, %v6061
      %v6065 = vunpack.c.l.s4 1983009808
      %v6066 = vunpack.c.0.s8 %v6065
      %v6067 = vlaneseq
      %v6068 = vshrl.u32 %v6067, 7
      %v6069 = vsub.s32 %v6066, %v6068
      %v6070 = vrot.slane %v2381, %v6069
      %v6071 = vcombine.low %v6070, %v6070
      %6072 = vrot.lane.b32.xlu0 %v6011, 127
      %v6073 = vpop.permute.xlu0 %6072
      %6074 = vrot.lane.b32.xlu0 %v6003, 127
      %v6075 = vpop.permute.xlu0 %6074
      %6076 = vrot.lane.b32.xlu0 %v6012, 127
      %v6077 = vpop.permute.xlu0 %6076
      %6078 = vrot.lane.b32.xlu0 %v6010, 127
      %v6079 = vpop.permute.xlu0 %6078
      %6080 = vrot.lane.b32.xlu0 %v6028, 127
      %v6081 = vpop.permute.xlu0 %6080
      %6082 = vrot.lane.b32.xlu0 %v6020, 127
      %v6083 = vpop.permute.xlu0 %6082
      %6084 = vrot.lane.b32.xlu0 %v6029, 127
      %v6085 = vpop.permute.xlu0 %6084
      %6086 = vrot.lane.b32.xlu0 %v6027, 127
      %v6087 = vpop.permute.xlu0 %6086
      %6088 = vrot.lane.b32.xlu0 %v6045, 127
      %v6089 = vpop.permute.xlu0 %6088
      %6090 = vrot.lane.b32.xlu0 %v6037, 127
      %v6091 = vpop.permute.xlu0 %6090
      %6092 = vrot.lane.b32.xlu0 %v6046, 127
      %v6093 = vpop.permute.xlu0 %6092
      %6094 = vrot.lane.b32.xlu0 %v6044, 127
      %v6095 = vpop.permute.xlu0 %6094
      %6096 = vrot.lane.b32.xlu0 %v6062, 127
      %v6097 = vpop.permute.xlu0 %6096
      %6098 = vrot.lane.b32.xlu0 %v6054, 127
      %v6099 = vpop.permute.xlu0 %6098
      %6100 = vrot.lane.b32.xlu0 %v6063, 127
      %v6101 = vpop.permute.xlu0 %6100
      %6102 = vrot.lane.b32.xlu0 %v6061, 127
      %v6103 = vpop.permute.xlu0 %6102
      %6104 = vrot.lane.b32.xlu0 %v6071, 127
      %v6105 = vpop.permute.xlu0 %6104
      %v6106 = vsel %vm1197, %v6073, %v6075
      %v6107 = vsel %vm1197, %v6075, %v6077
      %v6108 = vsel %vm1197, %v6077, %v6079
      %v6109 = vsel %vm1197, %v6079, %v6081
      %v6110 = vsel %vm1197, %v6081, %v6083
      %v6111 = vsel %vm1197, %v6083, %v6085
      %v6112 = vsel %vm1197, %v6085, %v6087
      %v6113 = vsel %vm1197, %v6087, %v6089
      %v6114 = vsel %vm1197, %v6089, %v6091
      %v6115 = vsel %vm1197, %v6091, %v6093
      %v6116 = vsel %vm1197, %v6093, %v6095
      %v6117 = vsel %vm1197, %v6095, %v6097
      %v6118 = vsel %vm1197, %v6097, %v6099
      %v6119 = vsel %vm1197, %v6099, %v6101
      %v6120 = vsel %vm1197, %v6101, %v6103
      %v6121 = vsel %vm1197, %v6103, %v6105
      %v6124 = vsel %vm4360, %v4851, %v5034
      %v6127 = vsel %vm4360, %v4859, %v5035
      %v6130 = vsel %vm4360, %v4858, %v5036
      %v6133 = vsel %vm4360, %v4860, %v5037
      %v6136 = vsel %vm4360, %v4868, %v5038
      %v6139 = vsel %vm4360, %v4876, %v5039
      %v6142 = vsel %vm4360, %v4875, %v5040
      %v6145 = vsel %vm4360, %v4877, %v5041
      %v6148 = vsel %vm4360, %v4885, %v5042
      %v6151 = vsel %vm4360, %v4893, %v5043
      %v6154 = vsel %vm4360, %v4892, %v5044
      %v6157 = vsel %vm4360, %v4894, %v5045
      %v6160 = vsel %vm4360, %v4902, %v5046
      %v6163 = vsel %vm4360, %v4910, %v5047
      %v6166 = vsel %vm4360, %v4909, %v5048
      %v6169 = vsel %vm4360, %v4911, %v5049
      %v6172 = vsel %vm4360, %v4918, %v5033
      %v6174 = vsel %vm4412, %v6124, %v5166
      %v6176 = vsel %vm4412, %v6127, %v5167
      %v6178 = vsel %vm4412, %v6130, %v5168
      %v6180 = vsel %vm4412, %v6133, %v5169
      %v6182 = vsel %vm4412, %v6136, %v5170
      %v6184 = vsel %vm4412, %v6139, %v5171
      %v6186 = vsel %vm4412, %v6142, %v5172
      %v6188 = vsel %vm4412, %v6145, %v5173
      %v6190 = vsel %vm4412, %v6148, %v5174
      %v6192 = vsel %vm4412, %v6151, %v5175
      %v6194 = vsel %vm4412, %v6154, %v5176
      %v6196 = vsel %vm4412, %v6157, %v5177
      %v6198 = vsel %vm4412, %v6160, %v5178
      %v6200 = vsel %vm4412, %v6163, %v5179
      %v6202 = vsel %vm4412, %v6166, %v5180
      %v6204 = vsel %vm4412, %v6169, %v5181
      %v6206 = vsel %vm4412, %v6172, %v5164
      %v6208 = vsel %vm4447, %v6174, %v5299
      %v6210 = vsel %vm4447, %v6176, %v5300
      %v6212 = vsel %vm4447, %v6178, %v5301
      %v6214 = vsel %vm4447, %v6180, %v5302
      %v6216 = vsel %vm4447, %v6182, %v5303
      %v6218 = vsel %vm4447, %v6184, %v5304
      %v6220 = vsel %vm4447, %v6186, %v5305
      %v6222 = vsel %vm4447, %v6188, %v5306
      %v6224 = vsel %vm4447, %v6190, %v5307
      %v6226 = vsel %vm4447, %v6192, %v5308
      %v6228 = vsel %vm4447, %v6194, %v5309
      %v6230 = vsel %vm4447, %v6196, %v5310
      %v6232 = vsel %vm4447, %v6198, %v5311
      %v6234 = vsel %vm4447, %v6200, %v5312
      %v6236 = vsel %vm4447, %v6202, %v5313
      %v6238 = vsel %vm4447, %v6204, %v5314
      %v6240 = vsel %vm4447, %v6206, %v5297
      %v6243 = vsel %vm4360, %v5430, %v5561
      %v6246 = vsel %vm4360, %v5431, %v5562
      %v6249 = vsel %vm4360, %v5432, %v5563
      %v6252 = vsel %vm4360, %v5433, %v5564
      %v6255 = vsel %vm4360, %v5434, %v5565
      %v6258 = vsel %vm4360, %v5435, %v5566
      %v6261 = vsel %vm4360, %v5436, %v5567
      %v6264 = vsel %vm4360, %v5437, %v5568
      %v6267 = vsel %vm4360, %v5438, %v5569
      %v6270 = vsel %vm4360, %v5439, %v5570
      %v6273 = vsel %vm4360, %v5440, %v5571
      %v6276 = vsel %vm4360, %v5441, %v5572
      %v6279 = vsel %vm4360, %v5442, %v5573
      %v6282 = vsel %vm4360, %v5443, %v5574
      %v6285 = vsel %vm4360, %v5444, %v5575
      %v6288 = vsel %vm4360, %v5445, %v5576
      %v6291 = vsel %vm4360, %v5428, %v5560
      %v6293 = vsel %vm4412, %v6243, %v5602
      %v6295 = vsel %vm4412, %v6246, %v5633
      %v6297 = vsel %vm4412, %v6249, %v5634
      %v6299 = vsel %vm4412, %v6252, %v5635
      %v6301 = vsel %vm4412, %v6255, %v5636
      %v6303 = vsel %vm4412, %v6258, %v5637
      %v6305 = vsel %vm4412, %v6261, %v5638
      %v6307 = vsel %vm4412, %v6264, %v5639
      %v6309 = vsel %vm4412, %v6267, %v5640
      %v6311 = vsel %vm4412, %v6270, %v5641
      %v6313 = vsel %vm4412, %v6273, %v5642
      %v6315 = vsel %vm4412, %v6276, %v5643
      %v6317 = vsel %vm4412, %v6279, %v5644
      %v6319 = vsel %vm4412, %v6282, %v5645
      %v6321 = vsel %vm4412, %v6285, %v5646
      %v6323 = vsel %vm4412, %v6288, %v5647
      %v6325 = vsel %vm4412, %v6291, %v5632
      %v6327 = vsel %vm4447, %v6293, %v5731
      %v6329 = vsel %vm4447, %v6295, %v5764
      %v6331 = vsel %vm4447, %v6297, %v5765
      %v6333 = vsel %vm4447, %v6299, %v5766
      %v6335 = vsel %vm4447, %v6301, %v5767
      %v6337 = vsel %vm4447, %v6303, %v5768
      %v6339 = vsel %vm4447, %v6305, %v5769
      %v6341 = vsel %vm4447, %v6307, %v5770
      %v6343 = vsel %vm4447, %v6309, %v5771
      %v6345 = vsel %vm4447, %v6311, %v5772
      %v6347 = vsel %vm4447, %v6313, %v5773
      %v6349 = vsel %vm4447, %v6315, %v5774
      %v6351 = vsel %vm4447, %v6317, %v5775
      %v6353 = vsel %vm4447, %v6319, %v5776
      %v6355 = vsel %vm4447, %v6321, %v5777
      %v6357 = vsel %vm4447, %v6323, %v5778
      %v6359 = vsel %vm4447, %v6325, %v5779
      %v6362 = vsel %vm4360, %v5861, %v5922
      %v6365 = vsel %vm4360, %v5894, %v5930
      %v6368 = vsel %vm4360, %v5895, %v5929
      %v6371 = vsel %vm4360, %v5896, %v5931
      %v6374 = vsel %vm4360, %v5897, %v5939
      %v6377 = vsel %vm4360, %v5898, %v5947
      %v6380 = vsel %vm4360, %v5899, %v5946
      %v6383 = vsel %vm4360, %v5900, %v5948
      %v6386 = vsel %vm4360, %v5901, %v5956
      %v6389 = vsel %vm4360, %v5902, %v5964
      %v6392 = vsel %vm4360, %v5903, %v5963
      %v6395 = vsel %vm4360, %v5904, %v5965
      %v6398 = vsel %vm4360, %v5905, %v5973
      %v6401 = vsel %vm4360, %v5906, %v5981
      %v6404 = vsel %vm4360, %v5907, %v5980
      %v6407 = vsel %vm4360, %v5908, %v5982
      %v6410 = vsel %vm4360, %v5909, %v5990
      %v6412 = vsel %vm4412, %v6362, %v6106
      %v6414 = vsel %vm4412, %v6365, %v6107
      %v6416 = vsel %vm4412, %v6368, %v6108
      %v6418 = vsel %vm4412, %v6371, %v6109
      %v6420 = vsel %vm4412, %v6374, %v6110
      %v6422 = vsel %vm4412, %v6377, %v6111
      %v6424 = vsel %vm4412, %v6380, %v6112
      %v6426 = vsel %vm4412, %v6383, %v6113
      %v6428 = vsel %vm4412, %v6386, %v6114
      %v6430 = vsel %vm4412, %v6389, %v6115
      %v6432 = vsel %vm4412, %v6392, %v6116
      %v6434 = vsel %vm4412, %v6395, %v6117
      %v6436 = vsel %vm4412, %v6398, %v6118
      %v6438 = vsel %vm4412, %v6401, %v6119
      %v6440 = vsel %vm4412, %v6404, %v6120
      %v6442 = vsel %vm4412, %v6407, %v6121
      %v6444 = vsel %vm4412, %v6410, %v6105
      %6496 = vrot.lane.b32.xlu0 %v6208, 95
      %v6497 = vpop.permute.xlu0 %6496
      %6498 = vrot.lane.b32.xlu0 %v6210, 95
      %v6499 = vpop.permute.xlu0 %6498
      %6500 = vrot.lane.b32.xlu0 %v6212, 95
      %v6501 = vpop.permute.xlu0 %6500
      %6502 = vrot.lane.b32.xlu0 %v6214, 95
      %v6503 = vpop.permute.xlu0 %6502
      %6504 = vrot.lane.b32.xlu0 %v6216, 95
      %v6505 = vpop.permute.xlu0 %6504
      %6506 = vrot.lane.b32.xlu0 %v6218, 95
      %v6507 = vpop.permute.xlu0 %6506
      %6508 = vrot.lane.b32.xlu0 %v6220, 95
      %v6509 = vpop.permute.xlu0 %6508
      %6510 = vrot.lane.b32.xlu0 %v6222, 95
      %v6511 = vpop.permute.xlu0 %6510
      %6512 = vrot.lane.b32.xlu0 %v6224, 95
      %v6513 = vpop.permute.xlu0 %6512
      %6514 = vrot.lane.b32.xlu0 %v6226, 95
      %v6515 = vpop.permute.xlu0 %6514
      %6516 = vrot.lane.b32.xlu0 %v6228, 95
      %v6517 = vpop.permute.xlu0 %6516
      %6518 = vrot.lane.b32.xlu0 %v6230, 95
      %v6519 = vpop.permute.xlu0 %6518
      %6520 = vrot.lane.b32.xlu0 %v6232, 95
      %v6521 = vpop.permute.xlu0 %6520
      %6522 = vrot.lane.b32.xlu0 %v6234, 95
      %v6523 = vpop.permute.xlu0 %6522
      %6524 = vrot.lane.b32.xlu0 %v6236, 95
      %v6525 = vpop.permute.xlu0 %6524
      %6526 = vrot.lane.b32.xlu0 %v6238, 95
      %v6527 = vpop.permute.xlu0 %6526
      %6528 = vrot.lane.b32.xlu0 %v6240, 95
      %v6529 = vpop.permute.xlu0 %6528
      %6530 = vrot.lane.b32.xlu0 %v6327, 95
      %v6531 = vpop.permute.xlu0 %6530
      %6532 = vrot.lane.b32.xlu0 %v6329, 95
      %v6533 = vpop.permute.xlu0 %6532
      %6534 = vrot.lane.b32.xlu0 %v6331, 95
      %v6535 = vpop.permute.xlu0 %6534
      %6536 = vrot.lane.b32.xlu0 %v6333, 95
      %v6537 = vpop.permute.xlu0 %6536
      %6538 = vrot.lane.b32.xlu0 %v6335, 95
      %v6539 = vpop.permute.xlu0 %6538
      %6540 = vrot.lane.b32.xlu0 %v6337, 95
      %v6541 = vpop.permute.xlu0 %6540
      %6542 = vrot.lane.b32.xlu0 %v6339, 95
      %v6543 = vpop.permute.xlu0 %6542
      %6544 = vrot.lane.b32.xlu0 %v6341, 95
      %v6545 = vpop.permute.xlu0 %6544
      %6546 = vrot.lane.b32.xlu0 %v6343, 95
      %v6547 = vpop.permute.xlu0 %6546
      %6548 = vrot.lane.b32.xlu0 %v6345, 95
      %v6549 = vpop.permute.xlu0 %6548
      %6550 = vrot.lane.b32.xlu0 %v6347, 95
      %v6551 = vpop.permute.xlu0 %6550
      %6552 = vrot.lane.b32.xlu0 %v6349, 95
      %v6553 = vpop.permute.xlu0 %6552
      %6554 = vrot.lane.b32.xlu0 %v6351, 95
      %v6555 = vpop.permute.xlu0 %6554
      %6556 = vrot.lane.b32.xlu0 %v6353, 95
      %v6557 = vpop.permute.xlu0 %6556
      %6558 = vrot.lane.b32.xlu0 %v6355, 95
      %v6559 = vpop.permute.xlu0 %6558
      %6560 = vrot.lane.b32.xlu0 %v6357, 95
      %v6561 = vpop.permute.xlu0 %6560
      %6562 = vrot.lane.b32.xlu0 %v6359, 95
      %v6563 = vpop.permute.xlu0 %6562
      %6564 = vrot.lane.b32.xlu0 %v6412, 95
      %v6565 = vpop.permute.xlu0 %6564
      %6566 = vrot.lane.b32.xlu0 %v6414, 95
      %v6567 = vpop.permute.xlu0 %6566
      %6568 = vrot.lane.b32.xlu0 %v6416, 95
      %v6569 = vpop.permute.xlu0 %6568
      %6570 = vrot.lane.b32.xlu0 %v6418, 95
      %v6571 = vpop.permute.xlu0 %6570
      %6572 = vrot.lane.b32.xlu0 %v6420, 95
      %v6573 = vpop.permute.xlu0 %6572
      %6574 = vrot.lane.b32.xlu0 %v6422, 95
      %v6575 = vpop.permute.xlu0 %6574
      %6576 = vrot.lane.b32.xlu0 %v6424, 95
      %v6577 = vpop.permute.xlu0 %6576
      %6578 = vrot.lane.b32.xlu0 %v6426, 95
      %v6579 = vpop.permute.xlu0 %6578
      %6580 = vrot.lane.b32.xlu0 %v6428, 95
      %v6581 = vpop.permute.xlu0 %6580
      %6582 = vrot.lane.b32.xlu0 %v6430, 95
      %v6583 = vpop.permute.xlu0 %6582
      %6584 = vrot.lane.b32.xlu0 %v6432, 95
      %v6585 = vpop.permute.xlu0 %6584
      %6586 = vrot.lane.b32.xlu0 %v6434, 95
      %v6587 = vpop.permute.xlu0 %6586
      %6588 = vrot.lane.b32.xlu0 %v6436, 95
      %v6589 = vpop.permute.xlu0 %6588
      %6590 = vrot.lane.b32.xlu0 %v6438, 95
      %v6591 = vpop.permute.xlu0 %6590
      %6592 = vrot.lane.b32.xlu0 %v6440, 95
      %v6593 = vpop.permute.xlu0 %6592
      %6594 = vrot.lane.b32.xlu0 %v6442, 95
      %v6595 = vpop.permute.xlu0 %6594
      %6596 = vrot.lane.b32.xlu0 %v6444, 95
      %v6597 = vpop.permute.xlu0 %6596
      %v6598 = vsel %vm3356, %v6497, %v6499
      %v6599 = vsel %vm3356, %v6499, %v6501
      %v6600 = vsel %vm3356, %v6501, %v6503
      %v6601 = vsel %vm3356, %v6503, %v6505
      %v6602 = vsel %vm3356, %v6505, %v6507
      %v6603 = vsel %vm3356, %v6507, %v6509
      %v6604 = vsel %vm3356, %v6509, %v6511
      %v6605 = vsel %vm3356, %v6511, %v6513
      %v6606 = vsel %vm3356, %v6513, %v6515
      %v6607 = vsel %vm3356, %v6515, %v6517
      %v6608 = vsel %vm3356, %v6517, %v6519
      %v6609 = vsel %vm3356, %v6519, %v6521
      %v6610 = vsel %vm3356, %v6521, %v6523
      %v6611 = vsel %vm3356, %v6523, %v6525
      %v6612 = vsel %vm3356, %v6525, %v6527
      %v6613 = vsel %vm3356, %v6527, %v6529
      %v6614 = vsel %vm3356, %v6531, %v6533
      %v6615 = vsel %vm3356, %v6533, %v6535
      %v6616 = vsel %vm3356, %v6535, %v6537
      %v6617 = vsel %vm3356, %v6537, %v6539
      %v6618 = vsel %vm3356, %v6539, %v6541
      %v6619 = vsel %vm3356, %v6541, %v6543
      %v6620 = vsel %vm3356, %v6543, %v6545
      %v6621 = vsel %vm3356, %v6545, %v6547
      %v6622 = vsel %vm3356, %v6547, %v6549
      %v6623 = vsel %vm3356, %v6549, %v6551
      %v6624 = vsel %vm3356, %v6551, %v6553
      %v6625 = vsel %vm3356, %v6553, %v6555
      %v6626 = vsel %vm3356, %v6555, %v6557
      %v6627 = vsel %vm3356, %v6557, %v6559
      %v6628 = vsel %vm3356, %v6559, %v6561
      %v6629 = vsel %vm3356, %v6561, %v6563
      %v6630 = vsel %vm3356, %v6565, %v6567
      %v6631 = vsel %vm3356, %v6567, %v6569
      %v6632 = vsel %vm3356, %v6569, %v6571
      %v6633 = vsel %vm3356, %v6571, %v6573
      %v6634 = vsel %vm3356, %v6573, %v6575
      %v6635 = vsel %vm3356, %v6575, %v6577
      %v6636 = vsel %vm3356, %v6577, %v6579
      %v6637 = vsel %vm3356, %v6579, %v6581
      %v6638 = vsel %vm3356, %v6581, %v6583
      %v6639 = vsel %vm3356, %v6583, %v6585
      %v6640 = vsel %vm3356, %v6585, %v6587
      %v6641 = vsel %vm3356, %v6587, %v6589
      %v6642 = vsel %vm3356, %v6589, %v6591
      %v6643 = vsel %vm3356, %v6591, %v6593
      %v6644 = vsel %vm3356, %v6593, %v6595
      %v6645 = vsel %vm3356, %v6595, %v6597
      %v6646 = vld [vmem:[%s1] sm:$0xf]
      %v6647 = vld [vmem:[%s3] sm:$0xff]
      %6649 = vset.pattern.permute.xlu0 0
      %6650 = vperm.xlu0 %6649, %v6647
      %v6651 = vpop.permute.xlu0 %6650
      %6721 = vrot.lane.b32.xlu0 %v4449, 17
      %v6722 = vpop.permute.xlu0 %6721
      %6723 = vrot.lane.b32.xlu0 %v4451, 17
      %v6724 = vpop.permute.xlu0 %6723
      %6725 = vrot.lane.b32.xlu0 %v4453, 17
      %v6726 = vpop.permute.xlu0 %6725
      %6727 = vrot.lane.b32.xlu0 %v4455, 17
      %v6728 = vpop.permute.xlu0 %6727
      %6729 = vrot.lane.b32.xlu0 %v4457, 17
      %v6730 = vpop.permute.xlu0 %6729
      %6731 = vrot.lane.b32.xlu0 %v4459, 17
      %v6732 = vpop.permute.xlu0 %6731
      %6733 = vrot.lane.b32.xlu0 %v4461, 17
      %v6734 = vpop.permute.xlu0 %6733
      %6735 = vrot.lane.b32.xlu0 %v4463, 17
      %v6736 = vpop.permute.xlu0 %6735
      %6737 = vrot.lane.b32.xlu0 %v4465, 17
      %v6738 = vpop.permute.xlu0 %6737
      %6739 = vrot.lane.b32.xlu0 %v4467, 17
      %v6740 = vpop.permute.xlu0 %6739
      %6741 = vrot.lane.b32.xlu0 %v4469, 17
      %v6742 = vpop.permute.xlu0 %6741
      %6743 = vrot.lane.b32.xlu0 %v4471, 17
      %v6744 = vpop.permute.xlu0 %6743
      %6745 = vrot.lane.b32.xlu0 %v4473, 17
      %v6746 = vpop.permute.xlu0 %6745
      %6747 = vrot.lane.b32.xlu0 %v4475, 17
      %v6748 = vpop.permute.xlu0 %6747
      %6749 = vrot.lane.b32.xlu0 %v4477, 17
      %v6750 = vpop.permute.xlu0 %6749
      %6751 = vrot.lane.b32.xlu0 %v4479, 17
      %v6752 = vpop.permute.xlu0 %6751
      %6753 = vrot.lane.b32.xlu0 %v4481, 17
      %v6754 = vpop.permute.xlu0 %6753
      %6755 = vrot.lane.b32.xlu0 %v4568, 17
      %v6756 = vpop.permute.xlu0 %6755
      %6757 = vrot.lane.b32.xlu0 %v4570, 17
      %v6758 = vpop.permute.xlu0 %6757
      %6759 = vrot.lane.b32.xlu0 %v4572, 17
      %v6760 = vpop.permute.xlu0 %6759
      %6761 = vrot.lane.b32.xlu0 %v4574, 17
      %v6762 = vpop.permute.xlu0 %6761
      %6763 = vrot.lane.b32.xlu0 %v4576, 17
      %v6764 = vpop.permute.xlu0 %6763
      %6765 = vrot.lane.b32.xlu0 %v4578, 17
      %v6766 = vpop.permute.xlu0 %6765
      %6767 = vrot.lane.b32.xlu0 %v4580, 17
      %v6768 = vpop.permute.xlu0 %6767
      %6769 = vrot.lane.b32.xlu0 %v4582, 17
      %v6770 = vpop.permute.xlu0 %6769
      %6771 = vrot.lane.b32.xlu0 %v4584, 17
      %v6772 = vpop.permute.xlu0 %6771
      %6773 = vrot.lane.b32.xlu0 %v4586, 17
      %v6774 = vpop.permute.xlu0 %6773
      %6775 = vrot.lane.b32.xlu0 %v4588, 17
      %v6776 = vpop.permute.xlu0 %6775
      %6777 = vrot.lane.b32.xlu0 %v4590, 17
      %v6778 = vpop.permute.xlu0 %6777
      %6779 = vrot.lane.b32.xlu0 %v4592, 17
      %v6780 = vpop.permute.xlu0 %6779
      %6781 = vrot.lane.b32.xlu0 %v4594, 17
      %v6782 = vpop.permute.xlu0 %6781
      %6783 = vrot.lane.b32.xlu0 %v4596, 17
      %v6784 = vpop.permute.xlu0 %6783
      %6785 = vrot.lane.b32.xlu0 %v4598, 17
      %v6786 = vpop.permute.xlu0 %6785
      %6787 = vrot.lane.b32.xlu0 %v4600, 17
      %v6788 = vpop.permute.xlu0 %6787
      %6789 = vrot.lane.b32.xlu0 %v4687, 17
      %v6790 = vpop.permute.xlu0 %6789
      %6791 = vrot.lane.b32.xlu0 %v4689, 17
      %v6792 = vpop.permute.xlu0 %6791
      %6793 = vrot.lane.b32.xlu0 %v4691, 17
      %v6794 = vpop.permute.xlu0 %6793
      %6795 = vrot.lane.b32.xlu0 %v4693, 17
      %v6796 = vpop.permute.xlu0 %6795
      %6797 = vrot.lane.b32.xlu0 %v4695, 17
      %v6798 = vpop.permute.xlu0 %6797
      %6799 = vrot.lane.b32.xlu0 %v4697, 17
      %v6800 = vpop.permute.xlu0 %6799
      %6801 = vrot.lane.b32.xlu0 %v4699, 17
      %v6802 = vpop.permute.xlu0 %6801
      %6803 = vrot.lane.b32.xlu0 %v4701, 17
      %v6804 = vpop.permute.xlu0 %6803
      %6805 = vrot.lane.b32.xlu0 %v4703, 17
      %v6806 = vpop.permute.xlu0 %6805
      %6807 = vrot.lane.b32.xlu0 %v4705, 17
      %v6808 = vpop.permute.xlu0 %6807
      %6809 = vrot.lane.b32.xlu0 %v4707, 17
      %v6810 = vpop.permute.xlu0 %6809
      %6811 = vrot.lane.b32.xlu0 %v4709, 17
      %v6812 = vpop.permute.xlu0 %6811
      %6813 = vrot.lane.b32.xlu0 %v4711, 17
      %v6814 = vpop.permute.xlu0 %6813
      %6815 = vrot.lane.b32.xlu0 %v4713, 17
      %v6816 = vpop.permute.xlu0 %6815
      %6817 = vrot.lane.b32.xlu0 %v4715, 17
      %v6818 = vpop.permute.xlu0 %6817
      %6819 = vrot.lane.b32.xlu0 %v4717, 17
      %v6820 = vpop.permute.xlu0 %6819
      %6821 = vrot.lane.b32.xlu0 %v4719, 17
      %v6822 = vpop.permute.xlu0 %6821
      %6823 = vrot.lane.b32.xlu0 %v4806, 17
      %v6824 = vpop.permute.xlu0 %6823
      %6825 = vrot.lane.b32.xlu0 %v4808, 17
      %v6826 = vpop.permute.xlu0 %6825
      %6827 = vrot.lane.b32.xlu0 %v4810, 17
      %v6828 = vpop.permute.xlu0 %6827
      %6829 = vrot.lane.b32.xlu0 %v4812, 17
      %v6830 = vpop.permute.xlu0 %6829
      %6831 = vrot.lane.b32.xlu0 %v4814, 17
      %v6832 = vpop.permute.xlu0 %6831
      %6833 = vrot.lane.b32.xlu0 %v4816, 17
      %v6834 = vpop.permute.xlu0 %6833
      %6835 = vrot.lane.b32.xlu0 %v4818, 17
      %v6836 = vpop.permute.xlu0 %6835
      %6837 = vrot.lane.b32.xlu0 %v4820, 17
      %v6838 = vpop.permute.xlu0 %6837
      %6839 = vrot.lane.b32.xlu0 %v4822, 17
      %v6840 = vpop.permute.xlu0 %6839
      %6841 = vrot.lane.b32.xlu0 %v4824, 17
      %v6842 = vpop.permute.xlu0 %6841
      %6843 = vrot.lane.b32.xlu0 %v4826, 17
      %v6844 = vpop.permute.xlu0 %6843
      %6845 = vrot.lane.b32.xlu0 %v4828, 17
      %v6846 = vpop.permute.xlu0 %6845
      %6847 = vrot.lane.b32.xlu0 %v4830, 17
      %v6848 = vpop.permute.xlu0 %6847
      %6849 = vrot.lane.b32.xlu0 %v4832, 17
      %v6850 = vpop.permute.xlu0 %6849
      %6851 = vrot.lane.b32.xlu0 %v4834, 17
      %v6852 = vpop.permute.xlu0 %6851
      %6853 = vrot.lane.b32.xlu0 %v4836, 17
      %v6854 = vpop.permute.xlu0 %6853
      %6855 = vrot.lane.b32.xlu0 %v4838, 17
      %v6856 = vpop.permute.xlu0 %6855
      %6857 = vrot.lane.b32.xlu0 %v6497, 17
      %v6858 = vpop.permute.xlu0 %6857
      %6859 = vrot.lane.b32.xlu0 %v6598, 17
      %v6860 = vpop.permute.xlu0 %6859
      %6861 = vrot.lane.b32.xlu0 %v6599, 17
      %v6862 = vpop.permute.xlu0 %6861
      %6863 = vrot.lane.b32.xlu0 %v6600, 17
      %v6864 = vpop.permute.xlu0 %6863
      %6865 = vrot.lane.b32.xlu0 %v6601, 17
      %v6866 = vpop.permute.xlu0 %6865
      %6867 = vrot.lane.b32.xlu0 %v6602, 17
      %v6868 = vpop.permute.xlu0 %6867
      %6869 = vrot.lane.b32.xlu0 %v6603, 17
      %v6870 = vpop.permute.xlu0 %6869
      %6871 = vrot.lane.b32.xlu0 %v6604, 17
      %v6872 = vpop.permute.xlu0 %6871
      %6873 = vrot.lane.b32.xlu0 %v6605, 17
      %v6874 = vpop.permute.xlu0 %6873
      %6875 = vrot.lane.b32.xlu0 %v6606, 17
      %v6876 = vpop.permute.xlu0 %6875
      %6877 = vrot.lane.b32.xlu0 %v6607, 17
      %v6878 = vpop.permute.xlu0 %6877
      %6879 = vrot.lane.b32.xlu0 %v6608, 17
      %v6880 = vpop.permute.xlu0 %6879
      %6881 = vrot.lane.b32.xlu0 %v6609, 17
      %v6882 = vpop.permute.xlu0 %6881
      %6883 = vrot.lane.b32.xlu0 %v6610, 17
      %v6884 = vpop.permute.xlu0 %6883
      %6885 = vrot.lane.b32.xlu0 %v6611, 17
      %v6886 = vpop.permute.xlu0 %6885
      %6887 = vrot.lane.b32.xlu0 %v6612, 17
      %v6888 = vpop.permute.xlu0 %6887
      %6889 = vrot.lane.b32.xlu0 %v6613, 17
      %v6890 = vpop.permute.xlu0 %6889
      %6891 = vrot.lane.b32.xlu0 %v6531, 17
      %v6892 = vpop.permute.xlu0 %6891
      %6893 = vrot.lane.b32.xlu0 %v6614, 17
      %v6894 = vpop.permute.xlu0 %6893
      %6895 = vrot.lane.b32.xlu0 %v6615, 17
      %v6896 = vpop.permute.xlu0 %6895
      %6897 = vrot.lane.b32.xlu0 %v6616, 17
      %v6898 = vpop.permute.xlu0 %6897
      %6899 = vrot.lane.b32.xlu0 %v6617, 17
      %v6900 = vpop.permute.xlu0 %6899
      %6901 = vrot.lane.b32.xlu0 %v6618, 17
      %v6902 = vpop.permute.xlu0 %6901
      %6903 = vrot.lane.b32.xlu0 %v6619, 17
      %v6904 = vpop.permute.xlu0 %6903
      %6905 = vrot.lane.b32.xlu0 %v6620, 17
      %v6906 = vpop.permute.xlu0 %6905
      %6907 = vrot.lane.b32.xlu0 %v6621, 17
      %v6908 = vpop.permute.xlu0 %6907
      %6909 = vrot.lane.b32.xlu0 %v6622, 17
      %v6910 = vpop.permute.xlu0 %6909
      %6911 = vrot.lane.b32.xlu0 %v6623, 17
      %v6912 = vpop.permute.xlu0 %6911
      %6913 = vrot.lane.b32.xlu0 %v6624, 17
      %v6914 = vpop.permute.xlu0 %6913
      %6915 = vrot.lane.b32.xlu0 %v6625, 17
      %v6916 = vpop.permute.xlu0 %6915
      %6917 = vrot.lane.b32.xlu0 %v6626, 17
      %v6918 = vpop.permute.xlu0 %6917
      %6919 = vrot.lane.b32.xlu0 %v6627, 17
      %v6920 = vpop.permute.xlu0 %6919
      %6921 = vrot.lane.b32.xlu0 %v6628, 17
      %v6922 = vpop.permute.xlu0 %6921
      %6923 = vrot.lane.b32.xlu0 %v6629, 17
      %v6924 = vpop.permute.xlu0 %6923
      %6925 = vrot.lane.b32.xlu0 %v6565, 17
      %v6926 = vpop.permute.xlu0 %6925
      %6927 = vrot.lane.b32.xlu0 %v6630, 17
      %v6928 = vpop.permute.xlu0 %6927
      %6929 = vrot.lane.b32.xlu0 %v6631, 17
      %v6930 = vpop.permute.xlu0 %6929
      %6931 = vrot.lane.b32.xlu0 %v6632, 17
      %v6932 = vpop.permute.xlu0 %6931
      %6933 = vrot.lane.b32.xlu0 %v6633, 17
      %v6934 = vpop.permute.xlu0 %6933
      %6935 = vrot.lane.b32.xlu0 %v6634, 17
      %v6936 = vpop.permute.xlu0 %6935
      %6937 = vrot.lane.b32.xlu0 %v6635, 17
      %v6938 = vpop.permute.xlu0 %6937
      %6939 = vrot.lane.b32.xlu0 %v6636, 17
      %v6940 = vpop.permute.xlu0 %6939
      %6941 = vrot.lane.b32.xlu0 %v6637, 17
      %v6942 = vpop.permute.xlu0 %6941
      %6943 = vrot.lane.b32.xlu0 %v6638, 17
      %v6944 = vpop.permute.xlu0 %6943
      %6945 = vrot.lane.b32.xlu0 %v6639, 17
      %v6946 = vpop.permute.xlu0 %6945
      %6947 = vrot.lane.b32.xlu0 %v6640, 17
      %v6948 = vpop.permute.xlu0 %6947
      %6949 = vrot.lane.b32.xlu0 %v6641, 17
      %v6950 = vpop.permute.xlu0 %6949
      %6951 = vrot.lane.b32.xlu0 %v6642, 17
      %v6952 = vpop.permute.xlu0 %6951
      %6953 = vrot.lane.b32.xlu0 %v6643, 17
      %v6954 = vpop.permute.xlu0 %6953
      %6955 = vrot.lane.b32.xlu0 %v6644, 17
      %v6956 = vpop.permute.xlu0 %6955
      %6957 = vrot.lane.b32.xlu0 %v6645, 17
      %v6958 = vpop.permute.xlu0 %6957
      %v6959 = vsel %vm2266, %v6722, %v6724
      %v6960 = vsel %vm2266, %v6724, %v6726
      %v6961 = vsel %vm2266, %v6726, %v6728
      %v6962 = vsel %vm2266, %v6728, %v6730
      %v6963 = vsel %vm2266, %v6730, %v6732
      %v6964 = vsel %vm2266, %v6732, %v6734
      %v6965 = vsel %vm2266, %v6734, %v6736
      %v6966 = vsel %vm2266, %v6736, %v6738
      %v6967 = vsel %vm2266, %v6738, %v6740
      %v6968 = vsel %vm2266, %v6740, %v6742
      %v6969 = vsel %vm2266, %v6742, %v6744
      %v6970 = vsel %vm2266, %v6744, %v6746
      %v6971 = vsel %vm2266, %v6746, %v6748
      %v6972 = vsel %vm2266, %v6748, %v6750
      %v6973 = vsel %vm2266, %v6750, %v6752
      %v6974 = vsel %vm2266, %v6752, %v6754
      %v6975 = vsel %vm2266, %v6756, %v6758
      %v6976 = vsel %vm2266, %v6758, %v6760
      %v6977 = vsel %vm2266, %v6760, %v6762
      %v6978 = vsel %vm2266, %v6762, %v6764
      %v6979 = vsel %vm2266, %v6764, %v6766
      %v6980 = vsel %vm2266, %v6766, %v6768
      %v6981 = vsel %vm2266, %v6768, %v6770
      %v6982 = vsel %vm2266, %v6770, %v6772
      %v6983 = vsel %vm2266, %v6772, %v6774
      %v6984 = vsel %vm2266, %v6774, %v6776
      %v6985 = vsel %vm2266, %v6776, %v6778
      %v6986 = vsel %vm2266, %v6778, %v6780
      %v6987 = vsel %vm2266, %v6780, %v6782
      %v6988 = vsel %vm2266, %v6782, %v6784
      %v6989 = vsel %vm2266, %v6784, %v6786
      %v6990 = vsel %vm2266, %v6786, %v6788
      %v6991 = vsel %vm2266, %v6790, %v6792
      %v6992 = vsel %vm2266, %v6792, %v6794
      %v6993 = vsel %vm2266, %v6794, %v6796
      %v6994 = vsel %vm2266, %v6796, %v6798
      %v6995 = vsel %vm2266, %v6798, %v6800
      %v6996 = vsel %vm2266, %v6800, %v6802
      %v6997 = vsel %vm2266, %v6802, %v6804
      %v6998 = vsel %vm2266, %v6804, %v6806
      %v6999 = vsel %vm2266, %v6806, %v6808
      %v7000 = vsel %vm2266, %v6808, %v6810
      %v7001 = vsel %vm2266, %v6810, %v6812
      %v7002 = vsel %vm2266, %v6812, %v6814
      %v7003 = vsel %vm2266, %v6814, %v6816
      %v7004 = vsel %vm2266, %v6816, %v6818
      %v7005 = vsel %vm2266, %v6818, %v6820
      %v7006 = vsel %vm2266, %v6820, %v6822
      %v7007 = vsel %vm2266, %v6824, %v6826
      %v7008 = vsel %vm2266, %v6826, %v6828
      %v7009 = vsel %vm2266, %v6828, %v6830
      %v7010 = vsel %vm2266, %v6830, %v6832
      %v7011 = vsel %vm2266, %v6832, %v6834
      %v7012 = vsel %vm2266, %v6834, %v6836
      %v7013 = vsel %vm2266, %v6836, %v6838
      %v7014 = vsel %vm2266, %v6838, %v6840
      %v7015 = vsel %vm2266, %v6840, %v6842
      %v7016 = vsel %vm2266, %v6842, %v6844
      %v7017 = vsel %vm2266, %v6844, %v6846
      %v7018 = vsel %vm2266, %v6846, %v6848
      %v7019 = vsel %vm2266, %v6848, %v6850
      %v7020 = vsel %vm2266, %v6850, %v6852
      %v7021 = vsel %vm2266, %v6852, %v6854
      %v7022 = vsel %vm2266, %v6854, %v6856
      %v7023 = vsel %vm2266, %v6858, %v6860
      %v7024 = vsel %vm2266, %v6860, %v6862
      %v7025 = vsel %vm2266, %v6862, %v6864
      %v7026 = vsel %vm2266, %v6864, %v6866
      %v7027 = vsel %vm2266, %v6866, %v6868
      %v7028 = vsel %vm2266, %v6868, %v6870
      %v7029 = vsel %vm2266, %v6870, %v6872
      %v7030 = vsel %vm2266, %v6872, %v6874
      %v7031 = vsel %vm2266, %v6874, %v6876
      %v7032 = vsel %vm2266, %v6876, %v6878
      %v7033 = vsel %vm2266, %v6878, %v6880
      %v7034 = vsel %vm2266, %v6880, %v6882
      %v7035 = vsel %vm2266, %v6882, %v6884
      %v7036 = vsel %vm2266, %v6884, %v6886
      %v7037 = vsel %vm2266, %v6886, %v6888
      %v7038 = vsel %vm2266, %v6888, %v6890
      %v7039 = vsel %vm2266, %v6892, %v6894
      %v7040 = vsel %vm2266, %v6894, %v6896
      %v7041 = vsel %vm2266, %v6896, %v6898
      %v7042 = vsel %vm2266, %v6898, %v6900
      %v7043 = vsel %vm2266, %v6900, %v6902
      %v7044 = vsel %vm2266, %v6902, %v6904
      %v7045 = vsel %vm2266, %v6904, %v6906
      %v7046 = vsel %vm2266, %v6906, %v6908
      %v7047 = vsel %vm2266, %v6908, %v6910
      %v7048 = vsel %vm2266, %v6910, %v6912
      %v7049 = vsel %vm2266, %v6912, %v6914
      %v7050 = vsel %vm2266, %v6914, %v6916
      %v7051 = vsel %vm2266, %v6916, %v6918
      %v7052 = vsel %vm2266, %v6918, %v6920
      %v7053 = vsel %vm2266, %v6920, %v6922
      %v7054 = vsel %vm2266, %v6922, %v6924
      %v7055 = vsel %vm2266, %v6926, %v6928
      %v7056 = vsel %vm2266, %v6928, %v6930
      %v7057 = vsel %vm2266, %v6930, %v6932
      %v7058 = vsel %vm2266, %v6932, %v6934
      %v7059 = vsel %vm2266, %v6934, %v6936
      %v7060 = vsel %vm2266, %v6936, %v6938
      %v7061 = vsel %vm2266, %v6938, %v6940
      %v7062 = vsel %vm2266, %v6940, %v6942
      %v7063 = vsel %vm2266, %v6942, %v6944
      %v7064 = vsel %vm2266, %v6944, %v6946
      %v7065 = vsel %vm2266, %v6946, %v6948
      %v7066 = vsel %vm2266, %v6948, %v6950
      %v7067 = vsel %vm2266, %v6950, %v6952
      %v7068 = vsel %vm2266, %v6952, %v6954
      %v7069 = vsel %vm2266, %v6954, %v6956
      %v7070 = vsel %vm2266, %v6956, %v6958
      %vm7167 = vcmask 883712
      %v7169 = vsel %vm7167, %v6646, 0
      %v7172 = vsel %vm4447, %v7055, 0
      %v7175 = vsel %vm4447, %v7056, 0
      %v7178 = vsel %vm4447, %v7057, 0
      %v7181 = vsel %vm4447, %v7058, 0
      %v7184 = vsel %vm4447, %v7059, 0
      %v7187 = vsel %vm4447, %v7060, 0
      %v7190 = vsel %vm4447, %v7061, 0
      %v7193 = vsel %vm4447, %v7062, 0
      %v7196 = vsel %vm4447, %v7063, 0
      %v7199 = vsel %vm4447, %v7064, 0
      %v7202 = vsel %vm4447, %v7065, 0
      %v7205 = vsel %vm4447, %v7066, 0
      %v7208 = vsel %vm4447, %v7067, 0
      %v7211 = vsel %vm4447, %v7068, 0
      %v7214 = vsel %vm4447, %v7069, 0
      %v7217 = vsel %vm4447, %v7070, 0
      %7219 = vmatprep.subr.bf16.mxu0 0
      %7220 = vmatpush1.bf16.msra.mxu0 0
      %7221 = vmatprep.subr.bf16.mxu0 %v7175
      %7222 = vmatpush1.bf16.msra.mxu0 %v7172
      %7223 = vmatprep.subr.bf16.mxu0 %v7040
      %7224 = vmatpush1.bf16.msra.mxu0 %v7039
      %7225 = vmatprep.subr.bf16.mxu0 %v7024
      %7226 = vmatpush1.bf16.msra.mxu0 %v7023
      %7227 = vmatprep.subr.bf16.mxu0 %v7008
      %7228 = vmatpush1.bf16.msra.mxu0 %v7007
      %7229 = vmatprep.subr.bf16.mxu0 %v6992
      %7230 = vmatpush1.bf16.msra.mxu0 %v6991
      %7231 = vmatprep.subr.bf16.mxu0 %v6976
      %7232 = vmatpush1.bf16.msra.mxu0 %v6975
      %7233 = vmatprep.subr.bf16.mxu0 %v6960
      %7234 = vmatpush1.bf16.msra.mxu0 %v6959
      %7235 = vmatprep.subr.bf16.mxu0 0
      %7236 = vmatpush2.bf16.msra.mxu0 0
      %7237 = vmatprep.subr.bf16.mxu0 0
      %7238 = vmatpush2.bf16.msra.mxu0 0
      %7239 = vmatprep.subr.bf16.mxu0 0
      %7240 = vmatpush2.bf16.msra.mxu0 0
      %7241 = vmatprep.subr.bf16.mxu0 0
      %7242 = vmatpush2.bf16.msra.mxu0 0
      %7243 = vmatprep.subr.bf16.mxu0 0
      %7244 = vmatpush2.bf16.msra.mxu0 0
      %7245 = vmatprep.subr.bf16.mxu0 0
      %7246 = vmatpush2.bf16.msra.mxu0 0
      %7247 = vmatprep.subr.bf16.mxu0 0
      %7248 = vmatpush2.bf16.msra.mxu0 0
      %7249 = vmatprep.subr.bf16.mxu0 0
      %7250 = vmatpush2.bf16.msra.mxu0 0
      %7251 = vmatprep.mubr.bf16.mxu0 0
      %7252 = vmatmul.mubr.bf16.gmra.mxu0 %v7169
      %v7253 = vpop.f32.mrf.mxu0
      %v7254 = vadd.f32 %v6651, %v7253
      %v7255 = vpop.f32.mrf.mxu0
      %v7256 = vadd.f32 %v6651, %v7255
      %v7257 = vpop.f32.mrf.mxu0
      %v7258 = vpop.f32.mrf.mxu0
      %7259 = vdwg.mxu0
      %7260 = vmatprep.subr.bf16.mxu0 0
      %7261 = vmatpush1.bf16.msra.mxu0 0
      %7262 = vmatprep.subr.bf16.mxu0 %v7181
      %7263 = vmatpush1.bf16.msra.mxu0 %v7178
      %7264 = vmatprep.subr.bf16.mxu0 %v7042
      %7265 = vmatpush1.bf16.msra.mxu0 %v7041
      %7266 = vmatprep.subr.bf16.mxu0 %v7026
      %7267 = vmatpush1.bf16.msra.mxu0 %v7025
      %7268 = vmatprep.subr.bf16.mxu0 %v7010
      %7269 = vmatpush1.bf16.msra.mxu0 %v7009
      %7270 = vmatprep.subr.bf16.mxu0 %v6994
      %7271 = vmatpush1.bf16.msra.mxu0 %v6993
      %7272 = vmatprep.subr.bf16.mxu0 %v6978
      %7273 = vmatpush1.bf16.msra.mxu0 %v6977
      %7274 = vmatprep.subr.bf16.mxu0 %v6962
      %7275 = vmatpush1.bf16.msra.mxu0 %v6961
      %7276 = vmatprep.subr.bf16.mxu0 0
      %7277 = vmatpush2.bf16.msra.mxu0 0
      %7278 = vmatprep.subr.bf16.mxu0 0
      %7279 = vmatpush2.bf16.msra.mxu0 0
      %7280 = vmatprep.subr.bf16.mxu0 0
      %7281 = vmatpush2.bf16.msra.mxu0 0
      %7282 = vmatprep.subr.bf16.mxu0 0
      %7283 = vmatpush2.bf16.msra.mxu0 0
      %7284 = vmatprep.subr.bf16.mxu0 0
      %7285 = vmatpush2.bf16.msra.mxu0 0
      %7286 = vmatprep.subr.bf16.mxu0 0
      %7287 = vmatpush2.bf16.msra.mxu0 0
      %7288 = vmatprep.subr.bf16.mxu0 0
      %7289 = vmatpush2.bf16.msra.mxu0 0
      %7290 = vmatprep.subr.bf16.mxu0 0
      %7291 = vmatpush2.bf16.msra.mxu0 0
      %7292 = vmatprep.mubr.bf16.mxu0 0
      %7293 = vmatmul.mubr.bf16.gmra.mxu0 %v7169
      %v7294 = vpop.f32.mrf.mxu0
      %v7295 = vadd.f32 %v6651, %v7294
      %v7296 = vpop.f32.mrf.mxu0
      %v7297 = vadd.f32 %v6651, %v7296
      %v7298 = vpop.f32.mrf.mxu0
      %v7299 = vpop.f32.mrf.mxu0
      %7300 = vdwg.mxu0
      %7301 = vmatprep.subr.bf16.mxu0 0
      %7302 = vmatpush1.bf16.msra.mxu0 0
      %7303 = vmatprep.subr.bf16.mxu0 %v7187
      %7304 = vmatpush1.bf16.msra.mxu0 %v7184
      %7305 = vmatprep.subr.bf16.mxu0 %v7044
      %7306 = vmatpush1.bf16.msra.mxu0 %v7043
      %7307 = vmatprep.subr.bf16.mxu0 %v7028
      %7308 = vmatpush1.bf16.msra.mxu0 %v7027
      %7309 = vmatprep.subr.bf16.mxu0 %v7012
      %7310 = vmatpush1.bf16.msra.mxu0 %v7011
      %7311 = vmatprep.subr.bf16.mxu0 %v6996
      %7312 = vmatpush1.bf16.msra.mxu0 %v6995
      %7313 = vmatprep.subr.bf16.mxu0 %v6980
      %7314 = vmatpush1.bf16.msra.mxu0 %v6979
      %7315 = vmatprep.subr.bf16.mxu0 %v6964
      %7316 = vmatpush1.bf16.msra.mxu0 %v6963
      %7317 = vmatprep.subr.bf16.mxu0 0
      %7318 = vmatpush2.bf16.msra.mxu0 0
      %7319 = vmatprep.subr.bf16.mxu0 0
      %7320 = vmatpush2.bf16.msra.mxu0 0
      %7321 = vmatprep.subr.bf16.mxu0 0
      %7322 = vmatpush2.bf16.msra.mxu0 0
      %7323 = vmatprep.subr.bf16.mxu0 0
      %7324 = vmatpush2.bf16.msra.mxu0 0
      %7325 = vmatprep.subr.bf16.mxu0 0
      %7326 = vmatpush2.bf16.msra.mxu0 0
      %7327 = vmatprep.subr.bf16.mxu0 0
      %7328 = vmatpush2.bf16.msra.mxu0 0
      %7329 = vmatprep.subr.bf16.mxu0 0
      %7330 = vmatpush2.bf16.msra.mxu0 0
      %7331 = vmatprep.subr.bf16.mxu0 0
      %7332 = vmatpush2.bf16.msra.mxu0 0
      %7333 = vmatprep.mubr.bf16.mxu0 0
      %7334 = vmatmul.mubr.bf16.gmra.mxu0 %v7169
      %v7335 = vpop.f32.mrf.mxu0
      %v7336 = vadd.f32 %v6651, %v7335
      %v7337 = vpop.f32.mrf.mxu0
      %v7338 = vadd.f32 %v6651, %v7337
      %v7339 = vpop.f32.mrf.mxu0
      %v7340 = vpop.f32.mrf.mxu0
      %7341 = vdwg.mxu0
      %7342 = vmatprep.subr.bf16.mxu0 0
      %7343 = vmatpush1.bf16.msra.mxu0 0
      %7344 = vmatprep.subr.bf16.mxu0 %v7193
      %7345 = vmatpush1.bf16.msra.mxu0 %v7190
      %7346 = vmatprep.subr.bf16.mxu0 %v7046
      %7347 = vmatpush1.bf16.msra.mxu0 %v7045
      %7348 = vmatprep.subr.bf16.mxu0 %v7030
      %7349 = vmatpush1.bf16.msra.mxu0 %v7029
      %7350 = vmatprep.subr.bf16.mxu0 %v7014
      %7351 = vmatpush1.bf16.msra.mxu0 %v7013
      %7352 = vmatprep.subr.bf16.mxu0 %v6998
      %7353 = vmatpush1.bf16.msra.mxu0 %v6997
      %7354 = vmatprep.subr.bf16.mxu0 %v6982
      %7355 = vmatpush1.bf16.msra.mxu0 %v6981
      %7356 = vmatprep.subr.bf16.mxu0 %v6966
      %7357 = vmatpush1.bf16.msra.mxu0 %v6965
      %7358 = vmatprep.subr.bf16.mxu0 0
      %7359 = vmatpush2.bf16.msra.mxu0 0
      %7360 = vmatprep.subr.bf16.mxu0 0
      %7361 = vmatpush2.bf16.msra.mxu0 0
      %7362 = vmatprep.subr.bf16.mxu0 0
      %7363 = vmatpush2.bf16.msra.mxu0 0
      %7364 = vmatprep.subr.bf16.mxu0 0
      %7365 = vmatpush2.bf16.msra.mxu0 0
      %7366 = vmatprep.subr.bf16.mxu0 0
      %7367 = vmatpush2.bf16.msra.mxu0 0
      %7368 = vmatprep.subr.bf16.mxu0 0
      %7369 = vmatpush2.bf16.msra.mxu0 0
      %7370 = vmatprep.subr.bf16.mxu0 0
      %7371 = vmatpush2.bf16.msra.mxu0 0
      %7372 = vmatprep.subr.bf16.mxu0 0
      %7373 = vmatpush2.bf16.msra.mxu0 0
      %7374 = vmatprep.mubr.bf16.mxu0 0
      %7375 = vmatmul.mubr.bf16.gmra.mxu0 %v7169
      %v7376 = vpop.f32.mrf.mxu0
      %v7377 = vadd.f32 %v6651, %v7376
      %v7378 = vpop.f32.mrf.mxu0
      %v7379 = vadd.f32 %v6651, %v7378
      %v7380 = vpop.f32.mrf.mxu0
      %v7381 = vpop.f32.mrf.mxu0
      %7382 = vdwg.mxu0
      %7383 = vmatprep.subr.bf16.mxu0 0
      %7384 = vmatpush1.bf16.msra.mxu0 0
      %7385 = vmatprep.subr.bf16.mxu0 %v7199
      %7386 = vmatpush1.bf16.msra.mxu0 %v7196
      %7387 = vmatprep.subr.bf16.mxu0 %v7048
      %7388 = vmatpush1.bf16.msra.mxu0 %v7047
      %7389 = vmatprep.subr.bf16.mxu0 %v7032
      %7390 = vmatpush1.bf16.msra.mxu0 %v7031
      %7391 = vmatprep.subr.bf16.mxu0 %v7016
      %7392 = vmatpush1.bf16.msra.mxu0 %v7015
      %7393 = vmatprep.subr.bf16.mxu0 %v7000
      %7394 = vmatpush1.bf16.msra.mxu0 %v6999
      %7395 = vmatprep.subr.bf16.mxu0 %v6984
      %7396 = vmatpush1.bf16.msra.mxu0 %v6983
      %7397 = vmatprep.subr.bf16.mxu0 %v6968
      %7398 = vmatpush1.bf16.msra.mxu0 %v6967
      %7399 = vmatprep.subr.bf16.mxu0 0
      %7400 = vmatpush2.bf16.msra.mxu0 0
      %7401 = vmatprep.subr.bf16.mxu0 0
      %7402 = vmatpush2.bf16.msra.mxu0 0
      %7403 = vmatprep.subr.bf16.mxu0 0
      %7404 = vmatpush2.bf16.msra.mxu0 0
      %7405 = vmatprep.subr.bf16.mxu0 0
      %7406 = vmatpush2.bf16.msra.mxu0 0
      %7407 = vmatprep.subr.bf16.mxu0 0
      %7408 = vmatpush2.bf16.msra.mxu0 0
      %7409 = vmatprep.subr.bf16.mxu0 0
      %7410 = vmatpush2.bf16.msra.mxu0 0
      %7411 = vmatprep.subr.bf16.mxu0 0
      %7412 = vmatpush2.bf16.msra.mxu0 0
      %7413 = vmatprep.subr.bf16.mxu0 0
      %7414 = vmatpush2.bf16.msra.mxu0 0
      %7415 = vmatprep.mubr.bf16.mxu0 0
      %7416 = vmatmul.mubr.bf16.gmra.mxu0 %v7169
      %v7417 = vpop.f32.mrf.mxu0
      %v7418 = vadd.f32 %v6651, %v7417
      %v7419 = vpop.f32.mrf.mxu0
      %v7420 = vadd.f32 %v6651, %v7419
      %v7421 = vpop.f32.mrf.mxu0
      %v7422 = vpop.f32.mrf.mxu0
      %7423 = vdwg.mxu0
      %7424 = vmatprep.subr.bf16.mxu0 0
      %7425 = vmatpush1.bf16.msra.mxu0 0
      %7426 = vmatprep.subr.bf16.mxu0 %v7205
      %7427 = vmatpush1.bf16.msra.mxu0 %v7202
      %7428 = vmatprep.subr.bf16.mxu0 %v7050
      %7429 = vmatpush1.bf16.msra.mxu0 %v7049
      %7430 = vmatprep.subr.bf16.mxu0 %v7034
      %7431 = vmatpush1.bf16.msra.mxu0 %v7033
      %7432 = vmatprep.subr.bf16.mxu0 %v7018
      %7433 = vmatpush1.bf16.msra.mxu0 %v7017
      %7434 = vmatprep.subr.bf16.mxu0 %v7002
      %7435 = vmatpush1.bf16.msra.mxu0 %v7001
      %7436 = vmatprep.subr.bf16.mxu0 %v6986
      %7437 = vmatpush1.bf16.msra.mxu0 %v6985
      %7438 = vmatprep.subr.bf16.mxu0 %v6970
      %7439 = vmatpush1.bf16.msra.mxu0 %v6969
      %7440 = vmatprep.subr.bf16.mxu0 0
      %7441 = vmatpush2.bf16.msra.mxu0 0
      %7442 = vmatprep.subr.bf16.mxu0 0
      %7443 = vmatpush2.bf16.msra.mxu0 0
      %7444 = vmatprep.subr.bf16.mxu0 0
      %7445 = vmatpush2.bf16.msra.mxu0 0
      %7446 = vmatprep.subr.bf16.mxu0 0
      %7447 = vmatpush2.bf16.msra.mxu0 0
      %7448 = vmatprep.subr.bf16.mxu0 0
      %7449 = vmatpush2.bf16.msra.mxu0 0
      %7450 = vmatprep.subr.bf16.mxu0 0
      %7451 = vmatpush2.bf16.msra.mxu0 0
      %7452 = vmatprep.subr.bf16.mxu0 0
      %7453 = vmatpush2.bf16.msra.mxu0 0
      %7454 = vmatprep.subr.bf16.mxu0 0
      %7455 = vmatpush2.bf16.msra.mxu0 0
      %7456 = vmatprep.mubr.bf16.mxu0 0
      %7457 = vmatmul.mubr.bf16.gmra.mxu0 %v7169
      %v7458 = vpop.f32.mrf.mxu0
      %v7459 = vadd.f32 %v6651, %v7458
      %v7460 = vpop.f32.mrf.mxu0
      %v7461 = vadd.f32 %v6651, %v7460
      %v7462 = vpop.f32.mrf.mxu0
      %v7463 = vpop.f32.mrf.mxu0
      %7464 = vdwg.mxu0
      %7465 = vmatprep.subr.bf16.mxu0 0
      %7466 = vmatpush1.bf16.msra.mxu0 0
      %7467 = vmatprep.subr.bf16.mxu0 %v7211
      %7468 = vmatpush1.bf16.msra.mxu0 %v7208
      %7469 = vmatprep.subr.bf16.mxu0 %v7052
      %7470 = vmatpush1.bf16.msra.mxu0 %v7051
      %7471 = vmatprep.subr.bf16.mxu0 %v7036
      %7472 = vmatpush1.bf16.msra.mxu0 %v7035
      %7473 = vmatprep.subr.bf16.mxu0 %v7020
      %7474 = vmatpush1.bf16.msra.mxu0 %v7019
      %7475 = vmatprep.subr.bf16.mxu0 %v7004
      %7476 = vmatpush1.bf16.msra.mxu0 %v7003
      %7477 = vmatprep.subr.bf16.mxu0 %v6988
      %7478 = vmatpush1.bf16.msra.mxu0 %v6987
      %7479 = vmatprep.subr.bf16.mxu0 %v6972
      %7480 = vmatpush1.bf16.msra.mxu0 %v6971
      %7481 = vmatprep.subr.bf16.mxu0 0
      %7482 = vmatpush2.bf16.msra.mxu0 0
      %7483 = vmatprep.subr.bf16.mxu0 0
      %7484 = vmatpush2.bf16.msra.mxu0 0
      %7485 = vmatprep.subr.bf16.mxu0 0
      %7486 = vmatpush2.bf16.msra.mxu0 0
      %7487 = vmatprep.subr.bf16.mxu0 0
      %7488 = vmatpush2.bf16.msra.mxu0 0
      %7489 = vmatprep.subr.bf16.mxu0 0
      %7490 = vmatpush2.bf16.msra.mxu0 0
      %7491 = vmatprep.subr.bf16.mxu0 0
      %7492 = vmatpush2.bf16.msra.mxu0 0
      %7493 = vmatprep.subr.bf16.mxu0 0
      %7494 = vmatpush2.bf16.msra.mxu0 0
      %7495 = vmatprep.subr.bf16.mxu0 0
      %7496 = vmatpush2.bf16.msra.mxu0 0
      %7497 = vmatprep.mubr.bf16.mxu0 0
      %7498 = vmatmul.mubr.bf16.gmra.mxu0 %v7169
      %v7499 = vpop.f32.mrf.mxu0
      %v7500 = vadd.f32 %v6651, %v7499
      %v7501 = vpop.f32.mrf.mxu0
      %v7502 = vadd.f32 %v6651, %v7501
      %v7503 = vpop.f32.mrf.mxu0
      %v7504 = vpop.f32.mrf.mxu0
      %7505 = vdwg.mxu0
      %7506 = vmatprep.subr.bf16.mxu0 0
      %7507 = vmatpush1.bf16.msra.mxu0 0
      %7508 = vmatprep.subr.bf16.mxu0 %v7217
      %7509 = vmatpush1.bf16.msra.mxu0 %v7214
      %7510 = vmatprep.subr.bf16.mxu0 %v7054
      %7511 = vmatpush1.bf16.msra.mxu0 %v7053
      %7512 = vmatprep.subr.bf16.mxu0 %v7038
      %7513 = vmatpush1.bf16.msra.mxu0 %v7037
      %7514 = vmatprep.subr.bf16.mxu0 %v7022
      %7515 = vmatpush1.bf16.msra.mxu0 %v7021
      %7516 = vmatprep.subr.bf16.mxu0 %v7006
      %7517 = vmatpush1.bf16.msra.mxu0 %v7005
      %7518 = vmatprep.subr.bf16.mxu0 %v6990
      %7519 = vmatpush1.bf16.msra.mxu0 %v6989
      %7520 = vmatprep.subr.bf16.mxu0 %v6974
      %7521 = vmatpush1.bf16.msra.mxu0 %v6973
      %7522 = vmatprep.subr.bf16.mxu0 0
      %7523 = vmatpush2.bf16.msra.mxu0 0
      %7524 = vmatprep.subr.bf16.mxu0 0
      %7525 = vmatpush2.bf16.msra.mxu0 0
      %7526 = vmatprep.subr.bf16.mxu0 0
      %7527 = vmatpush2.bf16.msra.mxu0 0
      %7528 = vmatprep.subr.bf16.mxu0 0
      %7529 = vmatpush2.bf16.msra.mxu0 0
      %7530 = vmatprep.subr.bf16.mxu0 0
      %7531 = vmatpush2.bf16.msra.mxu0 0
      %7532 = vmatprep.subr.bf16.mxu0 0
      %7533 = vmatpush2.bf16.msra.mxu0 0
      %7534 = vmatprep.subr.bf16.mxu0 0
      %7535 = vmatpush2.bf16.msra.mxu0 0
      %7536 = vmatprep.subr.bf16.mxu0 0
      %7537 = vmatpush2.bf16.msra.mxu0 0
      %7538 = vmatprep.mubr.bf16.mxu0 0
      %7539 = vmatmul.mubr.bf16.gmra.mxu0 %v7169
      %v7540 = vpop.f32.mrf.mxu0
      %v7541 = vadd.f32 %v6651, %v7540
      %v7542 = vpop.f32.mrf.mxu0
      %v7543 = vadd.f32 %v6651, %v7542
      %v7544 = vpop.f32.mrf.mxu0
      %v7545 = vpop.f32.mrf.mxu0
      %7546 = vdwg.mxu0
      %v7547 = vmax.f32 %v7254, 0.0
      %v7548 = vmax.f32 %v7256, 0.0
      %v7549 = vmax.f32 %v7295, 0.0
      %v7550 = vmax.f32 %v7297, 0.0
      %v7551 = vmax.f32 %v7336, 0.0
      %v7552 = vmax.f32 %v7338, 0.0
      %v7553 = vmax.f32 %v7377, 0.0
      %v7554 = vmax.f32 %v7379, 0.0
      %v7555 = vmax.f32 %v7418, 0.0
      %v7556 = vmax.f32 %v7420, 0.0
      %v7557 = vmax.f32 %v7459, 0.0
      %v7558 = vmax.f32 %v7461, 0.0
      %v7559 = vmax.f32 %v7500, 0.0
      %v7560 = vmax.f32 %v7502, 0.0
      %v7561 = vmax.f32 %v7541, 0.0
      %v7562 = vmax.f32 %v7543, 0.0
      %7563 = vst [vmem:[%s197] sm:$0xff] %v7547
      %7564 = vst [vmem:[%s197 + $0x8] sm:$0xff] %v7548
      %7565 = vst [vmem:[%s197 + $0x10] sm:$0xff] %v7549
      %7566 = vst [vmem:[%s197 + $0x18] sm:$0xff] %v7550
      %7567 = vst [vmem:[%s197 + $0x20] sm:$0xff] %v7551
      %7568 = vst [vmem:[%s197 + $0x28] sm:$0xff] %v7552
      %7569 = vst [vmem:[%s197 + $0x30] sm:$0xff] %v7553
      %7570 = vst [vmem:[%s197 + $0x38] sm:$0xff] %v7554
      %7571 = vst [vmem:[%s197 + $0x40] sm:$0xff] %v7555
      %7572 = vst [vmem:[%s197 + $0x48] sm:$0xff] %v7556
      %7573 = vst [vmem:[%s197 + $0x50] sm:$0xff] %v7557
      %7574 = vst [vmem:[%s197 + $0x58] sm:$0xff] %v7558
      %7575 = vst [vmem:[%s197 + $0x60] sm:$0xff] %v7559
      %7576 = vst [vmem:[%s197 + $0x68] sm:$0xff] %v7560
      %7577 = vst [vmem:[%s197 + $0x70] sm:$0xff] %v7561
      %7578 = vst [vmem:[%s197 + $0x78] sm:$0xff] %v7562
      %p7579 = scmp.lt.s32.totalorder %s15, 1
      %s7580 = scalar_select %p7579, %s15, 1
      %s7581 = smul.addr %s7580, 16
      %s7582 = smul.addr %s7581, 8
      %s7583 = scalar_lea.vmem %s4, %s7582
      // Predicated region
      $region37: #{basic_conv3d.1} parent=35 // pred_check
        %p7584 = pneg %p122
      $region38: #{basic_conv3d.1} parent=35 // pred_check_branch
        %7586 = sbr.rel (%p7584) target = $region40
      $region39: #{basic_conv3d.1} parent=35 // pred_region
        _
      $region40: #{basic_conv3d.1} parent=35 // pred_fallthru
        _
    $region36: #{basic_conv3d.1} parent=5 // pred_fallthru
      _
    %p7587 = scmp.le.s32.totalorder 2, %s10
    // Predicated region
    $region41: #{basic_conv3d.1} parent=5 // pred_check
      %p7588 = pneg %p7587
    $region42: #{basic_conv3d.1} parent=5 // pred_check_branch
      %7590 = sbr.rel (%p7588) target = $region44
    $region43: #{basic_conv3d.1} parent=5 // pred_region
      %s7591 = ssub.s32 %s10, 2
      // Predicated region
      $region45: #{basic_conv3d.1} parent=43 // pred_check
        %p7592 = pneg %p128
      $region46: #{basic_conv3d.1} parent=43 // pred_check_branch
        %7594 = sbr.rel (%p7592) target = $region48
      $region47: #{basic_conv3d.1} parent=43 // pred_region
        %p7595 = scmp.lt.s32.totalorder %s16, 1
        %s7596 = scalar_select %p7595, %s16, 1
        %s7597 = smul.addr %s7596, 16
        %s7598 = smul.addr %s7597, 8
        %s7599 = scalar_lea.vmem %s4, %s7598
      $region48: #{basic_conv3d.1} parent=43 // pred_fallthru
        _
    $region44: #{basic_conv3d.1} parent=5 // pred_fallthru
      _
  $region6: #{basic_conv3d.1} parent=0 // loop_footer
    %s14 = sadd.s32 1, %s10
  $region7: #{basic_conv3d.1} parent=0 // loop_footer_branch
    %9 = sbr.rel target = $region3
  $region8: #{basic_conv3d.1} parent=0 // loop_exit
    _

</llo_original>
